<compile_context>
chip_gen: v6e
topology: v6e:2x2x1
jax: 0.10.0
libtpu: 0.0.40
codegen_flags: <defaults>
</compile_context>

<pallas_src>
import jax
import jax.numpy as jnp
from jax import lax
from jax.experimental import pallas as pl
from jax.experimental.pallas import tpu as pltpu

# ---------------- synthetic Granite config (tp_size == 1, pp_size == 1) ----------------
VOCAB = 256
HIDDEN = 128
NUM_HEADS = 4
NUM_KV_HEADS = 2
HEAD_DIM = HIDDEN // NUM_HEADS          # 32
GROUP = NUM_HEADS // NUM_KV_HEADS       # 2
Q_SIZE = NUM_HEADS * HEAD_DIM           # 128
KV_SIZE = NUM_KV_HEADS * HEAD_DIM       # 64
QKV_DIM = Q_SIZE + 2 * KV_SIZE          # 256
INTERMEDIATE = 256
NUM_LAYERS = 2
SEQ = 64
ROPE_THETA = 10000.0
RMS_EPS = 1e-6
ATTENTION_MULTIPLIER = 0.0625           # config.attention_multiplier
RESIDUAL_MULTIPLIER = 0.22              # config.residual_multiplier
EMBEDDING_MULTIPLIER = 12.0             # config.embedding_multiplier
NEG_INF = -1e30                         # finite causal-mask value (no inf-inf NaN)


def _rmsnorm(x, w):
    var = jnp.mean(x * x, axis=-1, keepdims=True)
    return x * lax.rsqrt(var + RMS_EPS) * w


def _bf16(x):
    return x.astype(jnp.bfloat16)


# ---------------- fused whole-model kernel (grid over layers) ----------------
def _granite_fused_kernel(x_ref, cos_q_ref, sin_q_ref, cos_kv_ref, sin_kv_ref,
                          rot_q_ref, rot_kv_ref, bias_ref,
                          ln1_ref, wqkv_ref, wo_ref, ln2_ref, wgu_ref, wdown_ref,
                          fln_ref, out_ref, h_ref):
    layer = pl.program_id(0)
    last = pl.num_programs(0) - 1

    # Load the (scaled) embeddings into the VMEM-resident hidden-state carry.
    @pl.when(layer == 0)
    def _():
        h_ref[...] = x_ref[...]

    h0 = h_ref[...]                                         # [T, HIDDEN] f32
    T = h0.shape[0]

    # ---- input RMSNorm + fused QKV projection (bf16 MXU, f32 accumulation) ----
    xn = _rmsnorm(h0, ln1_ref[...])
    qkv = jnp.dot(_bf16(xn), wqkv_ref[...], preferred_element_type=jnp.float32)
    q = qkv[:, :Q_SIZE]
    k = qkv[:, Q_SIZE:Q_SIZE + KV_SIZE]
    v = qkv[:, Q_SIZE + KV_SIZE:]

    # ---- neox RoPE on the flat [T, heads*head_dim] layout via block-diag rotate-half ----
    q_rot = jnp.dot(_bf16(q), rot_q_ref[...], preferred_element_type=jnp.float32)
    k_rot = jnp.dot(_bf16(k), rot_kv_ref[...], preferred_element_type=jnp.float32)
    q = q * cos_q_ref[...] + q_rot * sin_q_ref[...]
    k = k * cos_kv_ref[...] + k_rot * sin_kv_ref[...]

    bias = bias_ref[...]                                    # [T, T] additive causal mask
    wo = wo_ref[...]                                        # [Q_SIZE, HIDDEN] bf16

    # ---- causal GQA attention, per q head; o_proj folded in as per-head matmul sum ----
    attn_out = jnp.zeros((T, HIDDEN), jnp.float32)
    for hh in range(NUM_HEADS):
        g = hh // GROUP
        q_h = _bf16(q[:, hh * HEAD_DIM:(hh + 1) * HEAD_DIM])        # [T, D]
        k_g = _bf16(k[:, g * HEAD_DIM:(g + 1) * HEAD_DIM])          # [T, D]
        v_g = _bf16(v[:, g * HEAD_DIM:(g + 1) * HEAD_DIM])          # [T, D]
        s = lax.dot_general(q_h, k_g, (((1,), (1,)), ((), ())),
                            preferred_element_type=jnp.float32)     # [T, T]
        s = s * ATTENTION_MULTIPLIER + bias
        m = jnp.max(s, axis=-1, keepdims=True)
        p = jnp.exp(s - m)
        l = jnp.sum(p, axis=-1, keepdims=True)
        o_h = jnp.dot(_bf16(p), v_g, preferred_element_type=jnp.float32)
        o_h = o_h * pl.reciprocal(l, approx=True)                    # EUP slot
        attn_out = attn_out + jnp.dot(
            _bf16(o_h), wo[hh * HEAD_DIM:(hh + 1) * HEAD_DIM, :],
            preferred_element_type=jnp.float32)

    h1 = h0 + attn_out * RESIDUAL_MULTIPLIER

    # ---- post-attention RMSNorm + SwiGLU MLP + scaled residual ----
    x2 = _rmsnorm(h1, ln2_ref[...])
    gu = jnp.dot(_bf16(x2), wgu_ref[...], preferred_element_type=jnp.float32)
    gate = gu[:, :INTERMEDIATE]
    up = gu[:, INTERMEDIATE:]
    act = gate * (1.0 / (1.0 + jnp.exp(-gate))) * up                 # SiluAndMul
    mlp_out = jnp.dot(_bf16(act), wdown_ref[...], preferred_element_type=jnp.float32)
    h2 = h1 + mlp_out * RESIDUAL_MULTIPLIER
    h_ref[...] = h2

    # Final model-level RMSNorm fused into the last layer step.
    @pl.when(layer == last)
    def _():
        out_ref[...] = _rmsnorm(h2, fln_ref[...]).astype(out_ref.dtype)


def granite_fused_forward(h, cos_q, sin_q, cos_kv, sin_kv, rot_q, rot_kv, bias, params):
    T = h.shape[0]

    def const2(shape):
        return pl.BlockSpec(shape, lambda l: (0, 0))

    def per_layer(shape):
        return pl.BlockSpec((None,) + shape, lambda l: (l, 0, 0))

    grid_spec = pltpu.PrefetchScalarGridSpec(
        num_scalar_prefetch=0,
        grid=(NUM_LAYERS,),
        in_specs=[
            const2((T, HIDDEN)),                      # embeddings (read at layer 0)
            const2((T, Q_SIZE)),                      # cos (q layout)
            const2((T, Q_SIZE)),                      # sin (q layout)
            const2((T, KV_SIZE)),                     # cos (kv layout)
            const2((T, KV_SIZE)),                     # sin (kv layout)
            const2((Q_SIZE, Q_SIZE)),                 # rotate-half matrix (q)
            const2((KV_SIZE, KV_SIZE)),               # rotate-half matrix (kv)
            const2((T, T)),                           # additive causal mask
            per_layer((1, HIDDEN)),                   # ln1
            per_layer((HIDDEN, QKV_DIM)),             # w_qkv (bf16)
            per_layer((Q_SIZE, HIDDEN)),              # w_o   (bf16)
            per_layer((1, HIDDEN)),                   # ln2
            per_layer((HIDDEN, 2 * INTERMEDIATE)),    # w_gu  (bf16)
            per_layer((INTERMEDIATE, HIDDEN)),        # w_down(bf16)
            const2((1, HIDDEN)),                      # final norm weight
        ],
        out_specs=pl.BlockSpec((T, HIDDEN), lambda l: (0, 0)),
        scratch_shapes=[pltpu.VMEM((T, HIDDEN), jnp.float32)],   # hidden-state carry
    )
    return pl.pallas_call(
        _granite_fused_kernel,
        out_shape=jax.ShapeDtypeStruct((T, HIDDEN), jnp.float32),
        grid_spec=grid_spec,
        compiler_params=pltpu.CompilerParams(
            dimension_semantics=("arbitrary",),       # layer axis is a sequential carry
            vmem_limit_bytes=32 * 1024 * 1024,
        ),
    )(h, cos_q, sin_q, cos_kv, sin_kv, rot_q, rot_kv, bias,
      params["ln1"], params["w_qkv"], params["w_o"], params["ln2"],
      params["w_gu"], params["w_down"], params["final_norm"])


# ---------------- host-side RoPE / mask tables (tiny, computed once per call) ----------------
def rope_tables(positions):
    half = HEAD_DIM // 2
    inv_freq = 1.0 / (ROPE_THETA ** (jnp.arange(0, half, dtype=jnp.float32) * 2.0 / HEAD_DIM))
    freqs = positions.astype(jnp.float32)[:, None] * inv_freq[None, :]      # [T, half]
    cos = jnp.cos(freqs)
    sin = jnp.sin(freqs)
    cos_head = jnp.concatenate([cos, cos], axis=-1)                          # [T, D]
    sin_head = jnp.concatenate([sin, sin], axis=-1)
    cos_q = jnp.tile(cos_head, (1, NUM_HEADS))                               # [T, Q_SIZE]
    sin_q = jnp.tile(sin_head, (1, NUM_HEADS))
    cos_kv = jnp.tile(cos_head, (1, NUM_KV_HEADS))                           # [T, KV_SIZE]
    sin_kv = jnp.tile(sin_head, (1, NUM_KV_HEADS))
    eye = jnp.eye(half, dtype=jnp.float32)
    zeros = jnp.zeros((half, half), dtype=jnp.float32)
    # x @ rot_head == rotate_half(x) == concat(-x2, x1)  (neox style); entries 0/±1 exact in bf16
    rot_head = jnp.block([[zeros, eye], [-eye, zeros]])
    rot_q = jnp.kron(jnp.eye(NUM_HEADS, dtype=jnp.float32), rot_head).astype(jnp.bfloat16)
    rot_kv = jnp.kron(jnp.eye(NUM_KV_HEADS, dtype=jnp.float32), rot_head).astype(jnp.bfloat16)
    return cos_q, sin_q, cos_kv, sin_kv, rot_q, rot_kv


def causal_bias(T):
    row = lax.broadcasted_iota(jnp.int32, (T, T), 0)
    col = lax.broadcasted_iota(jnp.int32, (T, T), 1)
    return jnp.where(col <= row, 0.0, NEG_INF).astype(jnp.float32)


# ---------------- GraniteModel forward ----------------
@jax.jit
def granite_model_forward(input_ids, positions, params):
    # TODO(synk): VocabParallelEmbedding gather stays in plain JAX; TP/PP collectives,
    # paged KV cache, quantization and LoRA from vLLM are not modeled.
    h = params["embed"][input_ids] * EMBEDDING_MULTIPLIER
    cos_q, sin_q, cos_kv, sin_kv, rot_q, rot_kv = rope_tables(positions)
    bias = causal_bias(positions.shape[0])
    return granite_fused_forward(h, cos_q, sin_q, cos_kv, sin_kv, rot_q, rot_kv, bias, params)


# ---------------- pure-JAX reference for verification ----------------
def _ref_rmsnorm(x, w):
    var = jnp.mean(x * x, axis=-1, keepdims=True)
    return x * lax.rsqrt(var + RMS_EPS) * w


def _ref_rope(x, positions, n_heads):
    T = x.shape[0]
    half = HEAD_DIM // 2
    inv_freq = 1.0 / (ROPE_THETA ** (jnp.arange(0, half, dtype=jnp.float32) * 2.0 / HEAD_DIM))
    freqs = positions.astype(jnp.float32)[:, None] * inv_freq[None, :]
    cos = jnp.cos(freqs)[:, None, :]
    sin = jnp.sin(freqs)[:, None, :]
    xh = x.reshape(T, n_heads, HEAD_DIM)
    x1, x2 = xh[..., :half], xh[..., half:]
    o1 = x1 * cos - x2 * sin
    o2 = x2 * cos + x1 * sin
    return jnp.concatenate([o1, o2], axis=-1).reshape(T, n_heads * HEAD_DIM)


def _ref_layer(h, positions, params, li):
    T = h.shape[0]
    w_qkv = params["w_qkv"][li].astype(jnp.float32)
    w_o = params["w_o"][li].astype(jnp.float32)
    w_gu = params["w_gu"][li].astype(jnp.float32)
    w_down = params["w_down"][li].astype(jnp.float32)
    ln1 = params["ln1"][li]
    ln2 = params["ln2"][li]

    residual = h
    x = _ref_rmsnorm(h, ln1)
    qkv = x @ w_qkv
    q = qkv[:, :Q_SIZE]
    k = qkv[:, Q_SIZE:Q_SIZE + KV_SIZE]
    v = qkv[:, Q_SIZE + KV_SIZE:]
    q = _ref_rope(q, positions, NUM_HEADS)
    k = _ref_rope(k, positions, NUM_KV_HEADS)
    qh = q.reshape(T, NUM_HEADS, HEAD_DIM).transpose(1, 0, 2)
    kh = k.reshape(T, NUM_KV_HEADS, HEAD_DIM).transpose(1, 0, 2)
    vh = v.reshape(T, NUM_KV_HEADS, HEAD_DIM).transpose(1, 0, 2)
    kh = jnp.repeat(kh, GROUP, axis=0)
    vh = jnp.repeat(vh, GROUP, axis=0)
    s = jnp.einsum("htd,hsd->hts", qh, kh) * ATTENTION_MULTIPLIER
    mask = jnp.tril(jnp.ones((T, T), dtype=bool))
    s = jnp.where(mask[None], s, -jnp.inf)
    pattn = jax.nn.softmax(s, axis=-1)
    oh = jnp.einsum("hts,hsd->htd", pattn, vh)
    ctx = oh.transpose(1, 0, 2).reshape(T, Q_SIZE)
    h = residual + (ctx @ w_o) * RESIDUAL_MULTIPLIER
    residual = h
    x = _ref_rmsnorm(h, ln2)
    gu = x @ w_gu
    act = jax.nn.silu(gu[:, :INTERMEDIATE]) * gu[:, INTERMEDIATE:]
    h = residual + (act @ w_down) * RESIDUAL_MULTIPLIER
    return h


def reference_forward(input_ids, positions, params):
    h = params["embed"][input_ids] * EMBEDDING_MULTIPLIER
    for li in range(NUM_LAYERS):
        h = _ref_layer(h, positions, params, li)
    return _ref_rmsnorm(h, params["final_norm"])


# ---------------- deterministic synthetic weights (layer-stacked, bf16 projections) ----------------
def init_params(key):
    keys = jax.random.split(key, 8)
    s_h = jnp.sqrt(jnp.float32(HIDDEN))
    s_q = jnp.sqrt(jnp.float32(Q_SIZE))
    s_i = jnp.sqrt(jnp.float32(INTERMEDIATE))
    embed = jax.random.normal(keys[0], (VOCAB, HIDDEN), jnp.float32)
    final_w = 1.0 + 0.1 * jax.random.normal(keys[1], (1, HIDDEN), jnp.float32)
    ln1 = 1.0 + 0.1 * jax.random.normal(keys[2], (NUM_LAYERS, 1, HIDDEN), jnp.float32)
    ln2 = 1.0 + 0.1 * jax.random.normal(keys[3], (NUM_LAYERS, 1, HIDDEN), jnp.float32)
    w_qkv = (jax.random.normal(keys[4], (NUM_LAYERS, HIDDEN, QKV_DIM), jnp.float32) / s_h
             ).astype(jnp.bfloat16)
    w_o = (jax.random.normal(keys[5], (NUM_LAYERS, Q_SIZE, HIDDEN), jnp.float32) / s_q
           ).astype(jnp.bfloat16)
    w_gu = (jax.random.normal(keys[6], (NUM_LAYERS, HIDDEN, 2 * INTERMEDIATE), jnp.float32) / s_h
            ).astype(jnp.bfloat16)
    w_down = (jax.random.normal(keys[7], (NUM_LAYERS, INTERMEDIATE, HIDDEN), jnp.float32) / s_i
              ).astype(jnp.bfloat16)
    return dict(embed=embed, final_norm=final_w, ln1=ln1, ln2=ln2,
                w_qkv=w_qkv, w_o=w_o, w_gu=w_gu, w_down=w_down)


if __name__ == "__main__":
    params = init_params(jax.random.PRNGKey(0))
    ids_key = jax.random.fold_in(jax.random.PRNGKey(0), 123)
    input_ids = jax.random.randint(ids_key, (SEQ,), 0, VOCAB, dtype=jnp.int32)
    positions = jnp.arange(SEQ, dtype=jnp.int32)

    out = granite_model_forward(input_ids, positions, params)
    out = jax.block_until_ready(out)

    ref = reference_forward(input_ids, positions, params)
    assert out.shape == (SEQ, HIDDEN)
    max_err = float(jnp.max(jnp.abs(out - ref)))
    # bf16 matmul operands + approx reciprocal vs f32 reference -> slightly relaxed tolerance
    assert jnp.allclose(out, ref, atol=3e-2, rtol=3e-2), \
        f"kernel/reference mismatch (max abs err {max_err})"
    print("KERNEL_OK")
</pallas_src>

<mosaic_0001>
module attributes {stable_mosaic.version = 11 : i64} {
  func.func @_granite_fused_kernel(%arg0: i32, %arg1: memref<64x128xf32, #tpu.memory_space<vmem>>, %arg2: memref<64x128xf32, #tpu.memory_space<vmem>>, %arg3: memref<64x128xf32, #tpu.memory_space<vmem>>, %arg4: memref<64x64xf32, #tpu.memory_space<vmem>>, %arg5: memref<64x64xf32, #tpu.memory_space<vmem>>, %arg6: memref<128x128xbf16, #tpu.memory_space<vmem>>, %arg7: memref<64x64xbf16, #tpu.memory_space<vmem>>, %arg8: memref<64x64xf32, #tpu.memory_space<vmem>>, %arg9: memref<1x1x128xf32, #tpu.memory_space<vmem>>, %arg10: memref<1x128x256xbf16, #tpu.memory_space<vmem>>, %arg11: memref<1x128x128xbf16, #tpu.memory_space<vmem>>, %arg12: memref<1x1x128xf32, #tpu.memory_space<vmem>>, %arg13: memref<1x128x512xbf16, #tpu.memory_space<vmem>>, %arg14: memref<1x256x128xbf16, #tpu.memory_space<vmem>>, %arg15: memref<1x128xf32, #tpu.memory_space<vmem>>, %arg16: memref<64x128xf32, #tpu.memory_space<vmem>>, %arg17: memref<64x128xf32, #tpu.memory_space<vmem>>) attributes {dimension_semantics = [#tpu.dimension_semantics<arbitrary>], iteration_bounds = array<i64: 2>, scalar_prefetch = 0 : i64, scratch_operands = 1 : i64, tpu.core_type = #tpu.core_type<tc>, window_params = [{pipeline_mode = #tpu.pipeline_mode<synchronous>, transform_indices = @transform_0, window_bounds = array<i64: 64, 128>}, {pipeline_mode = #tpu.pipeline_mode<synchronous>, transform_indices = @transform_1, window_bounds = array<i64: 64, 128>}, {pipeline_mode = #tpu.pipeline_mode<synchronous>, transform_indices = @transform_2, window_bounds = array<i64: 64, 128>}, {pipeline_mode = #tpu.pipeline_mode<synchronous>, transform_indices = @transform_3, window_bounds = array<i64: 64, 64>}, {pipeline_mode = #tpu.pipeline_mode<synchronous>, transform_indices = @transform_4, window_bounds = array<i64: 64, 64>}, {pipeline_mode = #tpu.pipeline_mode<synchronous>, transform_indices = @transform_5, window_bounds = array<i64: 128, 128>}, {pipeline_mode = #tpu.pipeline_mode<synchronous>, transform_indices = @transform_6, window_bounds = array<i64: 64, 64>}, {pipeline_mode = #tpu.pipeline_mode<synchronous>, transform_indices = @transform_7, window_bounds = array<i64: 64, 64>}, {transform_indices = @transform_8, window_bounds = array<i64: 1, 1, 128>}, {transform_indices = @transform_9, window_bounds = array<i64: 1, 128, 256>}, {transform_indices = @transform_10, window_bounds = array<i64: 1, 128, 128>}, {transform_indices = @transform_11, window_bounds = array<i64: 1, 1, 128>}, {transform_indices = @transform_12, window_bounds = array<i64: 1, 128, 512>}, {transform_indices = @transform_13, window_bounds = array<i64: 1, 256, 128>}, {pipeline_mode = #tpu.pipeline_mode<synchronous>, transform_indices = @transform_14, window_bounds = array<i64: 1, 128>}, {pipeline_mode = #tpu.pipeline_mode<synchronous>, transform_indices = @transform_15, window_bounds = array<i64: 64, 128>}]} {
    %c0_i32 = arith.constant 0 : i32
    %0 = arith.cmpi eq, %arg0, %c0_i32 : i32
    %1 = arith.extui %0 : i1 to i32
    %c0_i32_0 = arith.constant 0 : i32
    %2 = arith.cmpi ne, %1, %c0_i32_0 : i32
    scf.if %2 {
      %c0_77 = arith.constant 0 : index
      %c0_78 = arith.constant 0 : index
      %192 = vector.load %arg1[%c0_77, %c0_78] : memref<64x128xf32, #tpu.memory_space<vmem>>, vector<64x128xf32>
      %c0_79 = arith.constant 0 : index
      %c0_80 = arith.constant 0 : index
      %193 = vector.load %arg17[%c0_79, %c0_80] : memref<64x128xf32, #tpu.memory_space<vmem>>, vector<64x128xf32>
      tpu.vector_store %arg17[%c0_79, %c0_80], %192 {strides = array<i32>} : memref<64x128xf32, #tpu.memory_space<vmem>>, vector<64x128xf32>,
    } else {
    }
    %c0 = arith.constant 0 : index
    %c0_1 = arith.constant 0 : index
    %3 = vector.load %arg17[%c0, %c0_1] : memref<64x128xf32, #tpu.memory_space<vmem>>, vector<64x128xf32>
    %c0_2 = arith.constant 0 : index
    %c0_3 = arith.constant 0 : index
    %c0_4 = arith.constant 0 : index
    %4 = vector.load %arg9[%c0_2, %c0_3, %c0_4] : memref<1x1x128xf32, #tpu.memory_space<vmem>>, vector<1x1x128xf32>
    %5 = vector.shape_cast %4 : vector<1x1x128xf32> to vector<1x128xf32>
    %6 = arith.mulf %3, %3 : vector<64x128xf32>
    %cst = arith.constant dense<0.000000e+00> : vector<64xf32>
    %7 = vector.multi_reduction <add>, %6, %cst [1] : vector<64x128xf32> to vector<64xf32>
    %8 = vector.shape_cast %7 : vector<64xf32> to vector<64x1xf32>
    %cst_5 = arith.constant 1.280000e+02 : f32
    %9 = vector.broadcast %cst_5 : f32 to vector<64x1xf32>
    %10 = arith.divf %8, %9 : vector<64x1xf32>
    %cst_6 = arith.constant 9.99999997E-7 : f32
    %11 = vector.broadcast %cst_6 : f32 to vector<64x1xf32>
    %12 = arith.addf %10, %11 : vector<64x1xf32>
    %13 = math.rsqrt %12 : vector<64x1xf32>
    %14 = vector.broadcast %13 : vector<64x1xf32> to vector<64x128xf32>
    %15 = arith.mulf %3, %14 : vector<64x128xf32>
    %16 = vector.broadcast %5 : vector<1x128xf32> to vector<64x128xf32>
    %17 = arith.mulf %15, %16 : vector<64x128xf32>
    %18 = arith.truncf %17 : vector<64x128xf32> to vector<64x128xbf16>
    %c0_7 = arith.constant 0 : index
    %c0_8 = arith.constant 0 : index
    %c0_9 = arith.constant 0 : index
    %19 = vector.load %arg10[%c0_7, %c0_8, %c0_9] : memref<1x128x256xbf16, #tpu.memory_space<vmem>>, vector<1x128x256xbf16>
    %20 = vector.shape_cast %19 : vector<1x128x256xbf16> to vector<128x256xbf16>
    %cst_10 = arith.constant dense<0.000000e+00> : vector<64x256xf32>
    %21 = tpu.matmul %18, %20, %cst_10 {dimension_numbers = #tpu.dot_dimension_numbers<[1], [0], [0], [1], [0, 0, 1, 1], [], []>} : vector<64x128xbf16>, vector<128x256xbf16>, vector<64x256xf32> -> vector<64x256xf32>
    %22 = vector.extract_strided_slice %21 {offsets = [0, 0], sizes = [64, 128], strides = [1, 1]} : vector<64x256xf32> to vector<64x128xf32>
    %23 = vector.extract_strided_slice %21 {offsets = [0, 128], sizes = [64, 64], strides = [1, 1]} : vector<64x256xf32> to vector<64x64xf32>
    %24 = vector.extract_strided_slice %21 {offsets = [0, 192], sizes = [64, 64], strides = [1, 1]} : vector<64x256xf32> to vector<64x64xf32>
    %25 = arith.truncf %22 : vector<64x128xf32> to vector<64x128xbf16>
    %c0_11 = arith.constant 0 : index
    %c0_12 = arith.constant 0 : index
    %26 = vector.load %arg6[%c0_11, %c0_12] : memref<128x128xbf16, #tpu.memory_space<vmem>>, vector<128x128xbf16>
    %cst_13 = arith.constant dense<0.000000e+00> : vector<64x128xf32>
    %27 = tpu.matmul %25, %26, %cst_13 {dimension_numbers = #tpu.dot_dimension_numbers<[1], [0], [0], [1], [0, 0, 1, 1], [], []>} : vector<64x128xbf16>, vector<128x128xbf16>, vector<64x128xf32> -> vector<64x128xf32>
    %28 = arith.truncf %23 : vector<64x64xf32> to vector<64x64xbf16>
    %c0_14 = arith.constant 0 : index
    %c0_15 = arith.constant 0 : index
    %29 = vector.load %arg7[%c0_14, %c0_15] : memref<64x64xbf16, #tpu.memory_space<vmem>>, vector<64x64xbf16>
    %cst_16 = arith.constant dense<0.000000e+00> : vector<64x64xf32>
    %30 = tpu.matmul %28, %29, %cst_16 {dimension_numbers = #tpu.dot_dimension_numbers<[1], [0], [0], [1], [0, 0, 1, 1], [], []>} : vector<64x64xbf16>, vector<64x64xbf16>, vector<64x64xf32> -> vector<64x64xf32>
    %c0_17 = arith.constant 0 : index
    %c0_18 = arith.constant 0 : index
    %31 = vector.load %arg2[%c0_17, %c0_18] : memref<64x128xf32, #tpu.memory_space<vmem>>, vector<64x128xf32>
    %32 = arith.mulf %22, %31 : vector<64x128xf32>
    %c0_19 = arith.constant 0 : index
    %c0_20 = arith.constant 0 : index
    %33 = vector.load %arg3[%c0_19, %c0_20] : memref<64x128xf32, #tpu.memory_space<vmem>>, vector<64x128xf32>
    %34 = arith.mulf %27, %33 : vector<64x128xf32>
    %35 = arith.addf %32, %34 : vector<64x128xf32>
    %c0_21 = arith.constant 0 : index
    %c0_22 = arith.constant 0 : index
    %36 = vector.load %arg4[%c0_21, %c0_22] : memref<64x64xf32, #tpu.memory_space<vmem>>, vector<64x64xf32>
    %37 = arith.mulf %23, %36 : vector<64x64xf32>
    %c0_23 = arith.constant 0 : index
    %c0_24 = arith.constant 0 : index
    %38 = vector.load %arg5[%c0_23, %c0_24] : memref<64x64xf32, #tpu.memory_space<vmem>>, vector<64x64xf32>
    %39 = arith.mulf %30, %38 : vector<64x64xf32>
    %40 = arith.addf %37, %39 : vector<64x64xf32>
    %c0_25 = arith.constant 0 : index
    %c0_26 = arith.constant 0 : index
    %41 = vector.load %arg8[%c0_25, %c0_26] : memref<64x64xf32, #tpu.memory_space<vmem>>, vector<64x64xf32>
    %c0_27 = arith.constant 0 : index
    %c0_28 = arith.constant 0 : index
    %c0_29 = arith.constant 0 : index
    %42 = vector.load %arg11[%c0_27, %c0_28, %c0_29] : memref<1x128x128xbf16, #tpu.memory_space<vmem>>, vector<1x128x128xbf16>
    %43 = vector.shape_cast %42 : vector<1x128x128xbf16> to vector<128x128xbf16>
    %cst_30 = arith.constant 0.000000e+00 : f32
    %44 = vector.broadcast %cst_30 : f32 to vector<64x128xf32>
    %45 = vector.extract_strided_slice %35 {offsets = [0, 0], sizes = [64, 32], strides = [1, 1]} : vector<64x128xf32> to vector<64x32xf32>
    %46 = arith.truncf %45 : vector<64x32xf32> to vector<64x32xbf16>
    %47 = vector.extract_strided_slice %40 {offsets = [0, 0], sizes = [64, 32], strides = [1, 1]} : vector<64x64xf32> to vector<64x32xf32>
    %48 = arith.truncf %47 : vector<64x32xf32> to vector<64x32xbf16>
    %49 = vector.extract_strided_slice %24 {offsets = [0, 0], sizes = [64, 32], strides = [1, 1]} : vector<64x64xf32> to vector<64x32xf32>
    %50 = arith.truncf %49 : vector<64x32xf32> to vector<64x32xbf16>
    %cst_31 = arith.constant dense<0.000000e+00> : vector<64x64xf32>
    %51 = tpu.matmul %46, %48, %cst_31 {dimension_numbers = #tpu.dot_dimension_numbers<[1], [1], [0], [0], [0, 0, 1, 0], [], []>} : vector<64x32xbf16>, vector<64x32xbf16>, vector<64x64xf32> -> vector<64x64xf32>
    %cst_32 = arith.constant 6.250000e-02 : f32
    %52 = vector.broadcast %cst_32 : f32 to vector<64x64xf32>
    %53 = arith.mulf %51, %52 : vector<64x64xf32>
    %54 = arith.addf %53, %41 : vector<64x64xf32>
    %cst_33 = arith.constant dense<0xFF800000> : vector<64xf32>
    %55 = vector.multi_reduction <maximumf>, %54, %cst_33 [1] : vector<64x64xf32> to vector<64xf32>
    %56 = vector.shape_cast %55 : vector<64xf32> to vector<64x1xf32>
    %57 = vector.broadcast %56 : vector<64x1xf32> to vector<64x64xf32>
    %58 = arith.subf %54, %57 : vector<64x64xf32>
    %59 = math.exp %58 : vector<64x64xf32>
    %cst_34 = arith.constant dense<0.000000e+00> : vector<64xf32>
    %60 = vector.multi_reduction <add>, %59, %cst_34 [1] : vector<64x64xf32> to vector<64xf32>
    %61 = vector.shape_cast %60 : vector<64xf32> to vector<64x1xf32>
    %62 = arith.truncf %59 : vector<64x64xf32> to vector<64x64xbf16>
    %cst_35 = arith.constant dense<0.000000e+00> : vector<64x32xf32>
    %63 = tpu.matmul %62, %50, %cst_35 {dimension_numbers = #tpu.dot_dimension_numbers<[1], [0], [0], [1], [0, 0, 1, 1], [], []>} : vector<64x64xbf16>, vector<64x32xbf16>, vector<64x32xf32> -> vector<64x32xf32>
    %64 = tpu.reciprocal %61 {approx = true} : vector<64x1xf32> -> vector<64x1xf32>
    %65 = vector.broadcast %64 : vector<64x1xf32> to vector<64x32xf32>
    %66 = arith.mulf %63, %65 : vector<64x32xf32>
    %67 = arith.truncf %66 : vector<64x32xf32> to vector<64x32xbf16>
    %68 = vector.extract_strided_slice %43 {offsets = [0, 0], sizes = [32, 128], strides = [1, 1]} : vector<128x128xbf16> to vector<32x128xbf16>
    %cst_36 = arith.constant dense<0.000000e+00> : vector<64x128xf32>
    %69 = tpu.matmul %67, %68, %cst_36 {dimension_numbers = #tpu.dot_dimension_numbers<[1], [0], [0], [1], [0, 0, 1, 1], [], []>} : vector<64x32xbf16>, vector<32x128xbf16>, vector<64x128xf32> -> vector<64x128xf32>
    %70 = arith.addf %44, %69 : vector<64x128xf32>
    %71 = vector.extract_strided_slice %35 {offsets = [0, 32], sizes = [64, 32], strides = [1, 1]} : vector<64x128xf32> to vector<64x32xf32>
    %72 = arith.truncf %71 : vector<64x32xf32> to vector<64x32xbf16>
    %73 = vector.extract_strided_slice %40 {offsets = [0, 0], sizes = [64, 32], strides = [1, 1]} : vector<64x64xf32> to vector<64x32xf32>
    %74 = arith.truncf %73 : vector<64x32xf32> to vector<64x32xbf16>
    %75 = vector.extract_strided_slice %24 {offsets = [0, 0], sizes = [64, 32], strides = [1, 1]} : vector<64x64xf32> to vector<64x32xf32>
    %76 = arith.truncf %75 : vector<64x32xf32> to vector<64x32xbf16>
    %cst_37 = arith.constant dense<0.000000e+00> : vector<64x64xf32>
    %77 = tpu.matmul %72, %74, %cst_37 {dimension_numbers = #tpu.dot_dimension_numbers<[1], [1], [0], [0], [0, 0, 1, 0], [], []>} : vector<64x32xbf16>, vector<64x32xbf16>, vector<64x64xf32> -> vector<64x64xf32>
    %cst_38 = arith.constant 6.250000e-02 : f32
    %78 = vector.broadcast %cst_38 : f32 to vector<64x64xf32>
    %79 = arith.mulf %77, %78 : vector<64x64xf32>
    %80 = arith.addf %79, %41 : vector<64x64xf32>
    %cst_39 = arith.constant dense<0xFF800000> : vector<64xf32>
    %81 = vector.multi_reduction <maximumf>, %80, %cst_39 [1] : vector<64x64xf32> to vector<64xf32>
    %82 = vector.shape_cast %81 : vector<64xf32> to vector<64x1xf32>
    %83 = vector.broadcast %82 : vector<64x1xf32> to vector<64x64xf32>
    %84 = arith.subf %80, %83 : vector<64x64xf32>
    %85 = math.exp %84 : vector<64x64xf32>
    %cst_40 = arith.constant dense<0.000000e+00> : vector<64xf32>
    %86 = vector.multi_reduction <add>, %85, %cst_40 [1] : vector<64x64xf32> to vector<64xf32>
    %87 = vector.shape_cast %86 : vector<64xf32> to vector<64x1xf32>
    %88 = arith.truncf %85 : vector<64x64xf32> to vector<64x64xbf16>
    %cst_41 = arith.constant dense<0.000000e+00> : vector<64x32xf32>
    %89 = tpu.matmul %88, %76, %cst_41 {dimension_numbers = #tpu.dot_dimension_numbers<[1], [0], [0], [1], [0, 0, 1, 1], [], []>} : vector<64x64xbf16>, vector<64x32xbf16>, vector<64x32xf32> -> vector<64x32xf32>
    %90 = tpu.reciprocal %87 {approx = true} : vector<64x1xf32> -> vector<64x1xf32>
    %91 = vector.broadcast %90 : vector<64x1xf32> to vector<64x32xf32>
    %92 = arith.mulf %89, %91 : vector<64x32xf32>
    %93 = arith.truncf %92 : vector<64x32xf32> to vector<64x32xbf16>
    %94 = vector.extract_strided_slice %43 {offsets = [32, 0], sizes = [32, 128], strides = [1, 1]} : vector<128x128xbf16> to vector<32x128xbf16>
    %cst_42 = arith.constant dense<0.000000e+00> : vector<64x128xf32>
    %95 = tpu.matmul %93, %94, %cst_42 {dimension_numbers = #tpu.dot_dimension_numbers<[1], [0], [0], [1], [0, 0, 1, 1], [], []>} : vector<64x32xbf16>, vector<32x128xbf16>, vector<64x128xf32> -> vector<64x128xf32>
    %96 = arith.addf %70, %95 : vector<64x128xf32>
    %97 = vector.extract_strided_slice %35 {offsets = [0, 64], sizes = [64, 32], strides = [1, 1]} : vector<64x128xf32> to vector<64x32xf32>
    %98 = arith.truncf %97 : vector<64x32xf32> to vector<64x32xbf16>
    %99 = vector.extract_strided_slice %40 {offsets = [0, 32], sizes = [64, 32], strides = [1, 1]} : vector<64x64xf32> to vector<64x32xf32>
    %100 = arith.truncf %99 : vector<64x32xf32> to vector<64x32xbf16>
    %101 = vector.extract_strided_slice %24 {offsets = [0, 32], sizes = [64, 32], strides = [1, 1]} : vector<64x64xf32> to vector<64x32xf32>
    %102 = arith.truncf %101 : vector<64x32xf32> to vector<64x32xbf16>
    %cst_43 = arith.constant dense<0.000000e+00> : vector<64x64xf32>
    %103 = tpu.matmul %98, %100, %cst_43 {dimension_numbers = #tpu.dot_dimension_numbers<[1], [1], [0], [0], [0, 0, 1, 0], [], []>} : vector<64x32xbf16>, vector<64x32xbf16>, vector<64x64xf32> -> vector<64x64xf32>
    %cst_44 = arith.constant 6.250000e-02 : f32
    %104 = vector.broadcast %cst_44 : f32 to vector<64x64xf32>
    %105 = arith.mulf %103, %104 : vector<64x64xf32>
    %106 = arith.addf %105, %41 : vector<64x64xf32>
    %cst_45 = arith.constant dense<0xFF800000> : vector<64xf32>
    %107 = vector.multi_reduction <maximumf>, %106, %cst_45 [1] : vector<64x64xf32> to vector<64xf32>
    %108 = vector.shape_cast %107 : vector<64xf32> to vector<64x1xf32>
    %109 = vector.broadcast %108 : vector<64x1xf32> to vector<64x64xf32>
    %110 = arith.subf %106, %109 : vector<64x64xf32>
    %111 = math.exp %110 : vector<64x64xf32>
    %cst_46 = arith.constant dense<0.000000e+00> : vector<64xf32>
    %112 = vector.multi_reduction <add>, %111, %cst_46 [1] : vector<64x64xf32> to vector<64xf32>
    %113 = vector.shape_cast %112 : vector<64xf32> to vector<64x1xf32>
    %114 = arith.truncf %111 : vector<64x64xf32> to vector<64x64xbf16>
    %cst_47 = arith.constant dense<0.000000e+00> : vector<64x32xf32>
    %115 = tpu.matmul %114, %102, %cst_47 {dimension_numbers = #tpu.dot_dimension_numbers<[1], [0], [0], [1], [0, 0, 1, 1], [], []>} : vector<64x64xbf16>, vector<64x32xbf16>, vector<64x32xf32> -> vector<64x32xf32>
    %116 = tpu.reciprocal %113 {approx = true} : vector<64x1xf32> -> vector<64x1xf32>
    %117 = vector.broadcast %116 : vector<64x1xf32> to vector<64x32xf32>
    %118 = arith.mulf %115, %117 : vector<64x32xf32>
    %119 = arith.truncf %118 : vector<64x32xf32> to vector<64x32xbf16>
    %120 = vector.extract_strided_slice %43 {offsets = [64, 0], sizes = [32, 128], strides = [1, 1]} : vector<128x128xbf16> to vector<32x128xbf16>
    %cst_48 = arith.constant dense<0.000000e+00> : vector<64x128xf32>
    %121 = tpu.matmul %119, %120, %cst_48 {dimension_numbers = #tpu.dot_dimension_numbers<[1], [0], [0], [1], [0, 0, 1, 1], [], []>} : vector<64x32xbf16>, vector<32x128xbf16>, vector<64x128xf32> -> vector<64x128xf32>
    %122 = arith.addf %96, %121 : vector<64x128xf32>
    %123 = vector.extract_strided_slice %35 {offsets = [0, 96], sizes = [64, 32], strides = [1, 1]} : vector<64x128xf32> to vector<64x32xf32>
    %124 = arith.truncf %123 : vector<64x32xf32> to vector<64x32xbf16>
    %125 = vector.extract_strided_slice %40 {offsets = [0, 32], sizes = [64, 32], strides = [1, 1]} : vector<64x64xf32> to vector<64x32xf32>
    %126 = arith.truncf %125 : vector<64x32xf32> to vector<64x32xbf16>
    %127 = vector.extract_strided_slice %24 {offsets = [0, 32], sizes = [64, 32], strides = [1, 1]} : vector<64x64xf32> to vector<64x32xf32>
    %128 = arith.truncf %127 : vector<64x32xf32> to vector<64x32xbf16>
    %cst_49 = arith.constant dense<0.000000e+00> : vector<64x64xf32>
    %129 = tpu.matmul %124, %126, %cst_49 {dimension_numbers = #tpu.dot_dimension_numbers<[1], [1], [0], [0], [0, 0, 1, 0], [], []>} : vector<64x32xbf16>, vector<64x32xbf16>, vector<64x64xf32> -> vector<64x64xf32>
    %cst_50 = arith.constant 6.250000e-02 : f32
    %130 = vector.broadcast %cst_50 : f32 to vector<64x64xf32>
    %131 = arith.mulf %129, %130 : vector<64x64xf32>
    %132 = arith.addf %131, %41 : vector<64x64xf32>
    %cst_51 = arith.constant dense<0xFF800000> : vector<64xf32>
    %133 = vector.multi_reduction <maximumf>, %132, %cst_51 [1] : vector<64x64xf32> to vector<64xf32>
    %134 = vector.shape_cast %133 : vector<64xf32> to vector<64x1xf32>
    %135 = vector.broadcast %134 : vector<64x1xf32> to vector<64x64xf32>
    %136 = arith.subf %132, %135 : vector<64x64xf32>
    %137 = math.exp %136 : vector<64x64xf32>
    %cst_52 = arith.constant dense<0.000000e+00> : vector<64xf32>
    %138 = vector.multi_reduction <add>, %137, %cst_52 [1] : vector<64x64xf32> to vector<64xf32>
    %139 = vector.shape_cast %138 : vector<64xf32> to vector<64x1xf32>
    %140 = arith.truncf %137 : vector<64x64xf32> to vector<64x64xbf16>
    %cst_53 = arith.constant dense<0.000000e+00> : vector<64x32xf32>
    %141 = tpu.matmul %140, %128, %cst_53 {dimension_numbers = #tpu.dot_dimension_numbers<[1], [0], [0], [1], [0, 0, 1, 1], [], []>} : vector<64x64xbf16>, vector<64x32xbf16>, vector<64x32xf32> -> vector<64x32xf32>
    %142 = tpu.reciprocal %139 {approx = true} : vector<64x1xf32> -> vector<64x1xf32>
    %143 = vector.broadcast %142 : vector<64x1xf32> to vector<64x32xf32>
    %144 = arith.mulf %141, %143 : vector<64x32xf32>
    %145 = arith.truncf %144 : vector<64x32xf32> to vector<64x32xbf16>
    %146 = vector.extract_strided_slice %43 {offsets = [96, 0], sizes = [32, 128], strides = [1, 1]} : vector<128x128xbf16> to vector<32x128xbf16>
    %cst_54 = arith.constant dense<0.000000e+00> : vector<64x128xf32>
    %147 = tpu.matmul %145, %146, %cst_54 {dimension_numbers = #tpu.dot_dimension_numbers<[1], [0], [0], [1], [0, 0, 1, 1], [], []>} : vector<64x32xbf16>, vector<32x128xbf16>, vector<64x128xf32> -> vector<64x128xf32>
    %148 = arith.addf %122, %147 : vector<64x128xf32>
    %cst_55 = arith.constant 2.200000e-01 : f32
    %149 = vector.broadcast %cst_55 : f32 to vector<64x128xf32>
    %150 = arith.mulf %148, %149 : vector<64x128xf32>
    %151 = arith.addf %3, %150 : vector<64x128xf32>
    %c0_56 = arith.constant 0 : index
    %c0_57 = arith.constant 0 : index
    %c0_58 = arith.constant 0 : index
    %152 = vector.load %arg12[%c0_56, %c0_57, %c0_58] : memref<1x1x128xf32, #tpu.memory_space<vmem>>, vector<1x1x128xf32>
    %153 = vector.shape_cast %152 : vector<1x1x128xf32> to vector<1x128xf32>
    %154 = arith.mulf %151, %151 : vector<64x128xf32>
    %cst_59 = arith.constant dense<0.000000e+00> : vector<64xf32>
    %155 = vector.multi_reduction <add>, %154, %cst_59 [1] : vector<64x128xf32> to vector<64xf32>
    %156 = vector.shape_cast %155 : vector<64xf32> to vector<64x1xf32>
    %cst_60 = arith.constant 1.280000e+02 : f32
    %157 = vector.broadcast %cst_60 : f32 to vector<64x1xf32>
    %158 = arith.divf %156, %157 : vector<64x1xf32>
    %cst_61 = arith.constant 9.99999997E-7 : f32
    %159 = vector.broadcast %cst_61 : f32 to vector<64x1xf32>
    %160 = arith.addf %158, %159 : vector<64x1xf32>
    %161 = math.rsqrt %160 : vector<64x1xf32>
    %162 = vector.broadcast %161 : vector<64x1xf32> to vector<64x128xf32>
    %163 = arith.mulf %151, %162 : vector<64x128xf32>
    %164 = vector.broadcast %153 : vector<1x128xf32> to vector<64x128xf32>
    %165 = arith.mulf %163, %164 : vector<64x128xf32>
    %166 = arith.truncf %165 : vector<64x128xf32> to vector<64x128xbf16>
    %c0_62 = arith.constant 0 : index
    %c0_63 = arith.constant 0 : index
    %c0_64 = arith.constant 0 : index
    %167 = vector.load %arg13[%c0_62, %c0_63, %c0_64] : memref<1x128x512xbf16, #tpu.memory_space<vmem>>, vector<1x128x512xbf16>
    %168 = vector.shape_cast %167 : vector<1x128x512xbf16> to vector<128x512xbf16>
    %cst_65 = arith.constant dense<0.000000e+00> : vector<64x512xf32>
    %169 = tpu.matmul %166, %168, %cst_65 {dimension_numbers = #tpu.dot_dimension_numbers<[1], [0], [0], [1], [0, 0, 1, 1], [], []>} : vector<64x128xbf16>, vector<128x512xbf16>, vector<64x512xf32> -> vector<64x512xf32>
    %170 = vector.extract_strided_slice %169 {offsets = [0, 0], sizes = [64, 256], strides = [1, 1]} : vector<64x512xf32> to vector<64x256xf32>
    %171 = vector.extract_strided_slice %169 {offsets = [0, 256], sizes = [64, 256], strides = [1, 1]} : vector<64x512xf32> to vector<64x256xf32>
    %cst_66 = arith.constant 0.000000e+00 : f32
    %172 = vector.broadcast %cst_66 : f32 to vector<64x256xf32>
    %173 = arith.subf %172, %170 : vector<64x256xf32>
    %174 = math.exp %173 : vector<64x256xf32>
    %cst_67 = arith.constant 1.000000e+00 : f32
    %175 = vector.broadcast %cst_67 : f32 to vector<64x256xf32>
    %176 = arith.addf %175, %174 : vector<64x256xf32>
    %cst_68 = arith.constant 1.000000e+00 : f32
    %177 = vector.broadcast %cst_68 : f32 to vector<64x256xf32>
    %178 = arith.divf %177, %176 : vector<64x256xf32>
    %179 = arith.mulf %170, %178 : vector<64x256xf32>
    %180 = arith.mulf %179, %171 : vector<64x256xf32>
    %181 = arith.truncf %180 : vector<64x256xf32> to vector<64x256xbf16>
    %c0_69 = arith.constant 0 : index
    %c0_70 = arith.constant 0 : index
    %c0_71 = arith.constant 0 : index
    %182 = vector.load %arg14[%c0_69, %c0_70, %c0_71] : memref<1x256x128xbf16, #tpu.memory_space<vmem>>, vector<1x256x128xbf16>
    %183 = vector.shape_cast %182 : vector<1x256x128xbf16> to vector<256x128xbf16>
    %cst_72 = arith.constant dense<0.000000e+00> : vector<64x128xf32>
    %184 = tpu.matmul %181, %183, %cst_72 {dimension_numbers = #tpu.dot_dimension_numbers<[1], [0], [0], [1], [0, 0, 1, 1], [], []>} : vector<64x256xbf16>, vector<256x128xbf16>, vector<64x128xf32> -> vector<64x128xf32>
    %cst_73 = arith.constant 2.200000e-01 : f32
    %185 = vector.broadcast %cst_73 : f32 to vector<64x128xf32>
    %186 = arith.mulf %184, %185 : vector<64x128xf32>
    %187 = arith.addf %151, %186 : vector<64x128xf32>
    %c0_74 = arith.constant 0 : index
    %c0_75 = arith.constant 0 : index
    %188 = vector.load %arg17[%c0_74, %c0_75] : memref<64x128xf32, #tpu.memory_space<vmem>>, vector<64x128xf32>
    tpu.vector_store %arg17[%c0_74, %c0_75], %187 {strides = array<i32>} : memref<64x128xf32, #tpu.memory_space<vmem>>, vector<64x128xf32>,
    %c1_i32 = arith.constant 1 : i32
    %189 = arith.cmpi eq, %arg0, %c1_i32 : i32
    %190 = arith.extui %189 : i1 to i32
    %c0_i32_76 = arith.constant 0 : i32
    %191 = arith.cmpi ne, %190, %c0_i32_76 : i32
    scf.if %191 {
      %c0_77 = arith.constant 0 : index
      %c0_78 = arith.constant 0 : index
      %192 = vector.load %arg15[%c0_77, %c0_78] : memref<1x128xf32, #tpu.memory_space<vmem>>, vector<1x128xf32>
      %193 = arith.mulf %187, %187 : vector<64x128xf32>
      %cst_79 = arith.constant dense<0.000000e+00> : vector<64xf32>
      %194 = vector.multi_reduction <add>, %193, %cst_79 [1] : vector<64x128xf32> to vector<64xf32>
      %195 = vector.shape_cast %194 : vector<64xf32> to vector<64x1xf32>
      %cst_80 = arith.constant 1.280000e+02 : f32
      %196 = vector.broadcast %cst_80 : f32 to vector<64x1xf32>
      %197 = arith.divf %195, %196 : vector<64x1xf32>
      %cst_81 = arith.constant 9.99999997E-7 : f32
      %198 = vector.broadcast %cst_81 : f32 to vector<64x1xf32>
      %199 = arith.addf %197, %198 : vector<64x1xf32>
      %200 = math.rsqrt %199 : vector<64x1xf32>
      %201 = vector.broadcast %200 : vector<64x1xf32> to vector<64x128xf32>
      %202 = arith.mulf %187, %201 : vector<64x128xf32>
      %203 = vector.broadcast %192 : vector<1x128xf32> to vector<64x128xf32>
      %204 = arith.mulf %202, %203 : vector<64x128xf32>
      %c0_82 = arith.constant 0 : index
      %c0_83 = arith.constant 0 : index
      %205 = vector.load %arg16[%c0_82, %c0_83] : memref<64x128xf32, #tpu.memory_space<vmem>>, vector<64x128xf32>
      tpu.vector_store %arg16[%c0_82, %c0_83], %204 {strides = array<i32>} : memref<64x128xf32, #tpu.memory_space<vmem>>, vector<64x128xf32>,
    } else {
    }
    return
  }
  func.func @transform_0(%arg0: i32) -> (i32, i32) {
    %c0_i32 = arith.constant 0 : i32
    %c0_i32_0 = arith.constant 0 : i32
    %c0_i32_1 = arith.constant 0 : i32
    return %c0_i32, %c0_i32_0 : i32, i32
  }
  func.func @transform_1(%arg0: i32) -> (i32, i32) {
    %c0_i32 = arith.constant 0 : i32
    %c0_i32_0 = arith.constant 0 : i32
    %c0_i32_1 = arith.constant 0 : i32
    return %c0_i32, %c0_i32_0 : i32, i32
  }
  func.func @transform_2(%arg0: i32) -> (i32, i32) {
    %c0_i32 = arith.constant 0 : i32
    %c0_i32_0 = arith.constant 0 : i32
    %c0_i32_1 = arith.constant 0 : i32
    return %c0_i32, %c0_i32_0 : i32, i32
  }
  func.func @transform_3(%arg0: i32) -> (i32, i32) {
    %c0_i32 = arith.constant 0 : i32
    %c0_i32_0 = arith.constant 0 : i32
    %c0_i32_1 = arith.constant 0 : i32
    return %c0_i32, %c0_i32_0 : i32, i32
  }
  func.func @transform_4(%arg0: i32) -> (i32, i32) {
    %c0_i32 = arith.constant 0 : i32
    %c0_i32_0 = arith.constant 0 : i32
    %c0_i32_1 = arith.constant 0 : i32
    return %c0_i32, %c0_i32_0 : i32, i32
  }
  func.func @transform_5(%arg0: i32) -> (i32, i32) {
    %c0_i32 = arith.constant 0 : i32
    %c0_i32_0 = arith.constant 0 : i32
    %c0_i32_1 = arith.constant 0 : i32
    return %c0_i32, %c0_i32_0 : i32, i32
  }
  func.func @transform_6(%arg0: i32) -> (i32, i32) {
    %c0_i32 = arith.constant 0 : i32
    %c0_i32_0 = arith.constant 0 : i32
    %c0_i32_1 = arith.constant 0 : i32
    return %c0_i32, %c0_i32_0 : i32, i32
  }
  func.func @transform_7(%arg0: i32) -> (i32, i32) {
    %c0_i32 = arith.constant 0 : i32
    %c0_i32_0 = arith.constant 0 : i32
    %c0_i32_1 = arith.constant 0 : i32
    return %c0_i32, %c0_i32_0 : i32, i32
  }
  func.func @transform_8(%arg0: i32) -> (i32, i32, i32) {
    %c0_i32 = arith.constant 0 : i32
    %c0_i32_0 = arith.constant 0 : i32
    %c0_i32_1 = arith.constant 0 : i32
    return %arg0, %c0_i32, %c0_i32_0 : i32, i32, i32
  }
  func.func @transform_9(%arg0: i32) -> (i32, i32, i32) {
    %c0_i32 = arith.constant 0 : i32
    %c0_i32_0 = arith.constant 0 : i32
    %c0_i32_1 = arith.constant 0 : i32
    return %arg0, %c0_i32, %c0_i32_0 : i32, i32, i32
  }
  func.func @transform_10(%arg0: i32) -> (i32, i32, i32) {
    %c0_i32 = arith.constant 0 : i32
    %c0_i32_0 = arith.constant 0 : i32
    %c0_i32_1 = arith.constant 0 : i32
    return %arg0, %c0_i32, %c0_i32_0 : i32, i32, i32
  }
  func.func @transform_11(%arg0: i32) -> (i32, i32, i32) {
    %c0_i32 = arith.constant 0 : i32
    %c0_i32_0 = arith.constant 0 : i32
    %c0_i32_1 = arith.constant 0 : i32
    return %arg0, %c0_i32, %c0_i32_0 : i32, i32, i32
  }
  func.func @transform_12(%arg0: i32) -> (i32, i32, i32) {
    %c0_i32 = arith.constant 0 : i32
    %c0_i32_0 = arith.constant 0 : i32
    %c0_i32_1 = arith.constant 0 : i32
    return %arg0, %c0_i32, %c0_i32_0 : i32, i32, i32
  }
  func.func @transform_13(%arg0: i32) -> (i32, i32, i32) {
    %c0_i32 = arith.constant 0 : i32
    %c0_i32_0 = arith.constant 0 : i32
    %c0_i32_1 = arith.constant 0 : i32
    return %arg0, %c0_i32, %c0_i32_0 : i32, i32, i32
  }
  func.func @transform_14(%arg0: i32) -> (i32, i32) {
    %c0_i32 = arith.constant 0 : i32
    %c0_i32_0 = arith.constant 0 : i32
    %c0_i32_1 = arith.constant 0 : i32
    return %c0_i32, %c0_i32_0 : i32, i32
  }
  func.func @transform_15(%arg0: i32) -> (i32, i32) {
    %c0_i32 = arith.constant 0 : i32
    %c0_i32_0 = arith.constant 0 : i32
    %c0_i32_1 = arith.constant 0 : i32
    return %c0_i32, %c0_i32_0 : i32, i32
  }
}

</mosaic_0001>

<llo_original>
// kernel: granite_model_forward.1
$region0: #{granite_model_forward.1}
  #allocation0 [shape = 'u32[]', space=smem, size = 0x4, offset = 0x4, fixed_abs, tag = 'smem constant byte address 0x4 - core index']
  #allocation1 [shape = 'u32[144,128]{1,0:T(1,128)}', space=vmem, size = 0x12000, scoped, tag = 'internal scratch']
  #allocation2 [shape = 'f32[64,128]{1,0:T(8,128)}', space=vmem, size = 0x8000, scoped, tag = 'scratch operand']
  %s0 = inlined_call_operand.vmem [shape: f32[64,128], index: 0, kind: input, shape index: {}]
  %s1 = inlined_call_operand.vmem [shape: f32[64,128], index: 1, kind: input, shape index: {}]
  %s2 = inlined_call_operand.vmem [shape: f32[64,128], index: 2, kind: input, shape index: {}]
  %s3 = inlined_call_operand.vmem [shape: f32[64,64], index: 3, kind: input, shape index: {}]
  %s4 = inlined_call_operand.vmem [shape: f32[64,64], index: 4, kind: input, shape index: {}]
  %s5 = inlined_call_operand.vmem [shape: bf16[128,128], index: 5, kind: input, shape index: {}]
  %s6 = inlined_call_operand.vmem [shape: bf16[64,64], index: 6, kind: input, shape index: {}]
  %s7 = inlined_call_operand.vmem [shape: f32[64,64], index: 7, kind: input, shape index: {}]
  %s8 = inlined_call_operand.vmem [shape: f32[2,1,128], index: 8, kind: input, shape index: {}]
  %s9 = inlined_call_operand.vmem [shape: bf16[2,128,256], index: 9, kind: input, shape index: {}]
  %s10 = inlined_call_operand.vmem [shape: bf16[2,128,128], index: 10, kind: input, shape index: {}]
  %s11 = inlined_call_operand.vmem [shape: f32[2,1,128], index: 11, kind: input, shape index: {}]
  %s12 = inlined_call_operand.vmem [shape: bf16[2,128,512], index: 12, kind: input, shape index: {}]
  %s13 = inlined_call_operand.vmem [shape: bf16[2,256,128], index: 13, kind: input, shape index: {}]
  %s14 = inlined_call_operand.vmem [shape: f32[1,128], index: 14, kind: input, shape index: {}]
  %s15 = inlined_call_operand.hbm [shape: f32[64,128], index: 15, kind: output, shape index: {}]
  %s16 = sld [smem:[#allocation0]]
  $region101: #{granite_model_forward.1} parent=0
    _
  %s18 = ssub.s32 1, %s16
  %s19 = scalar_select 0, %s18, %s16
  $region1: #{granite_model_forward.1} parent=0
    #allocation3 [shape = 'u8[32768]{0}', space=vmem, size = 0x8000, scoped, tag = 'output window, operand 0, single buffered']
    #allocation4 [shape = 's32[2]{0}', space=sflag, size = 0x8, scoped, tag = 'scoped memory for granite_model_forward.1']
    %20 = vsyncpa [#allocation4], 0
    loop: start=0, step=1, limit=4
    $region2: #{granite_model_forward.1} parent=1 // loop_pre_header
      _
    $region3: #{granite_model_forward.1} parent=1 // loop_header
      %s22 = sphi 0, %s26
      %p23 = scmp.ge.s32.totalorder %s22, 4
      %s30 = sphi 0, %s30
      %s32 = sphi 0, %s30
      %s33 = sphi 0, %s32
      %s47 = sphi 0, %s33
      %s51 = sphi 0, %s51
      %s53 = sphi 0, %s51
      %s54 = sphi 0, %s53
      %s68 = sphi 0, %s54
      %s72 = sphi 0, %s72
      %s74 = sphi 0, %s72
      %s75 = sphi 0, %s74
      %s89 = sphi 0, %s75
      %s93 = sphi 0, %s93
      %s95 = sphi 0, %s93
      %s96 = sphi 0, %s95
      %s110 = sphi 0, %s96
      %s114 = sphi 0, %s114
      %s116 = sphi 0, %s114
      %s117 = sphi 0, %s116
      %s131 = sphi 0, %s117
      %s135 = sphi 0, %s135
      %s137 = sphi 0, %s135
      %s138 = sphi 0, %s137
      %s152 = sphi 0, %s138
      %s156 = sphi 0, %s156
      %s158 = sphi 0, %s156
      %s159 = sphi 0, %s158
      %s173 = sphi 0, %s159
      %s177 = sphi 0, %s177
      %s179 = sphi 0, %s177
      %s180 = sphi 0, %s179
      %s194 = sphi 0, %s180
      %s200 = sphi 0, %s202
      %s203 = sphi 0, %s200
      %s204 = sphi 0, %s203
      %s220 = sphi 0, %s204
      %s226 = sphi 0, %s228
      %s229 = sphi 0, %s226
      %s230 = sphi 0, %s229
      %s246 = sphi 0, %s230
      %s252 = sphi 0, %s254
      %s255 = sphi 0, %s252
      %s256 = sphi 0, %s255
      %s272 = sphi 0, %s256
      %s278 = sphi 0, %s280
      %s281 = sphi 0, %s278
      %s282 = sphi 0, %s281
      %s298 = sphi 0, %s282
      %s304 = sphi 0, %s306
      %s307 = sphi 0, %s304
      %s308 = sphi 0, %s307
      %s324 = sphi 0, %s308
      %s330 = sphi 0, %s332
      %s333 = sphi 0, %s330
      %s334 = sphi 0, %s333
      %s350 = sphi 0, %s334
      %s354 = sphi 0, %s354
      %s356 = sphi 0, %s354
      %s357 = sphi 0, %s356
      %s371 = sphi 0, %s357
      %s375 = sphi 0, %s375
      %s377 = sphi 0, %s375
      %s378 = sphi 0, %s377
      %s392 = sphi 0, %s378
    $region4: #{granite_model_forward.1} parent=1 // loop_header_branch
      %25 = sbr.rel (%p23) target = $region8
    $region5: #{granite_model_forward.1} parent=1 // loop_body
      %s27 = ssub.s32 %s22, 1
      %s28 = ssub.s32 %s22, 2
      %s29 = sadd.s32 %s22, 1
      %s31 = sadd.s32 %s30, 1
      %p34 = scmp.eq.s32.totalorder %s22, 1
      %p35 = scmp.ne.s32.totalorder %s30, %s32
      %p36 = scmp.eq.s32.totalorder %s22, 0
      %p37 = por %p35, %p36
      %p38 = scmp.ne.s32.totalorder %s30, %s32
      %p39 = scmp.eq.s32.totalorder %s27, 1
      %p40 = por %p38, %p39
      %p41 = scmp.ne.s32.totalorder %s32, %s33
      %p42 = scmp.eq.s32.totalorder %s27, 0
      %p43 = por %p41, %p42
      %p44 = scmp.ne.s32.totalorder %s32, %s33
      %p45 = scmp.eq.s32.totalorder %s28, 1
      %p46 = por %p44, %p45
      %p48 = scmp.ne.s32.totalorder %s33, %s47
      %p49 = scmp.eq.s32.totalorder %s28, 0
      %p50 = por %p48, %p49
      %s52 = sadd.s32 %s51, 1
      %p55 = scmp.eq.s32.totalorder %s22, 1
      %p56 = scmp.ne.s32.totalorder %s51, %s53
      %p57 = scmp.eq.s32.totalorder %s22, 0
      %p58 = por %p56, %p57
      %p59 = scmp.ne.s32.totalorder %s51, %s53
      %p60 = scmp.eq.s32.totalorder %s27, 1
      %p61 = por %p59, %p60
      %p62 = scmp.ne.s32.totalorder %s53, %s54
      %p63 = scmp.eq.s32.totalorder %s27, 0
      %p64 = por %p62, %p63
      %p65 = scmp.ne.s32.totalorder %s53, %s54
      %p66 = scmp.eq.s32.totalorder %s28, 1
      %p67 = por %p65, %p66
      %p69 = scmp.ne.s32.totalorder %s54, %s68
      %p70 = scmp.eq.s32.totalorder %s28, 0
      %p71 = por %p69, %p70
      %s73 = sadd.s32 %s72, 1
      %p76 = scmp.eq.s32.totalorder %s22, 1
      %p77 = scmp.ne.s32.totalorder %s72, %s74
      %p78 = scmp.eq.s32.totalorder %s22, 0
      %p79 = por %p77, %p78
      %p80 = scmp.ne.s32.totalorder %s72, %s74
      %p81 = scmp.eq.s32.totalorder %s27, 1
      %p82 = por %p80, %p81
      %p83 = scmp.ne.s32.totalorder %s74, %s75
      %p84 = scmp.eq.s32.totalorder %s27, 0
      %p85 = por %p83, %p84
      %p86 = scmp.ne.s32.totalorder %s74, %s75
      %p87 = scmp.eq.s32.totalorder %s28, 1
      %p88 = por %p86, %p87
      %p90 = scmp.ne.s32.totalorder %s75, %s89
      %p91 = scmp.eq.s32.totalorder %s28, 0
      %p92 = por %p90, %p91
      %s94 = sadd.s32 %s93, 1
      %p97 = scmp.eq.s32.totalorder %s22, 1
      %p98 = scmp.ne.s32.totalorder %s93, %s95
      %p99 = scmp.eq.s32.totalorder %s22, 0
      %p100 = por %p98, %p99
      %p101 = scmp.ne.s32.totalorder %s93, %s95
      %p102 = scmp.eq.s32.totalorder %s27, 1
      %p103 = por %p101, %p102
      %p104 = scmp.ne.s32.totalorder %s95, %s96
      %p105 = scmp.eq.s32.totalorder %s27, 0
      %p106 = por %p104, %p105
      %p107 = scmp.ne.s32.totalorder %s95, %s96
      %p108 = scmp.eq.s32.totalorder %s28, 1
      %p109 = por %p107, %p108
      %p111 = scmp.ne.s32.totalorder %s96, %s110
      %p112 = scmp.eq.s32.totalorder %s28, 0
      %p113 = por %p111, %p112
      %s115 = sadd.s32 %s114, 1
      %p118 = scmp.eq.s32.totalorder %s22, 1
      %p119 = scmp.ne.s32.totalorder %s114, %s116
      %p120 = scmp.eq.s32.totalorder %s22, 0
      %p121 = por %p119, %p120
      %p122 = scmp.ne.s32.totalorder %s114, %s116
      %p123 = scmp.eq.s32.totalorder %s27, 1
      %p124 = por %p122, %p123
      %p125 = scmp.ne.s32.totalorder %s116, %s117
      %p126 = scmp.eq.s32.totalorder %s27, 0
      %p127 = por %p125, %p126
      %p128 = scmp.ne.s32.totalorder %s116, %s117
      %p129 = scmp.eq.s32.totalorder %s28, 1
      %p130 = por %p128, %p129
      %p132 = scmp.ne.s32.totalorder %s117, %s131
      %p133 = scmp.eq.s32.totalorder %s28, 0
      %p134 = por %p132, %p133
      %s136 = sadd.s32 %s135, 1
      %p139 = scmp.eq.s32.totalorder %s22, 1
      %p140 = scmp.ne.s32.totalorder %s135, %s137
      %p141 = scmp.eq.s32.totalorder %s22, 0
      %p142 = por %p140, %p141
      %p143 = scmp.ne.s32.totalorder %s135, %s137
      %p144 = scmp.eq.s32.totalorder %s27, 1
      %p145 = por %p143, %p144
      %p146 = scmp.ne.s32.totalorder %s137, %s138
      %p147 = scmp.eq.s32.totalorder %s27, 0
      %p148 = por %p146, %p147
      %p149 = scmp.ne.s32.totalorder %s137, %s138
      %p150 = scmp.eq.s32.totalorder %s28, 1
      %p151 = por %p149, %p150
      %p153 = scmp.ne.s32.totalorder %s138, %s152
      %p154 = scmp.eq.s32.totalorder %s28, 0
      %p155 = por %p153, %p154
      %s157 = sadd.s32 %s156, 1
      %p160 = scmp.eq.s32.totalorder %s22, 1
      %p161 = scmp.ne.s32.totalorder %s156, %s158
      %p162 = scmp.eq.s32.totalorder %s22, 0
      %p163 = por %p161, %p162
      %p164 = scmp.ne.s32.totalorder %s156, %s158
      %p165 = scmp.eq.s32.totalorder %s27, 1
      %p166 = por %p164, %p165
      %p167 = scmp.ne.s32.totalorder %s158, %s159
      %p168 = scmp.eq.s32.totalorder %s27, 0
      %p169 = por %p167, %p168
      %p170 = scmp.ne.s32.totalorder %s158, %s159
      %p171 = scmp.eq.s32.totalorder %s28, 1
      %p172 = por %p170, %p171
      %p174 = scmp.ne.s32.totalorder %s159, %s173
      %p175 = scmp.eq.s32.totalorder %s28, 0
      %p176 = por %p174, %p175
      %s178 = sadd.s32 %s177, 1
      %p181 = scmp.eq.s32.totalorder %s22, 1
      %p182 = scmp.ne.s32.totalorder %s177, %s179
      %p183 = scmp.eq.s32.totalorder %s22, 0
      %p184 = por %p182, %p183
      %p185 = scmp.ne.s32.totalorder %s177, %s179
      %p186 = scmp.eq.s32.totalorder %s27, 1
      %p187 = por %p185, %p186
      %p188 = scmp.ne.s32.totalorder %s179, %s180
      %p189 = scmp.eq.s32.totalorder %s27, 0
      %p190 = por %p188, %p189
      %p191 = scmp.ne.s32.totalorder %s179, %s180
      %p192 = scmp.eq.s32.totalorder %s28, 1
      %p193 = por %p191, %p192
      %p195 = scmp.ne.s32.totalorder %s180, %s194
      %p196 = scmp.eq.s32.totalorder %s28, 0
      %p197 = por %p195, %p196
      %s198 = ssub.s32 %s22, %s29
      %p199 = scmp.eq.s32.totalorder %s198, 0
      %s201 = sadd.s32 %s200, 1
      %s202 = scalar_select %p199, %s200, %s201
      %p205 = pneg %p199
      %p206 = scmp.eq.s32.totalorder %s22, 1
      %p207 = por %p205, %p206
      %p208 = scmp.ne.s32.totalorder %s200, %s203
      %p209 = scmp.eq.s32.totalorder %s22, 0
      %p210 = por %p208, %p209
      %p211 = scmp.ne.s32.totalorder %s200, %s203
      %p212 = scmp.eq.s32.totalorder %s27, 1
      %p213 = por %p211, %p212
      %p214 = scmp.ne.s32.totalorder %s203, %s204
      %p215 = scmp.eq.s32.totalorder %s27, 0
      %p216 = por %p214, %p215
      %p217 = scmp.ne.s32.totalorder %s203, %s204
      %p218 = scmp.eq.s32.totalorder %s28, 1
      %p219 = por %p217, %p218
      %p221 = scmp.ne.s32.totalorder %s204, %s220
      %p222 = scmp.eq.s32.totalorder %s28, 0
      %p223 = por %p221, %p222
      %s224 = ssub.s32 %s22, %s29
      %p225 = scmp.eq.s32.totalorder %s224, 0
      %s227 = sadd.s32 %s226, 1
      %s228 = scalar_select %p225, %s226, %s227
      %p231 = pneg %p225
      %p232 = scmp.eq.s32.totalorder %s22, 1
      %p233 = por %p231, %p232
      %p234 = scmp.ne.s32.totalorder %s226, %s229
      %p235 = scmp.eq.s32.totalorder %s22, 0
      %p236 = por %p234, %p235
      %p237 = scmp.ne.s32.totalorder %s226, %s229
      %p238 = scmp.eq.s32.totalorder %s27, 1
      %p239 = por %p237, %p238
      %p240 = scmp.ne.s32.totalorder %s229, %s230
      %p241 = scmp.eq.s32.totalorder %s27, 0
      %p242 = por %p240, %p241
      %p243 = scmp.ne.s32.totalorder %s229, %s230
      %p244 = scmp.eq.s32.totalorder %s28, 1
      %p245 = por %p243, %p244
      %p247 = scmp.ne.s32.totalorder %s230, %s246
      %p248 = scmp.eq.s32.totalorder %s28, 0
      %p249 = por %p247, %p248
      %s250 = ssub.s32 %s22, %s29
      %p251 = scmp.eq.s32.totalorder %s250, 0
      %s253 = sadd.s32 %s252, 1
      %s254 = scalar_select %p251, %s252, %s253
      %p257 = pneg %p251
      %p258 = scmp.eq.s32.totalorder %s22, 1
      %p259 = por %p257, %p258
      %p260 = scmp.ne.s32.totalorder %s252, %s255
      %p261 = scmp.eq.s32.totalorder %s22, 0
      %p262 = por %p260, %p261
      %p263 = scmp.ne.s32.totalorder %s252, %s255
      %p264 = scmp.eq.s32.totalorder %s27, 1
      %p265 = por %p263, %p264
      %p266 = scmp.ne.s32.totalorder %s255, %s256
      %p267 = scmp.eq.s32.totalorder %s27, 0
      %p268 = por %p266, %p267
      %p269 = scmp.ne.s32.totalorder %s255, %s256
      %p270 = scmp.eq.s32.totalorder %s28, 1
      %p271 = por %p269, %p270
      %p273 = scmp.ne.s32.totalorder %s256, %s272
      %p274 = scmp.eq.s32.totalorder %s28, 0
      %p275 = por %p273, %p274
      %s276 = ssub.s32 %s22, %s29
      %p277 = scmp.eq.s32.totalorder %s276, 0
      %s279 = sadd.s32 %s278, 1
      %s280 = scalar_select %p277, %s278, %s279
      %p283 = pneg %p277
      %p284 = scmp.eq.s32.totalorder %s22, 1
      %p285 = por %p283, %p284
      %p286 = scmp.ne.s32.totalorder %s278, %s281
      %p287 = scmp.eq.s32.totalorder %s22, 0
      %p288 = por %p286, %p287
      %p289 = scmp.ne.s32.totalorder %s278, %s281
      %p290 = scmp.eq.s32.totalorder %s27, 1
      %p291 = por %p289, %p290
      %p292 = scmp.ne.s32.totalorder %s281, %s282
      %p293 = scmp.eq.s32.totalorder %s27, 0
      %p294 = por %p292, %p293
      %p295 = scmp.ne.s32.totalorder %s281, %s282
      %p296 = scmp.eq.s32.totalorder %s28, 1
      %p297 = por %p295, %p296
      %p299 = scmp.ne.s32.totalorder %s282, %s298
      %p300 = scmp.eq.s32.totalorder %s28, 0
      %p301 = por %p299, %p300
      %s302 = ssub.s32 %s22, %s29
      %p303 = scmp.eq.s32.totalorder %s302, 0
      %s305 = sadd.s32 %s304, 1
      %s306 = scalar_select %p303, %s304, %s305
      %p309 = pneg %p303
      %p310 = scmp.eq.s32.totalorder %s22, 1
      %p311 = por %p309, %p310
      %p312 = scmp.ne.s32.totalorder %s304, %s307
      %p313 = scmp.eq.s32.totalorder %s22, 0
      %p314 = por %p312, %p313
      %p315 = scmp.ne.s32.totalorder %s304, %s307
      %p316 = scmp.eq.s32.totalorder %s27, 1
      %p317 = por %p315, %p316
      %p318 = scmp.ne.s32.totalorder %s307, %s308
      %p319 = scmp.eq.s32.totalorder %s27, 0
      %p320 = por %p318, %p319
      %p321 = scmp.ne.s32.totalorder %s307, %s308
      %p322 = scmp.eq.s32.totalorder %s28, 1
      %p323 = por %p321, %p322
      %p325 = scmp.ne.s32.totalorder %s308, %s324
      %p326 = scmp.eq.s32.totalorder %s28, 0
      %p327 = por %p325, %p326
      %s328 = ssub.s32 %s22, %s29
      %p329 = scmp.eq.s32.totalorder %s328, 0
      %s331 = sadd.s32 %s330, 1
      %s332 = scalar_select %p329, %s330, %s331
      %p335 = pneg %p329
      %p336 = scmp.eq.s32.totalorder %s22, 1
      %p337 = por %p335, %p336
      %p338 = scmp.ne.s32.totalorder %s330, %s333
      %p339 = scmp.eq.s32.totalorder %s22, 0
      %p340 = por %p338, %p339
      %p341 = scmp.ne.s32.totalorder %s330, %s333
      %p342 = scmp.eq.s32.totalorder %s27, 1
      %p343 = por %p341, %p342
      %p344 = scmp.ne.s32.totalorder %s333, %s334
      %p345 = scmp.eq.s32.totalorder %s27, 0
      %p346 = por %p344, %p345
      %p347 = scmp.ne.s32.totalorder %s333, %s334
      %p348 = scmp.eq.s32.totalorder %s28, 1
      %p349 = por %p347, %p348
      %p351 = scmp.ne.s32.totalorder %s334, %s350
      %p352 = scmp.eq.s32.totalorder %s28, 0
      %p353 = por %p351, %p352
      %s355 = sadd.s32 %s354, 1
      %p358 = scmp.eq.s32.totalorder %s22, 1
      %p359 = scmp.ne.s32.totalorder %s354, %s356
      %p360 = scmp.eq.s32.totalorder %s22, 0
      %p361 = por %p359, %p360
      %p362 = scmp.ne.s32.totalorder %s354, %s356
      %p363 = scmp.eq.s32.totalorder %s27, 1
      %p364 = por %p362, %p363
      %p365 = scmp.ne.s32.totalorder %s356, %s357
      %p366 = scmp.eq.s32.totalorder %s27, 0
      %p367 = por %p365, %p366
      %p368 = scmp.ne.s32.totalorder %s356, %s357
      %p369 = scmp.eq.s32.totalorder %s28, 1
      %p370 = por %p368, %p369
      %p372 = scmp.ne.s32.totalorder %s357, %s371
      %p373 = scmp.eq.s32.totalorder %s28, 0
      %p374 = por %p372, %p373
      %s376 = sadd.s32 %s375, 1
      %p379 = scmp.eq.s32.totalorder %s22, 1
      %p380 = scmp.ne.s32.totalorder %s375, %s377
      %p381 = scmp.eq.s32.totalorder %s22, 0
      %p382 = por %p380, %p381
      %p383 = scmp.ne.s32.totalorder %s375, %s377
      %p384 = scmp.eq.s32.totalorder %s27, 1
      %p385 = por %p383, %p384
      %p386 = scmp.ne.s32.totalorder %s377, %s378
      %p387 = scmp.eq.s32.totalorder %s27, 0
      %p388 = por %p386, %p387
      %p389 = scmp.ne.s32.totalorder %s377, %s378
      %p390 = scmp.eq.s32.totalorder %s28, 1
      %p391 = por %p389, %p390
      %p393 = scmp.ne.s32.totalorder %s378, %s392
      %p394 = scmp.eq.s32.totalorder %s28, 0
      %p395 = por %p393, %p394
      %p396 = scmp.le.s32.totalorder 1, %s22
      %p397 = scmp.lt.s32.totalorder %s22, 3
      %p398 = pnand %p396, %p397
      %p399 = pneg %p398
      // Predicated region
      $region9: #{granite_model_forward.1} parent=5 // pred_check
        _
      $region10: #{granite_model_forward.1} parent=5 // pred_check_branch
        %401 = sbr.rel (%p398) target = $region12
      $region11: #{granite_model_forward.1} parent=5 // pred_region
        %s402 = ssub.s32 %s22, 1
        // Predicated region
        $region13: #{granite_model_forward.1} parent=11 // pred_check
          %p403 = pneg %p43
        $region14: #{granite_model_forward.1} parent=11 // pred_check_branch
          %405 = sbr.rel (%p403) target = $region16
        $region15: #{granite_model_forward.1} parent=11 // pred_region
          _
        $region16: #{granite_model_forward.1} parent=11 // pred_fallthru
          _
        // Predicated region
        $region17: #{granite_model_forward.1} parent=11 // pred_check
          %p406 = pneg %p64
        $region18: #{granite_model_forward.1} parent=11 // pred_check_branch
          %408 = sbr.rel (%p406) target = $region20
        $region19: #{granite_model_forward.1} parent=11 // pred_region
          _
        $region20: #{granite_model_forward.1} parent=11 // pred_fallthru
          _
        // Predicated region
        $region21: #{granite_model_forward.1} parent=11 // pred_check
          %p409 = pneg %p85
        $region22: #{granite_model_forward.1} parent=11 // pred_check_branch
          %411 = sbr.rel (%p409) target = $region24
        $region23: #{granite_model_forward.1} parent=11 // pred_region
          _
        $region24: #{granite_model_forward.1} parent=11 // pred_fallthru
          _
        // Predicated region
        $region25: #{granite_model_forward.1} parent=11 // pred_check
          %p412 = pneg %p106
        $region26: #{granite_model_forward.1} parent=11 // pred_check_branch
          %414 = sbr.rel (%p412) target = $region28
        $region27: #{granite_model_forward.1} parent=11 // pred_region
          _
        $region28: #{granite_model_forward.1} parent=11 // pred_fallthru
          _
        // Predicated region
        $region29: #{granite_model_forward.1} parent=11 // pred_check
          %p415 = pneg %p127
        $region30: #{granite_model_forward.1} parent=11 // pred_check_branch
          %417 = sbr.rel (%p415) target = $region32
        $region31: #{granite_model_forward.1} parent=11 // pred_region
          _
        $region32: #{granite_model_forward.1} parent=11 // pred_fallthru
          _
        // Predicated region
        $region33: #{granite_model_forward.1} parent=11 // pred_check
          %p418 = pneg %p148
        $region34: #{granite_model_forward.1} parent=11 // pred_check_branch
          %420 = sbr.rel (%p418) target = $region36
        $region35: #{granite_model_forward.1} parent=11 // pred_region
          _
        $region36: #{granite_model_forward.1} parent=11 // pred_fallthru
          _
        // Predicated region
        $region37: #{granite_model_forward.1} parent=11 // pred_check
          %p421 = pneg %p169
        $region38: #{granite_model_forward.1} parent=11 // pred_check_branch
          %423 = sbr.rel (%p421) target = $region40
        $region39: #{granite_model_forward.1} parent=11 // pred_region
          _
        $region40: #{granite_model_forward.1} parent=11 // pred_fallthru
          _
        // Predicated region
        $region41: #{granite_model_forward.1} parent=11 // pred_check
          %p424 = pneg %p190
        $region42: #{granite_model_forward.1} parent=11 // pred_check_branch
          %426 = sbr.rel (%p424) target = $region44
        $region43: #{granite_model_forward.1} parent=11 // pred_region
          _
        $region44: #{granite_model_forward.1} parent=11 // pred_fallthru
          _
        // Predicated region
        $region45: #{granite_model_forward.1} parent=11 // pred_check
          %p427 = pneg %p367
        $region46: #{granite_model_forward.1} parent=11 // pred_check_branch
          %429 = sbr.rel (%p427) target = $region48
        $region47: #{granite_model_forward.1} parent=11 // pred_region
          _
        $region48: #{granite_model_forward.1} parent=11 // pred_fallthru
          _
      $region12: #{granite_model_forward.1} parent=5 // pred_fallthru
        _
      %p430 = scmp.lt.s32.totalorder %s22, 2
      // Predicated region
      $region49: #{granite_model_forward.1} parent=5 // pred_check
        %p431 = pneg %p430
      $region50: #{granite_model_forward.1} parent=5 // pred_check_branch
        %433 = sbr.rel (%p431) target = $region52
      $region51: #{granite_model_forward.1} parent=5 // pred_region
        // Predicated region
        $region53: #{granite_model_forward.1} parent=51 // pred_check
          %p434 = pneg %p210
        $region54: #{granite_model_forward.1} parent=51 // pred_check_branch
          %436 = sbr.rel (%p434) target = $region56
        $region55: #{granite_model_forward.1} parent=51 // pred_region
          %p437 = scmp.lt.s32.totalorder %s22, 1
          %s438 = scalar_select %p437, %s22, 1
          %s439 = scalar_lea.vmem %s8, %s438
        $region56: #{granite_model_forward.1} parent=51 // pred_fallthru
          _
        // Predicated region
        $region57: #{granite_model_forward.1} parent=51 // pred_check
          %p440 = pneg %p236
        $region58: #{granite_model_forward.1} parent=51 // pred_check_branch
          %442 = sbr.rel (%p440) target = $region60
        $region59: #{granite_model_forward.1} parent=51 // pred_region
          %p443 = scmp.lt.s32.totalorder %s22, 1
          %s444 = scalar_select %p443, %s22, 1
          %s445 = smul.addr %s444, 32
          %s446 = smul.addr %s445, 4
          %s447 = scalar_lea.vmem %s9, %s446
        $region60: #{granite_model_forward.1} parent=51 // pred_fallthru
          _
        // Predicated region
        $region61: #{granite_model_forward.1} parent=51 // pred_check
          %p448 = pneg %p262
        $region62: #{granite_model_forward.1} parent=51 // pred_check_branch
          %450 = sbr.rel (%p448) target = $region64
        $region63: #{granite_model_forward.1} parent=51 // pred_region
          %p451 = scmp.lt.s32.totalorder %s22, 1
          %s452 = scalar_select %p451, %s22, 1
          %s453 = smul.addr %s452, 16
          %s454 = smul.addr %s453, 4
          %s455 = scalar_lea.vmem %s10, %s454
        $region64: #{granite_model_forward.1} parent=51 // pred_fallthru
          _
        // Predicated region
        $region65: #{granite_model_forward.1} parent=51 // pred_check
          %p456 = pneg %p288
        $region66: #{granite_model_forward.1} parent=51 // pred_check_branch
          %458 = sbr.rel (%p456) target = $region68
        $region67: #{granite_model_forward.1} parent=51 // pred_region
          %p459 = scmp.lt.s32.totalorder %s22, 1
          %s460 = scalar_select %p459, %s22, 1
          %s461 = scalar_lea.vmem %s11, %s460
        $region68: #{granite_model_forward.1} parent=51 // pred_fallthru
          _
        // Predicated region
        $region69: #{granite_model_forward.1} parent=51 // pred_check
          %p462 = pneg %p314
        $region70: #{granite_model_forward.1} parent=51 // pred_check_branch
          %464 = sbr.rel (%p462) target = $region72
        $region71: #{granite_model_forward.1} parent=51 // pred_region
          %p465 = scmp.lt.s32.totalorder %s22, 1
          %s466 = scalar_select %p465, %s22, 1
          %s467 = smul.addr %s466, 64
          %s468 = smul.addr %s467, 4
          %s469 = scalar_lea.vmem %s12, %s468
        $region72: #{granite_model_forward.1} parent=51 // pred_fallthru
          _
        // Predicated region
        $region73: #{granite_model_forward.1} parent=51 // pred_check
          %p470 = pneg %p340
        $region74: #{granite_model_forward.1} parent=51 // pred_check_branch
          %472 = sbr.rel (%p470) target = $region76
        $region75: #{granite_model_forward.1} parent=51 // pred_region
          %p473 = scmp.lt.s32.totalorder %s22, 1
          %s474 = scalar_select %p473, %s22, 1
          %s475 = smul.addr %s474, 32
          %s476 = smul.addr %s475, 4
          %s477 = scalar_lea.vmem %s13, %s476
        $region76: #{granite_model_forward.1} parent=51 // pred_fallthru
          _
      $region52: #{granite_model_forward.1} parent=5 // pred_fallthru
        _
      %p478 = scmp.le.s32.totalorder 1, %s22
      %p479 = scmp.lt.s32.totalorder %s22, 3
      %p480 = pnand %p478, %p479
      %p481 = pneg %p480
      // Predicated region
      $region77: #{granite_model_forward.1} parent=5 // pred_check
        _
      $region78: #{granite_model_forward.1} parent=5 // pred_check_branch
        %483 = sbr.rel (%p480) target = $region80
      $region79: #{granite_model_forward.1} parent=5 // pred_region
        %s484 = ssub.s32 %s22, 1
        %p485 = pneg %p43
        %p486 = pneg %p40
        %p487 = pneg %p64
        %p488 = pneg %p61
        %p489 = pneg %p85
        %p490 = pneg %p82
        %p491 = pneg %p106
        %p492 = pneg %p103
        %p493 = pneg %p127
        %p494 = pneg %p124
        %p495 = pneg %p148
        %p496 = pneg %p145
        %p497 = pneg %p169
        %p498 = pneg %p166
        %p499 = pneg %p190
        %p500 = pneg %p187
        %p501 = scmp.lt.s32.totalorder %s27, 1
        %s502 = scalar_select %p501, %s27, 1
        %s503 = scalar_lea.vmem %s8, %s502
        %p504 = pneg %p216
        %p505 = pneg %p213
        %p506 = scmp.lt.s32.totalorder %s27, 1
        %s507 = scalar_select %p506, %s27, 1
        %s508 = smul.addr %s507, 32
        %s509 = smul.addr %s508, 4
        %s510 = scalar_lea.vmem %s9, %s509
        %p511 = pneg %p242
        %p512 = pneg %p239
        %p513 = scmp.lt.s32.totalorder %s27, 1
        %s514 = scalar_select %p513, %s27, 1
        %s515 = smul.addr %s514, 16
        %s516 = smul.addr %s515, 4
        %s517 = scalar_lea.vmem %s10, %s516
        %p518 = pneg %p268
        %p519 = pneg %p265
        %p520 = scmp.lt.s32.totalorder %s27, 1
        %s521 = scalar_select %p520, %s27, 1
        %s522 = scalar_lea.vmem %s11, %s521
        %p523 = pneg %p294
        %p524 = pneg %p291
        %p525 = scmp.lt.s32.totalorder %s27, 1
        %s526 = scalar_select %p525, %s27, 1
        %s527 = smul.addr %s526, 64
        %s528 = smul.addr %s527, 4
        %s529 = scalar_lea.vmem %s12, %s528
        %p530 = pneg %p320
        %p531 = pneg %p317
        %p532 = scmp.lt.s32.totalorder %s27, 1
        %s533 = scalar_select %p532, %s27, 1
        %s534 = smul.addr %s533, 32
        %s535 = smul.addr %s534, 4
        %s536 = scalar_lea.vmem %s13, %s535
        %p537 = pneg %p346
        %p538 = pneg %p343
        %p539 = pneg %p367
        %p540 = pneg %p364
        %p541 = pneg %p388
        %p542 = pneg %p385
        %p543 = scmp.lt.s32.totalorder %s27, 1
        %s544 = scalar_select %p543, %s27, 1
        %s545 = scalar_lea.vmem %s8, %s544
        %p546 = scmp.lt.s32.totalorder %s27, 1
        %s547 = scalar_select %p546, %s27, 1
        %s548 = smul.addr %s547, 32
        %s549 = smul.addr %s548, 4
        %s550 = scalar_lea.vmem %s9, %s549
        %p551 = scmp.lt.s32.totalorder %s27, 1
        %s552 = scalar_select %p551, %s27, 1
        %s553 = smul.addr %s552, 16
        %s554 = smul.addr %s553, 4
        %s555 = scalar_lea.vmem %s10, %s554
        %p556 = scmp.lt.s32.totalorder %s27, 1
        %s557 = scalar_select %p556, %s27, 1
        %s558 = scalar_lea.vmem %s11, %s557
        %p559 = scmp.lt.s32.totalorder %s27, 1
        %s560 = scalar_select %p559, %s27, 1
        %s561 = smul.addr %s560, 64
        %s562 = smul.addr %s561, 4
        %s563 = scalar_lea.vmem %s12, %s562
        %p564 = scmp.lt.s32.totalorder %s27, 1
        %s565 = scalar_select %p564, %s27, 1
        %s566 = smul.addr %s565, 32
        %s567 = smul.addr %s566, 4
        %s568 = scalar_lea.vmem %s13, %s567
        %p570 = scmp.eq.s32.totalorder %s27, 0
        // Predicated region
        $region81: #{granite_model_forward.1} parent=79 // pred_check
          %p571 = pneg %p570
        $region82: #{granite_model_forward.1} parent=79 // pred_check_branch
          %573 = sbr.rel (%p571) target = $region84
        $region83: #{granite_model_forward.1} parent=79 // pred_region
          %v574 = vld [vmem:[%s0] sm:$0xff]
          %v575 = vld [vmem:[%s0 + $0x8] sm:$0xff]
          %v576 = vld [vmem:[%s0 + $0x10] sm:$0xff]
          %v577 = vld [vmem:[%s0 + $0x18] sm:$0xff]
          %v578 = vld [vmem:[%s0 + $0x20] sm:$0xff]
          %v579 = vld [vmem:[%s0 + $0x28] sm:$0xff]
          %v580 = vld [vmem:[%s0 + $0x30] sm:$0xff]
          %v581 = vld [vmem:[%s0 + $0x38] sm:$0xff]
          %582 = vst [vmem:[#allocation2] sm:$0xff] %v574
          %583 = vst [vmem:[#allocation2 + $0x8] sm:$0xff] %v575
          %584 = vst [vmem:[#allocation2 + $0x10] sm:$0xff] %v576
          %585 = vst [vmem:[#allocation2 + $0x18] sm:$0xff] %v577
          %586 = vst [vmem:[#allocation2 + $0x20] sm:$0xff] %v578
          %587 = vst [vmem:[#allocation2 + $0x28] sm:$0xff] %v579
          %588 = vst [vmem:[#allocation2 + $0x30] sm:$0xff] %v580
          %589 = vst [vmem:[#allocation2 + $0x38] sm:$0xff] %v581
        $region84: #{granite_model_forward.1} parent=79 // pred_fallthru
          _
        %v590 = vld [vmem:[#allocation2] sm:$0xff]
        %v591 = vld [vmem:[#allocation2 + $0x8] sm:$0xff]
        %v592 = vld [vmem:[#allocation2 + $0x10] sm:$0xff]
        %v593 = vld [vmem:[#allocation2 + $0x18] sm:$0xff]
        %v594 = vld [vmem:[#allocation2 + $0x20] sm:$0xff]
        %v595 = vld [vmem:[#allocation2 + $0x28] sm:$0xff]
        %v596 = vld [vmem:[#allocation2 + $0x30] sm:$0xff]
        %v597 = vld [vmem:[#allocation2 + $0x38] sm:$0xff]
        %v598 = vld [vmem:[%s545] sm:$0x1]
        %v599 = vmul.f32 %v590, %v590
        %v600 = vmul.f32 %v591, %v591
        %v601 = vmul.f32 %v592, %v592
        %v602 = vmul.f32 %v593, %v593
        %v603 = vmul.f32 %v594, %v594
        %v604 = vmul.f32 %v595, %v595
        %v605 = vmul.f32 %v596, %v596
        %v606 = vmul.f32 %v597, %v597
        %607 = vadd.xlane.f32.xlu0 %v599
        %v608 = vpop.xlane.xlu0 %607
        %609 = vadd.xlane.f32.xlu0 %v600
        %v610 = vpop.xlane.xlu0 %609
        %611 = vadd.xlane.f32.xlu0 %v601
        %v612 = vpop.xlane.xlu0 %611
        %613 = vadd.xlane.f32.xlu0 %v602
        %v614 = vpop.xlane.xlu0 %613
        %615 = vadd.xlane.f32.xlu0 %v603
        %v616 = vpop.xlane.xlu0 %615
        %617 = vadd.xlane.f32.xlu0 %v604
        %v618 = vpop.xlane.xlu0 %617
        %619 = vadd.xlane.f32.xlu0 %v605
        %v620 = vpop.xlane.xlu0 %619
        %621 = vadd.xlane.f32.xlu0 %v606
        %v622 = vpop.xlane.xlu0 %621
        %v623 = vrcp.pop 128.0
        %v624 = vmul.f32 %v608, %v623
        %v625 = vmul.f32 %v610, %v623
        %v626 = vmul.f32 %v612, %v623
        %v627 = vmul.f32 %v614, %v623
        %v628 = vmul.f32 %v616, %v623
        %v629 = vmul.f32 %v618, %v623
        %v630 = vmul.f32 %v620, %v623
        %v631 = vmul.f32 %v622, %v623
        %v632 = vadd.f32 %v624, 1e-06
        %v633 = vadd.f32 %v625, 1e-06
        %v634 = vadd.f32 %v626, 1e-06
        %v635 = vadd.f32 %v627, 1e-06
        %v636 = vadd.f32 %v628, 1e-06
        %v637 = vadd.f32 %v629, 1e-06
        %v638 = vadd.f32 %v630, 1e-06
        %v639 = vadd.f32 %v631, 1e-06
        %v640 = vrsqrt.pop %v632
        %v641 = vrsqrt.pop %v633
        %v642 = vrsqrt.pop %v634
        %v643 = vrsqrt.pop %v635
        %v644 = vrsqrt.pop %v636
        %v645 = vrsqrt.pop %v637
        %v646 = vrsqrt.pop %v638
        %v647 = vrsqrt.pop %v639
        %v648 = vmul.f32 %v590, %v640
        %v649 = vmul.f32 %v591, %v641
        %v650 = vmul.f32 %v592, %v642
        %v651 = vmul.f32 %v593, %v643
        %v652 = vmul.f32 %v594, %v644
        %v653 = vmul.f32 %v595, %v645
        %v654 = vmul.f32 %v596, %v646
        %v655 = vmul.f32 %v597, %v647
        %v657 = vlaneseq
        %v658 = vshrl.u32 %v657, 7
        %v659 = vsub.s32 0, %v658
        %v660 = vrot.slane %v598, %v659
        %v662 = vmul.f32 %v648, %v660
        %v663 = vmul.f32 %v649, %v660
        %v664 = vmul.f32 %v650, %v660
        %v665 = vmul.f32 %v651, %v660
        %v666 = vmul.f32 %v652, %v660
        %v667 = vmul.f32 %v653, %v660
        %v668 = vmul.f32 %v654, %v660
        %v669 = vmul.f32 %v655, %v660
        %v670 = vpack.c.bf16 %v663, %v662
        %v671 = vpack.c.bf16 %v665, %v664
        %v672 = vpack.c.bf16 %v667, %v666
        %v673 = vpack.c.bf16 %v669, %v668
        %v674 = vld [vmem:[%s550] sm:$0xff]
        %v675 = vld [vmem:[%s550 + $0x8] sm:$0xff]
        %v676 = vld [vmem:[%s550 + $0x10] sm:$0xff]
        %v677 = vld [vmem:[%s550 + $0x18] sm:$0xff]
        %v678 = vld [vmem:[%s550 + $0x20] sm:$0xff]
        %v679 = vld [vmem:[%s550 + $0x28] sm:$0xff]
        %v680 = vld [vmem:[%s550 + $0x30] sm:$0xff]
        %v681 = vld [vmem:[%s550 + $0x38] sm:$0xff]
        %v682 = vld [vmem:[%s550 + $0x40] sm:$0xff]
        %v683 = vld [vmem:[%s550 + $0x48] sm:$0xff]
        %v684 = vld [vmem:[%s550 + $0x50] sm:$0xff]
        %v685 = vld [vmem:[%s550 + $0x58] sm:$0xff]
        %v686 = vld [vmem:[%s550 + $0x60] sm:$0xff]
        %v687 = vld [vmem:[%s550 + $0x68] sm:$0xff]
        %v688 = vld [vmem:[%s550 + $0x70] sm:$0xff]
        %v689 = vld [vmem:[%s550 + $0x78] sm:$0xff]
        %v706 = vunpack.c.l.b16 %v674
        %v707 = vunpack.c.h.b16 %v674
        %v708 = vunpack.c.l.b16 %v675
        %v709 = vunpack.c.h.b16 %v675
        %v710 = vunpack.c.l.b16 %v676
        %v711 = vunpack.c.h.b16 %v676
        %v712 = vunpack.c.l.b16 %v677
        %v713 = vunpack.c.h.b16 %v677
        %v714 = vunpack.c.l.b16 %v678
        %v715 = vunpack.c.h.b16 %v678
        %v716 = vunpack.c.l.b16 %v679
        %v717 = vunpack.c.h.b16 %v679
        %v718 = vunpack.c.l.b16 %v680
        %v719 = vunpack.c.h.b16 %v680
        %v720 = vunpack.c.l.b16 %v681
        %v721 = vunpack.c.h.b16 %v681
        %v722 = vunpack.c.l.b16 %v682
        %v723 = vunpack.c.h.b16 %v682
        %v724 = vunpack.c.l.b16 %v683
        %v725 = vunpack.c.h.b16 %v683
        %v726 = vunpack.c.l.b16 %v684
        %v727 = vunpack.c.h.b16 %v684
        %v728 = vunpack.c.l.b16 %v685
        %v729 = vunpack.c.h.b16 %v685
        %v730 = vunpack.c.l.b16 %v686
        %v731 = vunpack.c.h.b16 %v686
        %v732 = vunpack.c.l.b16 %v687
        %v733 = vunpack.c.h.b16 %v687
        %v734 = vunpack.c.l.b16 %v688
        %v735 = vunpack.c.h.b16 %v688
        %v736 = vunpack.c.l.b16 %v689
        %v737 = vunpack.c.h.b16 %v689
        %v738 = vpack.c.b16 %v708, %v706
        %v739 = vpack.c.b16 %v709, %v707
        %v740 = vpack.c.b16 %v712, %v710
        %v741 = vpack.c.b16 %v713, %v711
        %v742 = vpack.c.b16 %v716, %v714
        %v743 = vpack.c.b16 %v717, %v715
        %v744 = vpack.c.b16 %v720, %v718
        %v745 = vpack.c.b16 %v721, %v719
        %v746 = vpack.c.b16 %v724, %v722
        %v747 = vpack.c.b16 %v725, %v723
        %v748 = vpack.c.b16 %v728, %v726
        %v749 = vpack.c.b16 %v729, %v727
        %v750 = vpack.c.b16 %v732, %v730
        %v751 = vpack.c.b16 %v733, %v731
        %v752 = vpack.c.b16 %v736, %v734
        %v753 = vpack.c.b16 %v737, %v735
        %770 = vmatprep.subr.bf16.mxu0 %v753
        %771 = vmatpush1.bf16.msra.mxu0 %v752
        %772 = vmatprep.subr.bf16.mxu0 %v751
        %773 = vmatpush1.bf16.msra.mxu0 %v750
        %774 = vmatprep.subr.bf16.mxu0 %v749
        %775 = vmatpush1.bf16.msra.mxu0 %v748
        %776 = vmatprep.subr.bf16.mxu0 %v747
        %777 = vmatpush1.bf16.msra.mxu0 %v746
        %778 = vmatprep.subr.bf16.mxu0 %v745
        %779 = vmatpush1.bf16.msra.mxu0 %v744
        %780 = vmatprep.subr.bf16.mxu0 %v743
        %781 = vmatpush1.bf16.msra.mxu0 %v742
        %782 = vmatprep.subr.bf16.mxu0 %v741
        %783 = vmatpush1.bf16.msra.mxu0 %v740
        %784 = vmatprep.subr.bf16.mxu0 %v739
        %785 = vmatpush1.bf16.msra.mxu0 %v738
        %786 = vmatprep.subr.bf16.mxu0 0
        %787 = vmatpush2.bf16.msra.mxu0 0
        %788 = vmatprep.subr.bf16.mxu0 0
        %789 = vmatpush2.bf16.msra.mxu0 0
        %790 = vmatprep.subr.bf16.mxu0 0
        %791 = vmatpush2.bf16.msra.mxu0 0
        %792 = vmatprep.subr.bf16.mxu0 0
        %793 = vmatpush2.bf16.msra.mxu0 0
        %794 = vmatprep.subr.bf16.mxu0 0
        %795 = vmatpush2.bf16.msra.mxu0 0
        %796 = vmatprep.subr.bf16.mxu0 0
        %797 = vmatpush2.bf16.msra.mxu0 0
        %798 = vmatprep.subr.bf16.mxu0 0
        %799 = vmatpush2.bf16.msra.mxu0 0
        %800 = vmatprep.subr.bf16.mxu0 0
        %801 = vmatpush2.bf16.msra.mxu0 0
        %802 = vmatprep.mubr.bf16.mxu0 0
        %803 = vmatmul.mubr.bf16.gmra.mxu0 %v670
        %v804 = vpop.f32.mrf.mxu0
        %v805 = vadd.f32 0.0, %v804
        %v806 = vpop.f32.mrf.mxu0
        %v807 = vadd.f32 0.0, %v806
        %v808 = vpop.f32.mrf.mxu0
        %v809 = vadd.f32 0.0, %v808
        %v810 = vpop.f32.mrf.mxu0
        %v811 = vadd.f32 0.0, %v810
        %812 = vmatprep.mubr.bf16.mxu0 0
        %813 = vmatmul.mubr.bf16.gmra.mxu0 %v671
        %v814 = vpop.f32.mrf.mxu0
        %v815 = vadd.f32 0.0, %v814
        %v816 = vpop.f32.mrf.mxu0
        %v817 = vadd.f32 0.0, %v816
        %v818 = vpop.f32.mrf.mxu0
        %v819 = vadd.f32 0.0, %v818
        %v820 = vpop.f32.mrf.mxu0
        %v821 = vadd.f32 0.0, %v820
        %822 = vmatprep.mubr.bf16.mxu0 0
        %823 = vmatmul.mubr.bf16.gmra.mxu0 %v672
        %v824 = vpop.f32.mrf.mxu0
        %v825 = vadd.f32 0.0, %v824
        %v826 = vpop.f32.mrf.mxu0
        %v827 = vadd.f32 0.0, %v826
        %v828 = vpop.f32.mrf.mxu0
        %v829 = vadd.f32 0.0, %v828
        %v830 = vpop.f32.mrf.mxu0
        %v831 = vadd.f32 0.0, %v830
        %832 = vmatprep.mubr.bf16.mxu0 0
        %833 = vmatmul.mubr.bf16.gmra.mxu0 %v673
        %v834 = vpop.f32.mrf.mxu0
        %v835 = vadd.f32 0.0, %v834
        %v836 = vpop.f32.mrf.mxu0
        %v837 = vadd.f32 0.0, %v836
        %v838 = vpop.f32.mrf.mxu0
        %v839 = vadd.f32 0.0, %v838
        %v840 = vpop.f32.mrf.mxu0
        %v841 = vadd.f32 0.0, %v840
        %842 = vdwg.mxu0
        %v843 = vpack.c.bf16 %v809, %v805
        %v844 = vpack.c.bf16 %v819, %v815
        %v845 = vpack.c.bf16 %v829, %v825
        %v846 = vpack.c.bf16 %v839, %v835
        %v847 = vld [vmem:[%s5] sm:$0xf]
        %v848 = vld [vmem:[%s5 + $0x4] sm:$0xf]
        %v849 = vld [vmem:[%s5 + $0x8] sm:$0xf]
        %v850 = vld [vmem:[%s5 + $0xc] sm:$0xf]
        %v851 = vld [vmem:[%s5 + $0x10] sm:$0xf]
        %v852 = vld [vmem:[%s5 + $0x14] sm:$0xf]
        %v853 = vld [vmem:[%s5 + $0x18] sm:$0xf]
        %v854 = vld [vmem:[%s5 + $0x1c] sm:$0xf]
        %v855 = vld [vmem:[%s5 + $0x20] sm:$0xf]
        %v856 = vld [vmem:[%s5 + $0x24] sm:$0xf]
        %v857 = vld [vmem:[%s5 + $0x28] sm:$0xf]
        %v858 = vld [vmem:[%s5 + $0x2c] sm:$0xf]
        %v859 = vld [vmem:[%s5 + $0x30] sm:$0xf]
        %v860 = vld [vmem:[%s5 + $0x34] sm:$0xf]
        %v861 = vld [vmem:[%s5 + $0x38] sm:$0xf]
        %v862 = vld [vmem:[%s5 + $0x3c] sm:$0xf]
        %v879 = vunpack.c.l.b16 %v847
        %v880 = vunpack.c.l.b16 %v848
        %v881 = vunpack.c.l.b16 %v849
        %v882 = vunpack.c.l.b16 %v850
        %v883 = vunpack.c.l.b16 %v851
        %v884 = vunpack.c.l.b16 %v852
        %v885 = vunpack.c.l.b16 %v853
        %v886 = vunpack.c.l.b16 %v854
        %v887 = vunpack.c.l.b16 %v855
        %v888 = vunpack.c.l.b16 %v856
        %v889 = vunpack.c.l.b16 %v857
        %v890 = vunpack.c.l.b16 %v858
        %v891 = vunpack.c.l.b16 %v859
        %v892 = vunpack.c.l.b16 %v860
        %v893 = vunpack.c.l.b16 %v861
        %v894 = vunpack.c.l.b16 %v862
        %v895 = vpack.c.b16 %v880, %v879
        %v896 = vpack.c.b16 %v882, %v881
        %v897 = vpack.c.b16 %v884, %v883
        %v898 = vpack.c.b16 %v886, %v885
        %v899 = vpack.c.b16 %v888, %v887
        %v900 = vpack.c.b16 %v890, %v889
        %v901 = vpack.c.b16 %v892, %v891
        %v902 = vpack.c.b16 %v894, %v893
        %911 = vmatprep.subr.bf16.mxu0 0
        %912 = vmatpush1.bf16.msra.mxu0 %v902
        %913 = vmatprep.subr.bf16.mxu0 0
        %914 = vmatpush1.bf16.msra.mxu0 %v901
        %915 = vmatprep.subr.bf16.mxu0 0
        %916 = vmatpush1.bf16.msra.mxu0 %v900
        %917 = vmatprep.subr.bf16.mxu0 0
        %918 = vmatpush1.bf16.msra.mxu0 %v899
        %919 = vmatprep.subr.bf16.mxu0 0
        %920 = vmatpush1.bf16.msra.mxu0 %v898
        %921 = vmatprep.subr.bf16.mxu0 0
        %922 = vmatpush1.bf16.msra.mxu0 %v897
        %923 = vmatprep.subr.bf16.mxu0 0
        %924 = vmatpush1.bf16.msra.mxu0 %v896
        %925 = vmatprep.subr.bf16.mxu0 0
        %926 = vmatpush1.bf16.msra.mxu0 %v895
        %927 = vmatprep.subr.bf16.mxu0 0
        %928 = vmatpush2.bf16.msra.mxu0 0
        %929 = vmatprep.subr.bf16.mxu0 0
        %930 = vmatpush2.bf16.msra.mxu0 0
        %931 = vmatprep.subr.bf16.mxu0 0
        %932 = vmatpush2.bf16.msra.mxu0 0
        %933 = vmatprep.subr.bf16.mxu0 0
        %934 = vmatpush2.bf16.msra.mxu0 0
        %935 = vmatprep.subr.bf16.mxu0 0
        %936 = vmatpush2.bf16.msra.mxu0 0
        %937 = vmatprep.subr.bf16.mxu0 0
        %938 = vmatpush2.bf16.msra.mxu0 0
        %939 = vmatprep.subr.bf16.mxu0 0
        %940 = vmatpush2.bf16.msra.mxu0 0
        %941 = vmatprep.subr.bf16.mxu0 0
        %942 = vmatpush2.bf16.msra.mxu0 0
        %943 = vmatprep.mubr.bf16.mxu0 0
        %944 = vmatmul.mubr.bf16.gmra.mxu0 %v843
        %v945 = vpop.f32.mrf.mxu0
        %v946 = vadd.f32 0.0, %v945
        %v947 = vpop.f32.mrf.mxu0
        %v948 = vpop.f32.mrf.mxu0
        %v949 = vadd.f32 0.0, %v948
        %v950 = vpop.f32.mrf.mxu0
        %951 = vmatprep.mubr.bf16.mxu0 0
        %952 = vmatmul.mubr.bf16.gmra.mxu0 %v844
        %v953 = vpop.f32.mrf.mxu0
        %v954 = vadd.f32 0.0, %v953
        %v955 = vpop.f32.mrf.mxu0
        %v956 = vpop.f32.mrf.mxu0
        %v957 = vadd.f32 0.0, %v956
        %v958 = vpop.f32.mrf.mxu0
        %959 = vmatprep.mubr.bf16.mxu0 0
        %960 = vmatmul.mubr.bf16.gmra.mxu0 %v845
        %v961 = vpop.f32.mrf.mxu0
        %v962 = vadd.f32 0.0, %v961
        %v963 = vpop.f32.mrf.mxu0
        %v964 = vpop.f32.mrf.mxu0
        %v965 = vadd.f32 0.0, %v964
        %v966 = vpop.f32.mrf.mxu0
        %967 = vmatprep.mubr.bf16.mxu0 0
        %968 = vmatmul.mubr.bf16.gmra.mxu0 %v846
        %v969 = vpop.f32.mrf.mxu0
        %v970 = vadd.f32 0.0, %v969
        %v971 = vpop.f32.mrf.mxu0
        %v972 = vpop.f32.mrf.mxu0
        %v973 = vadd.f32 0.0, %v972
        %v974 = vpop.f32.mrf.mxu0
        %975 = vdwg.mxu0
        %v976 = vpack.c.bf16 %v811, %v807
        %v977 = vpack.c.bf16 %v821, %v817
        %v978 = vpack.c.bf16 %v831, %v827
        %v979 = vpack.c.bf16 %v841, %v837
        %v980 = vld [vmem:[%s6] sm:$0xf]
        %v981 = vld [vmem:[%s6 + $0x4] sm:$0xf]
        %v982 = vld [vmem:[%s6 + $0x8] sm:$0xf]
        %v983 = vld [vmem:[%s6 + $0xc] sm:$0xf]
        %v984 = vld [vmem:[%s6 + $0x10] sm:$0xf]
        %v985 = vld [vmem:[%s6 + $0x14] sm:$0xf]
        %v986 = vld [vmem:[%s6 + $0x18] sm:$0xf]
        %v987 = vld [vmem:[%s6 + $0x1c] sm:$0xf]
        %v996 = vunpack.c.l.b16 %v980
        %v997 = vunpack.c.l.b16 %v981
        %v998 = vunpack.c.l.b16 %v982
        %v999 = vunpack.c.l.b16 %v983
        %v1000 = vunpack.c.l.b16 %v984
        %v1001 = vunpack.c.l.b16 %v985
        %v1002 = vunpack.c.l.b16 %v986
        %v1003 = vunpack.c.l.b16 %v987
        %v1004 = vpack.c.b16 %v997, %v996
        %v1005 = vpack.c.b16 %v999, %v998
        %v1006 = vpack.c.b16 %v1001, %v1000
        %v1007 = vpack.c.b16 %v1003, %v1002
        %vm1012 = vcmask 523264
        %v1014 = vsel %vm1012, %v976, 0
        %v1017 = vsel %vm1012, %v977, 0
        %v1020 = vsel %vm1012, %v978, 0
        %v1023 = vsel %vm1012, %v979, 0
        %1025 = vmatprep.subr.bf16.mxu0 0
        %1026 = vmatpush1.bf16.msra.mxu0 0
        %1027 = vmatprep.subr.bf16.mxu0 0
        %1028 = vmatpush1.bf16.msra.mxu0 0
        %1029 = vmatprep.subr.bf16.mxu0 0
        %1030 = vmatpush1.bf16.msra.mxu0 0
        %1031 = vmatprep.subr.bf16.mxu0 0
        %1032 = vmatpush1.bf16.msra.mxu0 0
        %1033 = vmatprep.subr.bf16.mxu0 0
        %1034 = vmatpush1.bf16.msra.mxu0 %v1007
        %1035 = vmatprep.subr.bf16.mxu0 0
        %1036 = vmatpush1.bf16.msra.mxu0 %v1006
        %1037 = vmatprep.subr.bf16.mxu0 0
        %1038 = vmatpush1.bf16.msra.mxu0 %v1005
        %1039 = vmatprep.subr.bf16.mxu0 0
        %1040 = vmatpush1.bf16.msra.mxu0 %v1004
        %1041 = vmatprep.subr.bf16.mxu0 0
        %1042 = vmatpush2.bf16.msra.mxu0 0
        %1043 = vmatprep.subr.bf16.mxu0 0
        %1044 = vmatpush2.bf16.msra.mxu0 0
        %1045 = vmatprep.subr.bf16.mxu0 0
        %1046 = vmatpush2.bf16.msra.mxu0 0
        %1047 = vmatprep.subr.bf16.mxu0 0
        %1048 = vmatpush2.bf16.msra.mxu0 0
        %1049 = vmatprep.subr.bf16.mxu0 0
        %1050 = vmatpush2.bf16.msra.mxu0 0
        %1051 = vmatprep.subr.bf16.mxu0 0
        %1052 = vmatpush2.bf16.msra.mxu0 0
        %1053 = vmatprep.subr.bf16.mxu0 0
        %1054 = vmatpush2.bf16.msra.mxu0 0
        %1055 = vmatprep.subr.bf16.mxu0 0
        %1056 = vmatpush2.bf16.msra.mxu0 0
        %1057 = vmatprep.mubr.bf16.mxu0 0
        %1058 = vmatmul.mubr.bf16.gmra.mxu0 %v1014
        %v1059 = vpop.f32.mrf.mxu0
        %v1060 = vadd.f32 0.0, %v1059
        %v1061 = vpop.f32.mrf.mxu0
        %v1062 = vpop.f32.mrf.mxu0
        %v1063 = vadd.f32 0.0, %v1062
        %v1064 = vpop.f32.mrf.mxu0
        %1065 = vmatprep.mubr.bf16.mxu0 0
        %1066 = vmatmul.mubr.bf16.gmra.mxu0 %v1017
        %v1067 = vpop.f32.mrf.mxu0
        %v1068 = vadd.f32 0.0, %v1067
        %v1069 = vpop.f32.mrf.mxu0
        %v1070 = vpop.f32.mrf.mxu0
        %v1071 = vadd.f32 0.0, %v1070
        %v1072 = vpop.f32.mrf.mxu0
        %1073 = vmatprep.mubr.bf16.mxu0 0
        %1074 = vmatmul.mubr.bf16.gmra.mxu0 %v1020
        %v1075 = vpop.f32.mrf.mxu0
        %v1076 = vadd.f32 0.0, %v1075
        %v1077 = vpop.f32.mrf.mxu0
        %v1078 = vpop.f32.mrf.mxu0
        %v1079 = vadd.f32 0.0, %v1078
        %v1080 = vpop.f32.mrf.mxu0
        %1081 = vmatprep.mubr.bf16.mxu0 0
        %1082 = vmatmul.mubr.bf16.gmra.mxu0 %v1023
        %v1083 = vpop.f32.mrf.mxu0
        %v1084 = vadd.f32 0.0, %v1083
        %v1085 = vpop.f32.mrf.mxu0
        %v1086 = vpop.f32.mrf.mxu0
        %v1087 = vadd.f32 0.0, %v1086
        %v1088 = vpop.f32.mrf.mxu0
        %1089 = vdwg.mxu0
        %v1090 = vld [vmem:[%s1] sm:$0xff]
        %v1091 = vld [vmem:[%s1 + $0x8] sm:$0xff]
        %v1092 = vld [vmem:[%s1 + $0x10] sm:$0xff]
        %v1093 = vld [vmem:[%s1 + $0x18] sm:$0xff]
        %v1094 = vld [vmem:[%s1 + $0x20] sm:$0xff]
        %v1095 = vld [vmem:[%s1 + $0x28] sm:$0xff]
        %v1096 = vld [vmem:[%s1 + $0x30] sm:$0xff]
        %v1097 = vld [vmem:[%s1 + $0x38] sm:$0xff]
        %v1098 = vmul.f32 %v805, %v1090
        %v1099 = vmul.f32 %v809, %v1091
        %v1100 = vmul.f32 %v815, %v1092
        %v1101 = vmul.f32 %v819, %v1093
        %v1102 = vmul.f32 %v825, %v1094
        %v1103 = vmul.f32 %v829, %v1095
        %v1104 = vmul.f32 %v835, %v1096
        %v1105 = vmul.f32 %v839, %v1097
        %v1106 = vld [vmem:[%s2] sm:$0xff]
        %v1107 = vld [vmem:[%s2 + $0x8] sm:$0xff]
        %v1108 = vld [vmem:[%s2 + $0x10] sm:$0xff]
        %v1109 = vld [vmem:[%s2 + $0x18] sm:$0xff]
        %v1110 = vld [vmem:[%s2 + $0x20] sm:$0xff]
        %v1111 = vld [vmem:[%s2 + $0x28] sm:$0xff]
        %v1112 = vld [vmem:[%s2 + $0x30] sm:$0xff]
        %v1113 = vld [vmem:[%s2 + $0x38] sm:$0xff]
        %v1114 = vmul.f32 %v946, %v1106
        %v1115 = vmul.f32 %v949, %v1107
        %v1116 = vmul.f32 %v954, %v1108
        %v1117 = vmul.f32 %v957, %v1109
        %v1118 = vmul.f32 %v962, %v1110
        %v1119 = vmul.f32 %v965, %v1111
        %v1120 = vmul.f32 %v970, %v1112
        %v1121 = vmul.f32 %v973, %v1113
        %v1122 = vadd.f32 %v1098, %v1114
        %v1123 = vadd.f32 %v1099, %v1115
        %v1124 = vadd.f32 %v1100, %v1116
        %v1125 = vadd.f32 %v1101, %v1117
        %v1126 = vadd.f32 %v1102, %v1118
        %v1127 = vadd.f32 %v1103, %v1119
        %v1128 = vadd.f32 %v1104, %v1120
        %v1129 = vadd.f32 %v1105, %v1121
        %v1130 = vld [vmem:[%s3] sm:$0xff]
        %v1131 = vld [vmem:[%s3 + $0x8] sm:$0xff]
        %v1132 = vld [vmem:[%s3 + $0x10] sm:$0xff]
        %v1133 = vld [vmem:[%s3 + $0x18] sm:$0xff]
        %v1134 = vld [vmem:[%s3 + $0x20] sm:$0xff]
        %v1135 = vld [vmem:[%s3 + $0x28] sm:$0xff]
        %v1136 = vld [vmem:[%s3 + $0x30] sm:$0xff]
        %v1137 = vld [vmem:[%s3 + $0x38] sm:$0xff]
        %v1138 = vmul.f32 %v807, %v1130
        %v1139 = vmul.f32 %v811, %v1131
        %v1140 = vmul.f32 %v817, %v1132
        %v1141 = vmul.f32 %v821, %v1133
        %v1142 = vmul.f32 %v827, %v1134
        %v1143 = vmul.f32 %v831, %v1135
        %v1144 = vmul.f32 %v837, %v1136
        %v1145 = vmul.f32 %v841, %v1137
        %v1146 = vld [vmem:[%s4] sm:$0xff]
        %v1147 = vld [vmem:[%s4 + $0x8] sm:$0xff]
        %v1148 = vld [vmem:[%s4 + $0x10] sm:$0xff]
        %v1149 = vld [vmem:[%s4 + $0x18] sm:$0xff]
        %v1150 = vld [vmem:[%s4 + $0x20] sm:$0xff]
        %v1151 = vld [vmem:[%s4 + $0x28] sm:$0xff]
        %v1152 = vld [vmem:[%s4 + $0x30] sm:$0xff]
        %v1153 = vld [vmem:[%s4 + $0x38] sm:$0xff]
        %v1154 = vmul.f32 %v1060, %v1146
        %v1155 = vmul.f32 %v1063, %v1147
        %v1156 = vmul.f32 %v1068, %v1148
        %v1157 = vmul.f32 %v1071, %v1149
        %v1158 = vmul.f32 %v1076, %v1150
        %v1159 = vmul.f32 %v1079, %v1151
        %v1160 = vmul.f32 %v1084, %v1152
        %v1161 = vmul.f32 %v1087, %v1153
        %v1162 = vadd.f32 %v1138, %v1154
        %v1163 = vadd.f32 %v1139, %v1155
        %v1164 = vadd.f32 %v1140, %v1156
        %v1165 = vadd.f32 %v1141, %v1157
        %v1166 = vadd.f32 %v1142, %v1158
        %v1167 = vadd.f32 %v1143, %v1159
        %v1168 = vadd.f32 %v1144, %v1160
        %v1169 = vadd.f32 %v1145, %v1161
        %v1170 = vld [vmem:[%s7] sm:$0xff]
        %v1171 = vld [vmem:[%s7 + $0x8] sm:$0xff]
        %v1172 = vld [vmem:[%s7 + $0x10] sm:$0xff]
        %v1173 = vld [vmem:[%s7 + $0x18] sm:$0xff]
        %v1174 = vld [vmem:[%s7 + $0x20] sm:$0xff]
        %v1175 = vld [vmem:[%s7 + $0x28] sm:$0xff]
        %v1176 = vld [vmem:[%s7 + $0x30] sm:$0xff]
        %v1177 = vld [vmem:[%s7 + $0x38] sm:$0xff]
        %v1178 = vld [vmem:[%s555] sm:$0xf]
        %v1179 = vld [vmem:[%s555 + $0x4] sm:$0xf]
        %v1180 = vld [vmem:[%s555 + $0x8] sm:$0xf]
        %v1181 = vld [vmem:[%s555 + $0xc] sm:$0xf]
        %v1182 = vld [vmem:[%s555 + $0x10] sm:$0xf]
        %v1183 = vld [vmem:[%s555 + $0x14] sm:$0xf]
        %v1184 = vld [vmem:[%s555 + $0x18] sm:$0xf]
        %v1185 = vld [vmem:[%s555 + $0x1c] sm:$0xf]
        %v1186 = vld [vmem:[%s555 + $0x20] sm:$0xf]
        %v1187 = vld [vmem:[%s555 + $0x24] sm:$0xf]
        %v1188 = vld [vmem:[%s555 + $0x28] sm:$0xf]
        %v1189 = vld [vmem:[%s555 + $0x2c] sm:$0xf]
        %v1190 = vld [vmem:[%s555 + $0x30] sm:$0xf]
        %v1191 = vld [vmem:[%s555 + $0x34] sm:$0xf]
        %v1192 = vld [vmem:[%s555 + $0x38] sm:$0xf]
        %v1193 = vld [vmem:[%s555 + $0x3c] sm:$0xf]
        %v1194 = vpack.c.bf16 %v1123, %v1122
        %v1195 = vpack.c.bf16 %v1125, %v1124
        %v1196 = vpack.c.bf16 %v1127, %v1126
        %v1197 = vpack.c.bf16 %v1129, %v1128
        %v1198 = vpack.c.bf16 %v1163, %v1162
        %v1199 = vpack.c.bf16 %v1165, %v1164
        %v1200 = vpack.c.bf16 %v1167, %v1166
        %v1201 = vpack.c.bf16 %v1169, %v1168
        %vm1202 = vcmask 261120
        %v1204 = vsel %vm1202, %v1194, 0
        %v1207 = vsel %vm1202, %v1195, 0
        %v1210 = vsel %vm1202, %v1196, 0
        %v1213 = vsel %vm1202, %v1197, 0
        %v1216 = vsel %vm1202, %v1198, 0
        %v1219 = vsel %vm1202, %v1199, 0
        %v1222 = vsel %vm1202, %v1200, 0
        %v1225 = vsel %vm1202, %v1201, 0
        %1227 = vmatprep.subr.bf16.mxu0 0
        %1228 = vmatpush1.bf16.xpose.msra.mxu0 0
        %1229 = vmatprep.subr.bf16.mxu0 0
        %1230 = vmatpush1.bf16.xpose.msra.mxu0 0
        %1231 = vmatprep.subr.bf16.mxu0 0
        %1232 = vmatpush1.bf16.xpose.msra.mxu0 0
        %1233 = vmatprep.subr.bf16.mxu0 0
        %1234 = vmatpush1.bf16.xpose.msra.mxu0 0
        %1235 = vmatprep.subr.bf16.mxu0 0
        %1236 = vmatpush1.bf16.xpose.msra.mxu0 %v1225
        %1237 = vmatprep.subr.bf16.mxu0 0
        %1238 = vmatpush1.bf16.xpose.msra.mxu0 %v1222
        %1239 = vmatprep.subr.bf16.mxu0 0
        %1240 = vmatpush1.bf16.xpose.msra.mxu0 %v1219
        %1241 = vmatprep.subr.bf16.mxu0 0
        %1242 = vmatpush1.bf16.xpose.msra.mxu0 %v1216
        %1243 = vmatprep.subr.bf16.mxu0 0
        %1244 = vmatpush2.bf16.xpose.msra.mxu0 0
        %1245 = vmatprep.subr.bf16.mxu0 0
        %1246 = vmatpush2.bf16.xpose.msra.mxu0 0
        %1247 = vmatprep.subr.bf16.mxu0 0
        %1248 = vmatpush2.bf16.xpose.msra.mxu0 0
        %1249 = vmatprep.subr.bf16.mxu0 0
        %1250 = vmatpush2.bf16.xpose.msra.mxu0 0
        %1251 = vmatprep.subr.bf16.mxu0 0
        %1252 = vmatpush2.bf16.xpose.msra.mxu0 0
        %1253 = vmatprep.subr.bf16.mxu0 0
        %1254 = vmatpush2.bf16.xpose.msra.mxu0 0
        %1255 = vmatprep.subr.bf16.mxu0 0
        %1256 = vmatpush2.bf16.xpose.msra.mxu0 0
        %1257 = vmatprep.subr.bf16.mxu0 0
        %1258 = vmatpush2.bf16.xpose.msra.mxu0 0
        %1259 = vmatprep.mubr.bf16.mxu0 0
        %1260 = vmatmul.mubr.bf16.gmra.mxu0 %v1204
        %v1261 = vpop.f32.mrf.mxu0
        %v1262 = vadd.f32 0.0, %v1261
        %v1263 = vpop.f32.mrf.mxu0
        %v1264 = vpop.f32.mrf.mxu0
        %v1265 = vadd.f32 0.0, %v1264
        %v1266 = vpop.f32.mrf.mxu0
        %1267 = vmatprep.mubr.bf16.mxu0 0
        %1268 = vmatmul.mubr.bf16.gmra.mxu0 %v1207
        %v1269 = vpop.f32.mrf.mxu0
        %v1270 = vadd.f32 0.0, %v1269
        %v1271 = vpop.f32.mrf.mxu0
        %v1272 = vpop.f32.mrf.mxu0
        %v1273 = vadd.f32 0.0, %v1272
        %v1274 = vpop.f32.mrf.mxu0
        %1275 = vmatprep.mubr.bf16.mxu0 0
        %1276 = vmatmul.mubr.bf16.gmra.mxu0 %v1210
        %v1277 = vpop.f32.mrf.mxu0
        %v1278 = vadd.f32 0.0, %v1277
        %v1279 = vpop.f32.mrf.mxu0
        %v1280 = vpop.f32.mrf.mxu0
        %v1281 = vadd.f32 0.0, %v1280
        %v1282 = vpop.f32.mrf.mxu0
        %1283 = vmatprep.mubr.bf16.mxu0 0
        %1284 = vmatmul.mubr.bf16.gmra.mxu0 %v1213
        %v1285 = vpop.f32.mrf.mxu0
        %v1286 = vadd.f32 0.0, %v1285
        %v1287 = vpop.f32.mrf.mxu0
        %v1288 = vpop.f32.mrf.mxu0
        %v1289 = vadd.f32 0.0, %v1288
        %v1290 = vpop.f32.mrf.mxu0
        %1291 = vdwg.mxu0
        %v1292 = vmul.f32 %v1262, 0.0625
        %v1293 = vmul.f32 %v1265, 0.0625
        %v1294 = vmul.f32 %v1270, 0.0625
        %v1295 = vmul.f32 %v1273, 0.0625
        %v1296 = vmul.f32 %v1278, 0.0625
        %v1297 = vmul.f32 %v1281, 0.0625
        %v1298 = vmul.f32 %v1286, 0.0625
        %v1299 = vmul.f32 %v1289, 0.0625
        %v1300 = vadd.f32 %v1292, %v1170
        %v1301 = vadd.f32 %v1293, %v1171
        %v1302 = vadd.f32 %v1294, %v1172
        %v1303 = vadd.f32 %v1295, %v1173
        %v1304 = vadd.f32 %v1296, %v1174
        %v1305 = vadd.f32 %v1297, %v1175
        %v1306 = vadd.f32 %v1298, %v1176
        %v1307 = vadd.f32 %v1299, %v1177
        %v1308 = vsel %vm1012, %v1300, -inf
        %1309 = vmax.xlane.f32.xlu0 %v1308
        %v1310 = vpop.xlane.xlu0 %1309
        %v1311 = vsel %vm1012, %v1301, -inf
        %1312 = vmax.xlane.f32.xlu0 %v1311
        %v1313 = vpop.xlane.xlu0 %1312
        %v1314 = vsel %vm1012, %v1302, -inf
        %1315 = vmax.xlane.f32.xlu0 %v1314
        %v1316 = vpop.xlane.xlu0 %1315
        %v1317 = vsel %vm1012, %v1303, -inf
        %1318 = vmax.xlane.f32.xlu0 %v1317
        %v1319 = vpop.xlane.xlu0 %1318
        %v1320 = vsel %vm1012, %v1304, -inf
        %1321 = vmax.xlane.f32.xlu0 %v1320
        %v1322 = vpop.xlane.xlu0 %1321
        %v1323 = vsel %vm1012, %v1305, -inf
        %1324 = vmax.xlane.f32.xlu0 %v1323
        %v1325 = vpop.xlane.xlu0 %1324
        %v1326 = vsel %vm1012, %v1306, -inf
        %1327 = vmax.xlane.f32.xlu0 %v1326
        %v1328 = vpop.xlane.xlu0 %1327
        %v1329 = vsel %vm1012, %v1307, -inf
        %1330 = vmax.xlane.f32.xlu0 %v1329
        %v1331 = vpop.xlane.xlu0 %1330
        %v1332 = vsub.f32 %v1300, %v1310
        %v1333 = vsub.f32 %v1301, %v1313
        %v1334 = vsub.f32 %v1302, %v1316
        %v1335 = vsub.f32 %v1303, %v1319
        %v1336 = vsub.f32 %v1304, %v1322
        %v1337 = vsub.f32 %v1305, %v1325
        %v1338 = vsub.f32 %v1306, %v1328
        %v1339 = vsub.f32 %v1307, %v1331
        %v1340 = vmul.f32 %v1332, 1.442695
        %v1341 = vpow.pop %v1340
        %v1342 = vmul.f32 %v1333, 1.442695
        %v1343 = vpow.pop %v1342
        %v1344 = vmul.f32 %v1334, 1.442695
        %v1345 = vpow.pop %v1344
        %v1346 = vmul.f32 %v1335, 1.442695
        %v1347 = vpow.pop %v1346
        %v1348 = vmul.f32 %v1336, 1.442695
        %v1349 = vpow.pop %v1348
        %v1350 = vmul.f32 %v1337, 1.442695
        %v1351 = vpow.pop %v1350
        %v1352 = vmul.f32 %v1338, 1.442695
        %v1353 = vpow.pop %v1352
        %v1354 = vmul.f32 %v1339, 1.442695
        %v1355 = vpow.pop %v1354
        %v1356 = vsel %vm1012, %v1341, 0.0
        %1357 = vadd.xlane.f32.xlu0 %v1356
        %v1358 = vpop.xlane.xlu0 %1357
        %v1359 = vsel %vm1012, %v1343, 0.0
        %1360 = vadd.xlane.f32.xlu0 %v1359
        %v1361 = vpop.xlane.xlu0 %1360
        %v1362 = vsel %vm1012, %v1345, 0.0
        %1363 = vadd.xlane.f32.xlu0 %v1362
        %v1364 = vpop.xlane.xlu0 %1363
        %v1365 = vsel %vm1012, %v1347, 0.0
        %1366 = vadd.xlane.f32.xlu0 %v1365
        %v1367 = vpop.xlane.xlu0 %1366
        %v1368 = vsel %vm1012, %v1349, 0.0
        %1369 = vadd.xlane.f32.xlu0 %v1368
        %v1370 = vpop.xlane.xlu0 %1369
        %v1371 = vsel %vm1012, %v1351, 0.0
        %1372 = vadd.xlane.f32.xlu0 %v1371
        %v1373 = vpop.xlane.xlu0 %1372
        %v1374 = vsel %vm1012, %v1353, 0.0
        %1375 = vadd.xlane.f32.xlu0 %v1374
        %v1376 = vpop.xlane.xlu0 %1375
        %v1377 = vsel %vm1012, %v1355, 0.0
        %1378 = vadd.xlane.f32.xlu0 %v1377
        %v1379 = vpop.xlane.xlu0 %1378
        %v1380 = vpack.c.bf16 %v1343, %v1341
        %v1381 = vpack.c.bf16 %v1347, %v1345
        %v1382 = vpack.c.bf16 %v1351, %v1349
        %v1383 = vpack.c.bf16 %v1355, %v1353
        %1388 = vrot.lane.b32.xlu0 %v976, 64
        %v1389 = vpop.permute.xlu0 %1388
        %1390 = vrot.lane.b32.xlu0 %v977, 64
        %v1391 = vpop.permute.xlu0 %1390
        %1392 = vrot.lane.b32.xlu0 %v978, 64
        %v1393 = vpop.permute.xlu0 %1392
        %1394 = vrot.lane.b32.xlu0 %v979, 64
        %v1395 = vpop.permute.xlu0 %1394
        %v1401 = vsel %vm1012, %v1380, 0
        %v1404 = vsel %vm1012, %v1381, 0
        %v1407 = vsel %vm1012, %v1382, 0
        %v1410 = vsel %vm1012, %v1383, 0
        %1412 = vmatprep.subr.bf16.mxu0 0
        %1413 = vmatpush1.bf16.msra.mxu0 0
        %1414 = vmatprep.subr.bf16.mxu0 0
        %1415 = vmatpush1.bf16.msra.mxu0 0
        %1416 = vmatprep.subr.bf16.mxu0 0
        %1417 = vmatpush1.bf16.msra.mxu0 0
        %1418 = vmatprep.subr.bf16.mxu0 0
        %1419 = vmatpush1.bf16.msra.mxu0 0
        %1420 = vmatprep.subr.bf16.mxu0 0
        %1421 = vmatpush1.bf16.msra.mxu0 %v1395
        %1422 = vmatprep.subr.bf16.mxu0 0
        %1423 = vmatpush1.bf16.msra.mxu0 %v1393
        %1424 = vmatprep.subr.bf16.mxu0 0
        %1425 = vmatpush1.bf16.msra.mxu0 %v1391
        %1426 = vmatprep.subr.bf16.mxu0 0
        %1427 = vmatpush1.bf16.msra.mxu0 %v1389
        %1428 = vmatprep.subr.bf16.mxu0 0
        %1429 = vmatpush2.bf16.msra.mxu0 0
        %1430 = vmatprep.subr.bf16.mxu0 0
        %1431 = vmatpush2.bf16.msra.mxu0 0
        %1432 = vmatprep.subr.bf16.mxu0 0
        %1433 = vmatpush2.bf16.msra.mxu0 0
        %1434 = vmatprep.subr.bf16.mxu0 0
        %1435 = vmatpush2.bf16.msra.mxu0 0
        %1436 = vmatprep.subr.bf16.mxu0 0
        %1437 = vmatpush2.bf16.msra.mxu0 0
        %1438 = vmatprep.subr.bf16.mxu0 0
        %1439 = vmatpush2.bf16.msra.mxu0 0
        %1440 = vmatprep.subr.bf16.mxu0 0
        %1441 = vmatpush2.bf16.msra.mxu0 0
        %1442 = vmatprep.subr.bf16.mxu0 0
        %1443 = vmatpush2.bf16.msra.mxu0 0
        %1444 = vmatprep.mubr.bf16.mxu0 0
        %1445 = vmatmul.mubr.bf16.gmra.mxu0 %v1401
        %v1446 = vpop.f32.mrf.mxu0
        %v1447 = vadd.f32 0.0, %v1446
        %v1448 = vpop.f32.mrf.mxu0
        %v1449 = vpop.f32.mrf.mxu0
        %v1450 = vadd.f32 0.0, %v1449
        %v1451 = vpop.f32.mrf.mxu0
        %1452 = vmatprep.mubr.bf16.mxu0 0
        %1453 = vmatmul.mubr.bf16.gmra.mxu0 %v1404
        %v1454 = vpop.f32.mrf.mxu0
        %v1455 = vadd.f32 0.0, %v1454
        %v1456 = vpop.f32.mrf.mxu0
        %v1457 = vpop.f32.mrf.mxu0
        %v1458 = vadd.f32 0.0, %v1457
        %v1459 = vpop.f32.mrf.mxu0
        %1460 = vmatprep.mubr.bf16.mxu0 0
        %1461 = vmatmul.mubr.bf16.gmra.mxu0 %v1407
        %v1462 = vpop.f32.mrf.mxu0
        %v1463 = vadd.f32 0.0, %v1462
        %v1464 = vpop.f32.mrf.mxu0
        %v1465 = vpop.f32.mrf.mxu0
        %v1466 = vadd.f32 0.0, %v1465
        %v1467 = vpop.f32.mrf.mxu0
        %1468 = vmatprep.mubr.bf16.mxu0 0
        %1469 = vmatmul.mubr.bf16.gmra.mxu0 %v1410
        %v1470 = vpop.f32.mrf.mxu0
        %v1471 = vadd.f32 0.0, %v1470
        %v1472 = vpop.f32.mrf.mxu0
        %v1473 = vpop.f32.mrf.mxu0
        %v1474 = vadd.f32 0.0, %v1473
        %v1475 = vpop.f32.mrf.mxu0
        %1476 = vdwg.mxu0
        %v1477 = vrcp.pop %v1358
        %v1478 = vrcp.pop %v1361
        %v1479 = vrcp.pop %v1364
        %v1480 = vrcp.pop %v1367
        %v1481 = vrcp.pop %v1370
        %v1482 = vrcp.pop %v1373
        %v1483 = vrcp.pop %v1376
        %v1484 = vrcp.pop %v1379
        %v1485 = vmul.f32 %v1447, %v1477
        %v1486 = vmul.f32 %v1450, %v1478
        %v1487 = vmul.f32 %v1455, %v1479
        %v1488 = vmul.f32 %v1458, %v1480
        %v1489 = vmul.f32 %v1463, %v1481
        %v1490 = vmul.f32 %v1466, %v1482
        %v1491 = vmul.f32 %v1471, %v1483
        %v1492 = vmul.f32 %v1474, %v1484
        %v1493 = vpack.c.bf16 %v1486, %v1485
        %v1494 = vpack.c.bf16 %v1488, %v1487
        %v1495 = vpack.c.bf16 %v1490, %v1489
        %v1496 = vpack.c.bf16 %v1492, %v1491
        %1501 = vrot.lane.b32.xlu0 %v1194, 96
        %v1502 = vpop.permute.xlu0 %1501
        %1503 = vrot.lane.b32.xlu0 %v1195, 96
        %v1504 = vpop.permute.xlu0 %1503
        %1505 = vrot.lane.b32.xlu0 %v1196, 96
        %v1506 = vpop.permute.xlu0 %1505
        %1507 = vrot.lane.b32.xlu0 %v1197, 96
        %v1508 = vpop.permute.xlu0 %1507
        %v1510 = vsel %vm1202, %v1502, 0
        %v1513 = vsel %vm1202, %v1504, 0
        %v1516 = vsel %vm1202, %v1506, 0
        %v1519 = vsel %vm1202, %v1508, 0
        %1521 = vmatprep.subr.bf16.mxu0 0
        %1522 = vmatpush1.bf16.xpose.msra.mxu0 0
        %1523 = vmatprep.subr.bf16.mxu0 0
        %1524 = vmatpush1.bf16.xpose.msra.mxu0 0
        %1525 = vmatprep.subr.bf16.mxu0 0
        %1526 = vmatpush1.bf16.xpose.msra.mxu0 0
        %1527 = vmatprep.subr.bf16.mxu0 0
        %1528 = vmatpush1.bf16.xpose.msra.mxu0 0
        %1529 = vmatprep.subr.bf16.mxu0 0
        %1530 = vmatpush1.bf16.xpose.msra.mxu0 %v1225
        %1531 = vmatprep.subr.bf16.mxu0 0
        %1532 = vmatpush1.bf16.xpose.msra.mxu0 %v1222
        %1533 = vmatprep.subr.bf16.mxu0 0
        %1534 = vmatpush1.bf16.xpose.msra.mxu0 %v1219
        %1535 = vmatprep.subr.bf16.mxu0 0
        %1536 = vmatpush1.bf16.xpose.msra.mxu0 %v1216
        %1537 = vmatprep.subr.bf16.mxu0 0
        %1538 = vmatpush2.bf16.xpose.msra.mxu0 0
        %1539 = vmatprep.subr.bf16.mxu0 0
        %1540 = vmatpush2.bf16.xpose.msra.mxu0 0
        %1541 = vmatprep.subr.bf16.mxu0 0
        %1542 = vmatpush2.bf16.xpose.msra.mxu0 0
        %1543 = vmatprep.subr.bf16.mxu0 0
        %1544 = vmatpush2.bf16.xpose.msra.mxu0 0
        %1545 = vmatprep.subr.bf16.mxu0 0
        %1546 = vmatpush2.bf16.xpose.msra.mxu0 0
        %1547 = vmatprep.subr.bf16.mxu0 0
        %1548 = vmatpush2.bf16.xpose.msra.mxu0 0
        %1549 = vmatprep.subr.bf16.mxu0 0
        %1550 = vmatpush2.bf16.xpose.msra.mxu0 0
        %1551 = vmatprep.subr.bf16.mxu0 0
        %1552 = vmatpush2.bf16.xpose.msra.mxu0 0
        %1553 = vmatprep.mubr.bf16.mxu0 0
        %1554 = vmatmul.mubr.bf16.gmra.mxu0 %v1510
        %v1555 = vpop.f32.mrf.mxu0
        %v1556 = vadd.f32 0.0, %v1555
        %v1557 = vpop.f32.mrf.mxu0
        %v1558 = vpop.f32.mrf.mxu0
        %v1559 = vadd.f32 0.0, %v1558
        %v1560 = vpop.f32.mrf.mxu0
        %1561 = vmatprep.mubr.bf16.mxu0 0
        %1562 = vmatmul.mubr.bf16.gmra.mxu0 %v1513
        %v1563 = vpop.f32.mrf.mxu0
        %v1564 = vadd.f32 0.0, %v1563
        %v1565 = vpop.f32.mrf.mxu0
        %v1566 = vpop.f32.mrf.mxu0
        %v1567 = vadd.f32 0.0, %v1566
        %v1568 = vpop.f32.mrf.mxu0
        %1569 = vmatprep.mubr.bf16.mxu0 0
        %1570 = vmatmul.mubr.bf16.gmra.mxu0 %v1516
        %v1571 = vpop.f32.mrf.mxu0
        %v1572 = vadd.f32 0.0, %v1571
        %v1573 = vpop.f32.mrf.mxu0
        %v1574 = vpop.f32.mrf.mxu0
        %v1575 = vadd.f32 0.0, %v1574
        %v1576 = vpop.f32.mrf.mxu0
        %1577 = vmatprep.mubr.bf16.mxu0 0
        %1578 = vmatmul.mubr.bf16.gmra.mxu0 %v1519
        %v1579 = vpop.f32.mrf.mxu0
        %v1580 = vadd.f32 0.0, %v1579
        %v1581 = vpop.f32.mrf.mxu0
        %v1582 = vpop.f32.mrf.mxu0
        %v1583 = vadd.f32 0.0, %v1582
        %v1584 = vpop.f32.mrf.mxu0
        %1585 = vdwg.mxu0
        %v1586 = vmul.f32 %v1556, 0.0625
        %v1587 = vmul.f32 %v1559, 0.0625
        %v1588 = vmul.f32 %v1564, 0.0625
        %v1589 = vmul.f32 %v1567, 0.0625
        %v1590 = vmul.f32 %v1572, 0.0625
        %v1591 = vmul.f32 %v1575, 0.0625
        %v1592 = vmul.f32 %v1580, 0.0625
        %v1593 = vmul.f32 %v1583, 0.0625
        %v1594 = vadd.f32 %v1586, %v1170
        %v1595 = vadd.f32 %v1587, %v1171
        %v1596 = vadd.f32 %v1588, %v1172
        %v1597 = vadd.f32 %v1589, %v1173
        %v1598 = vadd.f32 %v1590, %v1174
        %v1599 = vadd.f32 %v1591, %v1175
        %v1600 = vadd.f32 %v1592, %v1176
        %v1601 = vadd.f32 %v1593, %v1177
        %v1602 = vsel %vm1012, %v1594, -inf
        %1603 = vmax.xlane.f32.xlu0 %v1602
        %v1604 = vpop.xlane.xlu0 %1603
        %v1605 = vsel %vm1012, %v1595, -inf
        %1606 = vmax.xlane.f32.xlu0 %v1605
        %v1607 = vpop.xlane.xlu0 %1606
        %v1608 = vsel %vm1012, %v1596, -inf
        %1609 = vmax.xlane.f32.xlu0 %v1608
        %v1610 = vpop.xlane.xlu0 %1609
        %v1611 = vsel %vm1012, %v1597, -inf
        %1612 = vmax.xlane.f32.xlu0 %v1611
        %v1613 = vpop.xlane.xlu0 %1612
        %v1614 = vsel %vm1012, %v1598, -inf
        %1615 = vmax.xlane.f32.xlu0 %v1614
        %v1616 = vpop.xlane.xlu0 %1615
        %v1617 = vsel %vm1012, %v1599, -inf
        %1618 = vmax.xlane.f32.xlu0 %v1617
        %v1619 = vpop.xlane.xlu0 %1618
        %v1620 = vsel %vm1012, %v1600, -inf
        %1621 = vmax.xlane.f32.xlu0 %v1620
        %v1622 = vpop.xlane.xlu0 %1621
        %v1623 = vsel %vm1012, %v1601, -inf
        %1624 = vmax.xlane.f32.xlu0 %v1623
        %v1625 = vpop.xlane.xlu0 %1624
        %v1626 = vsub.f32 %v1594, %v1604
        %v1627 = vsub.f32 %v1595, %v1607
        %v1628 = vsub.f32 %v1596, %v1610
        %v1629 = vsub.f32 %v1597, %v1613
        %v1630 = vsub.f32 %v1598, %v1616
        %v1631 = vsub.f32 %v1599, %v1619
        %v1632 = vsub.f32 %v1600, %v1622
        %v1633 = vsub.f32 %v1601, %v1625
        %v1634 = vmul.f32 %v1626, 1.442695
        %v1635 = vpow.pop %v1634
        %v1636 = vmul.f32 %v1627, 1.442695
        %v1637 = vpow.pop %v1636
        %v1638 = vmul.f32 %v1628, 1.442695
        %v1639 = vpow.pop %v1638
        %v1640 = vmul.f32 %v1629, 1.442695
        %v1641 = vpow.pop %v1640
        %v1642 = vmul.f32 %v1630, 1.442695
        %v1643 = vpow.pop %v1642
        %v1644 = vmul.f32 %v1631, 1.442695
        %v1645 = vpow.pop %v1644
        %v1646 = vmul.f32 %v1632, 1.442695
        %v1647 = vpow.pop %v1646
        %v1648 = vmul.f32 %v1633, 1.442695
        %v1649 = vpow.pop %v1648
        %v1650 = vsel %vm1012, %v1635, 0.0
        %1651 = vadd.xlane.f32.xlu0 %v1650
        %v1652 = vpop.xlane.xlu0 %1651
        %v1653 = vsel %vm1012, %v1637, 0.0
        %1654 = vadd.xlane.f32.xlu0 %v1653
        %v1655 = vpop.xlane.xlu0 %1654
        %v1656 = vsel %vm1012, %v1639, 0.0
        %1657 = vadd.xlane.f32.xlu0 %v1656
        %v1658 = vpop.xlane.xlu0 %1657
        %v1659 = vsel %vm1012, %v1641, 0.0
        %1660 = vadd.xlane.f32.xlu0 %v1659
        %v1661 = vpop.xlane.xlu0 %1660
        %v1662 = vsel %vm1012, %v1643, 0.0
        %1663 = vadd.xlane.f32.xlu0 %v1662
        %v1664 = vpop.xlane.xlu0 %1663
        %v1665 = vsel %vm1012, %v1645, 0.0
        %1666 = vadd.xlane.f32.xlu0 %v1665
        %v1667 = vpop.xlane.xlu0 %1666
        %v1668 = vsel %vm1012, %v1647, 0.0
        %1669 = vadd.xlane.f32.xlu0 %v1668
        %v1670 = vpop.xlane.xlu0 %1669
        %v1671 = vsel %vm1012, %v1649, 0.0
        %1672 = vadd.xlane.f32.xlu0 %v1671
        %v1673 = vpop.xlane.xlu0 %1672
        %v1674 = vpack.c.bf16 %v1637, %v1635
        %v1675 = vpack.c.bf16 %v1641, %v1639
        %v1676 = vpack.c.bf16 %v1645, %v1643
        %v1677 = vpack.c.bf16 %v1649, %v1647
        %v1679 = vsel %vm1012, %v1674, 0
        %v1682 = vsel %vm1012, %v1675, 0
        %v1685 = vsel %vm1012, %v1676, 0
        %v1688 = vsel %vm1012, %v1677, 0
        %1690 = vmatprep.subr.bf16.mxu0 0
        %1691 = vmatpush1.bf16.msra.mxu0 0
        %1692 = vmatprep.subr.bf16.mxu0 0
        %1693 = vmatpush1.bf16.msra.mxu0 0
        %1694 = vmatprep.subr.bf16.mxu0 0
        %1695 = vmatpush1.bf16.msra.mxu0 0
        %1696 = vmatprep.subr.bf16.mxu0 0
        %1697 = vmatpush1.bf16.msra.mxu0 0
        %1698 = vmatprep.subr.bf16.mxu0 0
        %1699 = vmatpush1.bf16.msra.mxu0 %v1395
        %1700 = vmatprep.subr.bf16.mxu0 0
        %1701 = vmatpush1.bf16.msra.mxu0 %v1393
        %1702 = vmatprep.subr.bf16.mxu0 0
        %1703 = vmatpush1.bf16.msra.mxu0 %v1391
        %1704 = vmatprep.subr.bf16.mxu0 0
        %1705 = vmatpush1.bf16.msra.mxu0 %v1389
        %1706 = vmatprep.subr.bf16.mxu0 0
        %1707 = vmatpush2.bf16.msra.mxu0 0
        %1708 = vmatprep.subr.bf16.mxu0 0
        %1709 = vmatpush2.bf16.msra.mxu0 0
        %1710 = vmatprep.subr.bf16.mxu0 0
        %1711 = vmatpush2.bf16.msra.mxu0 0
        %1712 = vmatprep.subr.bf16.mxu0 0
        %1713 = vmatpush2.bf16.msra.mxu0 0
        %1714 = vmatprep.subr.bf16.mxu0 0
        %1715 = vmatpush2.bf16.msra.mxu0 0
        %1716 = vmatprep.subr.bf16.mxu0 0
        %1717 = vmatpush2.bf16.msra.mxu0 0
        %1718 = vmatprep.subr.bf16.mxu0 0
        %1719 = vmatpush2.bf16.msra.mxu0 0
        %1720 = vmatprep.subr.bf16.mxu0 0
        %1721 = vmatpush2.bf16.msra.mxu0 0
        %1722 = vmatprep.mubr.bf16.mxu0 0
        %1723 = vmatmul.mubr.bf16.gmra.mxu0 %v1679
        %v1724 = vpop.f32.mrf.mxu0
        %v1725 = vadd.f32 0.0, %v1724
        %v1726 = vpop.f32.mrf.mxu0
        %v1727 = vpop.f32.mrf.mxu0
        %v1728 = vadd.f32 0.0, %v1727
        %v1729 = vpop.f32.mrf.mxu0
        %1730 = vmatprep.mubr.bf16.mxu0 0
        %1731 = vmatmul.mubr.bf16.gmra.mxu0 %v1682
        %v1732 = vpop.f32.mrf.mxu0
        %v1733 = vadd.f32 0.0, %v1732
        %v1734 = vpop.f32.mrf.mxu0
        %v1735 = vpop.f32.mrf.mxu0
        %v1736 = vadd.f32 0.0, %v1735
        %v1737 = vpop.f32.mrf.mxu0
        %1738 = vmatprep.mubr.bf16.mxu0 0
        %1739 = vmatmul.mubr.bf16.gmra.mxu0 %v1685
        %v1740 = vpop.f32.mrf.mxu0
        %v1741 = vadd.f32 0.0, %v1740
        %v1742 = vpop.f32.mrf.mxu0
        %v1743 = vpop.f32.mrf.mxu0
        %v1744 = vadd.f32 0.0, %v1743
        %v1745 = vpop.f32.mrf.mxu0
        %1746 = vmatprep.mubr.bf16.mxu0 0
        %1747 = vmatmul.mubr.bf16.gmra.mxu0 %v1688
        %v1748 = vpop.f32.mrf.mxu0
        %v1749 = vadd.f32 0.0, %v1748
        %v1750 = vpop.f32.mrf.mxu0
        %v1751 = vpop.f32.mrf.mxu0
        %v1752 = vadd.f32 0.0, %v1751
        %v1753 = vpop.f32.mrf.mxu0
        %1754 = vdwg.mxu0
        %v1755 = vrcp.pop %v1652
        %v1756 = vrcp.pop %v1655
        %v1757 = vrcp.pop %v1658
        %v1758 = vrcp.pop %v1661
        %v1759 = vrcp.pop %v1664
        %v1760 = vrcp.pop %v1667
        %v1761 = vrcp.pop %v1670
        %v1762 = vrcp.pop %v1673
        %v1763 = vmul.f32 %v1725, %v1755
        %v1764 = vmul.f32 %v1728, %v1756
        %v1765 = vmul.f32 %v1733, %v1757
        %v1766 = vmul.f32 %v1736, %v1758
        %v1767 = vmul.f32 %v1741, %v1759
        %v1768 = vmul.f32 %v1744, %v1760
        %v1769 = vmul.f32 %v1749, %v1761
        %v1770 = vmul.f32 %v1752, %v1762
        %v1771 = vpack.c.bf16 %v1764, %v1763
        %v1772 = vpack.c.bf16 %v1766, %v1765
        %v1773 = vpack.c.bf16 %v1768, %v1767
        %v1774 = vpack.c.bf16 %v1770, %v1769
        %v1779 = vunpack.c.l.b16 %v1182
        %v1780 = vunpack.c.l.b16 %v1183
        %v1781 = vunpack.c.l.b16 %v1184
        %v1782 = vunpack.c.l.b16 %v1185
        %v1783 = vpack.c.b16 %v1780, %v1779
        %v1784 = vpack.c.b16 %v1782, %v1781
        %v1788 = vsel %vm1202, %v1771, 0
        %v1791 = vsel %vm1202, %v1772, 0
        %v1794 = vsel %vm1202, %v1773, 0
        %v1797 = vsel %vm1202, %v1774, 0
        %1799 = vmatprep.subr.bf16.mxu0 0
        %1800 = vmatpush1.bf16.msra.mxu0 0
        %1801 = vmatprep.subr.bf16.mxu0 0
        %1802 = vmatpush1.bf16.msra.mxu0 0
        %1803 = vmatprep.subr.bf16.mxu0 0
        %1804 = vmatpush1.bf16.msra.mxu0 0
        %1805 = vmatprep.subr.bf16.mxu0 0
        %1806 = vmatpush1.bf16.msra.mxu0 0
        %1807 = vmatprep.subr.bf16.mxu0 0
        %1808 = vmatpush1.bf16.msra.mxu0 0
        %1809 = vmatprep.subr.bf16.mxu0 0
        %1810 = vmatpush1.bf16.msra.mxu0 0
        %1811 = vmatprep.subr.bf16.mxu0 0
        %1812 = vmatpush1.bf16.msra.mxu0 %v1784
        %1813 = vmatprep.subr.bf16.mxu0 0
        %1814 = vmatpush1.bf16.msra.mxu0 %v1783
        %1815 = vmatprep.subr.bf16.mxu0 0
        %1816 = vmatpush2.bf16.msra.mxu0 0
        %1817 = vmatprep.subr.bf16.mxu0 0
        %1818 = vmatpush2.bf16.msra.mxu0 0
        %1819 = vmatprep.subr.bf16.mxu0 0
        %1820 = vmatpush2.bf16.msra.mxu0 0
        %1821 = vmatprep.subr.bf16.mxu0 0
        %1822 = vmatpush2.bf16.msra.mxu0 0
        %1823 = vmatprep.subr.bf16.mxu0 0
        %1824 = vmatpush2.bf16.msra.mxu0 0
        %1825 = vmatprep.subr.bf16.mxu0 0
        %1826 = vmatpush2.bf16.msra.mxu0 0
        %1827 = vmatprep.subr.bf16.mxu0 0
        %1828 = vmatpush2.bf16.msra.mxu0 0
        %1829 = vmatprep.subr.bf16.mxu0 0
        %1830 = vmatpush2.bf16.msra.mxu0 0
        %1831 = vmatprep.mubr.bf16.mxu0 0
        %1832 = vmatmul.mubr.bf16.gmra.mxu0 %v1788
        %v1833 = vpop.f32.mrf.mxu0
        %v1834 = vadd.f32 0.0, %v1833
        %v1835 = vpop.f32.mrf.mxu0
        %v1836 = vpop.f32.mrf.mxu0
        %v1837 = vadd.f32 0.0, %v1836
        %v1838 = vpop.f32.mrf.mxu0
        %1839 = vmatprep.mubr.bf16.mxu0 0
        %1840 = vmatmul.mubr.bf16.gmra.mxu0 %v1791
        %v1841 = vpop.f32.mrf.mxu0
        %v1842 = vadd.f32 0.0, %v1841
        %v1843 = vpop.f32.mrf.mxu0
        %v1844 = vpop.f32.mrf.mxu0
        %v1845 = vadd.f32 0.0, %v1844
        %v1846 = vpop.f32.mrf.mxu0
        %1847 = vmatprep.mubr.bf16.mxu0 0
        %1848 = vmatmul.mubr.bf16.gmra.mxu0 %v1794
        %v1849 = vpop.f32.mrf.mxu0
        %v1850 = vadd.f32 0.0, %v1849
        %v1851 = vpop.f32.mrf.mxu0
        %v1852 = vpop.f32.mrf.mxu0
        %v1853 = vadd.f32 0.0, %v1852
        %v1854 = vpop.f32.mrf.mxu0
        %1855 = vmatprep.mubr.bf16.mxu0 0
        %1856 = vmatmul.mubr.bf16.gmra.mxu0 %v1797
        %v1857 = vpop.f32.mrf.mxu0
        %v1858 = vadd.f32 0.0, %v1857
        %v1859 = vpop.f32.mrf.mxu0
        %v1860 = vpop.f32.mrf.mxu0
        %v1861 = vadd.f32 0.0, %v1860
        %v1862 = vpop.f32.mrf.mxu0
        %1863 = vdwg.mxu0
        %v1868 = vunpack.c.l.b16 %v1178
        %v1869 = vunpack.c.l.b16 %v1179
        %v1870 = vunpack.c.l.b16 %v1180
        %v1871 = vunpack.c.l.b16 %v1181
        %v1872 = vpack.c.b16 %v1869, %v1868
        %v1873 = vpack.c.b16 %v1871, %v1870
        %v1877 = vsel %vm1202, %v1493, 0
        %v1880 = vsel %vm1202, %v1494, 0
        %v1883 = vsel %vm1202, %v1495, 0
        %v1886 = vsel %vm1202, %v1496, 0
        %1888 = vmatprep.subr.bf16.mxu0 0
        %1889 = vmatpush1.bf16.msra.mxu0 0
        %1890 = vmatprep.subr.bf16.mxu0 0
        %1891 = vmatpush1.bf16.msra.mxu0 0
        %1892 = vmatprep.subr.bf16.mxu0 0
        %1893 = vmatpush1.bf16.msra.mxu0 0
        %1894 = vmatprep.subr.bf16.mxu0 0
        %1895 = vmatpush1.bf16.msra.mxu0 0
        %1896 = vmatprep.subr.bf16.mxu0 0
        %1897 = vmatpush1.bf16.msra.mxu0 0
        %1898 = vmatprep.subr.bf16.mxu0 0
        %1899 = vmatpush1.bf16.msra.mxu0 0
        %1900 = vmatprep.subr.bf16.mxu0 0
        %1901 = vmatpush1.bf16.msra.mxu0 %v1873
        %1902 = vmatprep.subr.bf16.mxu0 0
        %1903 = vmatpush1.bf16.msra.mxu0 %v1872
        %1904 = vmatprep.subr.bf16.mxu0 0
        %1905 = vmatpush2.bf16.msra.mxu0 0
        %1906 = vmatprep.subr.bf16.mxu0 0
        %1907 = vmatpush2.bf16.msra.mxu0 0
        %1908 = vmatprep.subr.bf16.mxu0 0
        %1909 = vmatpush2.bf16.msra.mxu0 0
        %1910 = vmatprep.subr.bf16.mxu0 0
        %1911 = vmatpush2.bf16.msra.mxu0 0
        %1912 = vmatprep.subr.bf16.mxu0 0
        %1913 = vmatpush2.bf16.msra.mxu0 0
        %1914 = vmatprep.subr.bf16.mxu0 0
        %1915 = vmatpush2.bf16.msra.mxu0 0
        %1916 = vmatprep.subr.bf16.mxu0 0
        %1917 = vmatpush2.bf16.msra.mxu0 0
        %1918 = vmatprep.subr.bf16.mxu0 0
        %1919 = vmatpush2.bf16.msra.mxu0 0
        %1920 = vmatprep.mubr.bf16.mxu0 0
        %1921 = vmatmul.mubr.bf16.gmra.mxu0 %v1877
        %v1922 = vpop.f32.mrf.mxu0
        %v1923 = vadd.f32 %v1834, %v1922
        %v1924 = vpop.f32.mrf.mxu0
        %v1925 = vpop.f32.mrf.mxu0
        %v1926 = vadd.f32 %v1837, %v1925
        %v1927 = vpop.f32.mrf.mxu0
        %1928 = vmatprep.mubr.bf16.mxu0 0
        %1929 = vmatmul.mubr.bf16.gmra.mxu0 %v1880
        %v1930 = vpop.f32.mrf.mxu0
        %v1931 = vadd.f32 %v1842, %v1930
        %v1932 = vpop.f32.mrf.mxu0
        %v1933 = vpop.f32.mrf.mxu0
        %v1934 = vadd.f32 %v1845, %v1933
        %v1935 = vpop.f32.mrf.mxu0
        %1936 = vmatprep.mubr.bf16.mxu0 0
        %1937 = vmatmul.mubr.bf16.gmra.mxu0 %v1883
        %v1938 = vpop.f32.mrf.mxu0
        %v1939 = vadd.f32 %v1850, %v1938
        %v1940 = vpop.f32.mrf.mxu0
        %v1941 = vpop.f32.mrf.mxu0
        %v1942 = vadd.f32 %v1853, %v1941
        %v1943 = vpop.f32.mrf.mxu0
        %1944 = vmatprep.mubr.bf16.mxu0 0
        %1945 = vmatmul.mubr.bf16.gmra.mxu0 %v1886
        %v1946 = vpop.f32.mrf.mxu0
        %v1947 = vadd.f32 %v1858, %v1946
        %v1948 = vpop.f32.mrf.mxu0
        %v1949 = vpop.f32.mrf.mxu0
        %v1950 = vadd.f32 %v1861, %v1949
        %v1951 = vpop.f32.mrf.mxu0
        %1952 = vdwg.mxu0
        %1953 = vrot.lane.b32.xlu0 %v1194, 64
        %v1954 = vpop.permute.xlu0 %1953
        %1955 = vrot.lane.b32.xlu0 %v1195, 64
        %v1956 = vpop.permute.xlu0 %1955
        %1957 = vrot.lane.b32.xlu0 %v1196, 64
        %v1958 = vpop.permute.xlu0 %1957
        %1959 = vrot.lane.b32.xlu0 %v1197, 64
        %v1960 = vpop.permute.xlu0 %1959
        %1965 = vrot.lane.b32.xlu0 %v1198, 96
        %v1966 = vpop.permute.xlu0 %1965
        %1967 = vrot.lane.b32.xlu0 %v1199, 96
        %v1968 = vpop.permute.xlu0 %1967
        %1969 = vrot.lane.b32.xlu0 %v1200, 96
        %v1970 = vpop.permute.xlu0 %1969
        %1971 = vrot.lane.b32.xlu0 %v1201, 96
        %v1972 = vpop.permute.xlu0 %1971
        %v1974 = vsel %vm1202, %v1954, 0
        %v1977 = vsel %vm1202, %v1956, 0
        %v1980 = vsel %vm1202, %v1958, 0
        %v1983 = vsel %vm1202, %v1960, 0
        %v1986 = vsel %vm1202, %v1966, 0
        %v1989 = vsel %vm1202, %v1968, 0
        %v1992 = vsel %vm1202, %v1970, 0
        %v1995 = vsel %vm1202, %v1972, 0
        %1997 = vmatprep.subr.bf16.mxu0 0
        %1998 = vmatpush1.bf16.xpose.msra.mxu0 0
        %1999 = vmatprep.subr.bf16.mxu0 0
        %2000 = vmatpush1.bf16.xpose.msra.mxu0 0
        %2001 = vmatprep.subr.bf16.mxu0 0
        %2002 = vmatpush1.bf16.xpose.msra.mxu0 0
        %2003 = vmatprep.subr.bf16.mxu0 0
        %2004 = vmatpush1.bf16.xpose.msra.mxu0 0
        %2005 = vmatprep.subr.bf16.mxu0 0
        %2006 = vmatpush1.bf16.xpose.msra.mxu0 %v1995
        %2007 = vmatprep.subr.bf16.mxu0 0
        %2008 = vmatpush1.bf16.xpose.msra.mxu0 %v1992
        %2009 = vmatprep.subr.bf16.mxu0 0
        %2010 = vmatpush1.bf16.xpose.msra.mxu0 %v1989
        %2011 = vmatprep.subr.bf16.mxu0 0
        %2012 = vmatpush1.bf16.xpose.msra.mxu0 %v1986
        %2013 = vmatprep.subr.bf16.mxu0 0
        %2014 = vmatpush2.bf16.xpose.msra.mxu0 0
        %2015 = vmatprep.subr.bf16.mxu0 0
        %2016 = vmatpush2.bf16.xpose.msra.mxu0 0
        %2017 = vmatprep.subr.bf16.mxu0 0
        %2018 = vmatpush2.bf16.xpose.msra.mxu0 0
        %2019 = vmatprep.subr.bf16.mxu0 0
        %2020 = vmatpush2.bf16.xpose.msra.mxu0 0
        %2021 = vmatprep.subr.bf16.mxu0 0
        %2022 = vmatpush2.bf16.xpose.msra.mxu0 0
        %2023 = vmatprep.subr.bf16.mxu0 0
        %2024 = vmatpush2.bf16.xpose.msra.mxu0 0
        %2025 = vmatprep.subr.bf16.mxu0 0
        %2026 = vmatpush2.bf16.xpose.msra.mxu0 0
        %2027 = vmatprep.subr.bf16.mxu0 0
        %2028 = vmatpush2.bf16.xpose.msra.mxu0 0
        %2029 = vmatprep.mubr.bf16.mxu0 0
        %2030 = vmatmul.mubr.bf16.gmra.mxu0 %v1974
        %v2031 = vpop.f32.mrf.mxu0
        %v2032 = vadd.f32 0.0, %v2031
        %v2033 = vpop.f32.mrf.mxu0
        %v2034 = vpop.f32.mrf.mxu0
        %v2035 = vadd.f32 0.0, %v2034
        %v2036 = vpop.f32.mrf.mxu0
        %2037 = vmatprep.mubr.bf16.mxu0 0
        %2038 = vmatmul.mubr.bf16.gmra.mxu0 %v1977
        %v2039 = vpop.f32.mrf.mxu0
        %v2040 = vadd.f32 0.0, %v2039
        %v2041 = vpop.f32.mrf.mxu0
        %v2042 = vpop.f32.mrf.mxu0
        %v2043 = vadd.f32 0.0, %v2042
        %v2044 = vpop.f32.mrf.mxu0
        %2045 = vmatprep.mubr.bf16.mxu0 0
        %2046 = vmatmul.mubr.bf16.gmra.mxu0 %v1980
        %v2047 = vpop.f32.mrf.mxu0
        %v2048 = vadd.f32 0.0, %v2047
        %v2049 = vpop.f32.mrf.mxu0
        %v2050 = vpop.f32.mrf.mxu0
        %v2051 = vadd.f32 0.0, %v2050
        %v2052 = vpop.f32.mrf.mxu0
        %2053 = vmatprep.mubr.bf16.mxu0 0
        %2054 = vmatmul.mubr.bf16.gmra.mxu0 %v1983
        %v2055 = vpop.f32.mrf.mxu0
        %v2056 = vadd.f32 0.0, %v2055
        %v2057 = vpop.f32.mrf.mxu0
        %v2058 = vpop.f32.mrf.mxu0
        %v2059 = vadd.f32 0.0, %v2058
        %v2060 = vpop.f32.mrf.mxu0
        %2061 = vdwg.mxu0
        %v2062 = vmul.f32 %v2032, 0.0625
        %v2063 = vmul.f32 %v2035, 0.0625
        %v2064 = vmul.f32 %v2040, 0.0625
        %v2065 = vmul.f32 %v2043, 0.0625
        %v2066 = vmul.f32 %v2048, 0.0625
        %v2067 = vmul.f32 %v2051, 0.0625
        %v2068 = vmul.f32 %v2056, 0.0625
        %v2069 = vmul.f32 %v2059, 0.0625
        %v2070 = vadd.f32 %v2062, %v1170
        %v2071 = vadd.f32 %v2063, %v1171
        %v2072 = vadd.f32 %v2064, %v1172
        %v2073 = vadd.f32 %v2065, %v1173
        %v2074 = vadd.f32 %v2066, %v1174
        %v2075 = vadd.f32 %v2067, %v1175
        %v2076 = vadd.f32 %v2068, %v1176
        %v2077 = vadd.f32 %v2069, %v1177
        %v2078 = vsel %vm1012, %v2070, -inf
        %2079 = vmax.xlane.f32.xlu0 %v2078
        %v2080 = vpop.xlane.xlu0 %2079
        %v2081 = vsel %vm1012, %v2071, -inf
        %2082 = vmax.xlane.f32.xlu0 %v2081
        %v2083 = vpop.xlane.xlu0 %2082
        %v2084 = vsel %vm1012, %v2072, -inf
        %2085 = vmax.xlane.f32.xlu0 %v2084
        %v2086 = vpop.xlane.xlu0 %2085
        %v2087 = vsel %vm1012, %v2073, -inf
        %2088 = vmax.xlane.f32.xlu0 %v2087
        %v2089 = vpop.xlane.xlu0 %2088
        %v2090 = vsel %vm1012, %v2074, -inf
        %2091 = vmax.xlane.f32.xlu0 %v2090
        %v2092 = vpop.xlane.xlu0 %2091
        %v2093 = vsel %vm1012, %v2075, -inf
        %2094 = vmax.xlane.f32.xlu0 %v2093
        %v2095 = vpop.xlane.xlu0 %2094
        %v2096 = vsel %vm1012, %v2076, -inf
        %2097 = vmax.xlane.f32.xlu0 %v2096
        %v2098 = vpop.xlane.xlu0 %2097
        %v2099 = vsel %vm1012, %v2077, -inf
        %2100 = vmax.xlane.f32.xlu0 %v2099
        %v2101 = vpop.xlane.xlu0 %2100
        %v2102 = vsub.f32 %v2070, %v2080
        %v2103 = vsub.f32 %v2071, %v2083
        %v2104 = vsub.f32 %v2072, %v2086
        %v2105 = vsub.f32 %v2073, %v2089
        %v2106 = vsub.f32 %v2074, %v2092
        %v2107 = vsub.f32 %v2075, %v2095
        %v2108 = vsub.f32 %v2076, %v2098
        %v2109 = vsub.f32 %v2077, %v2101
        %v2110 = vmul.f32 %v2102, 1.442695
        %v2111 = vpow.pop %v2110
        %v2112 = vmul.f32 %v2103, 1.442695
        %v2113 = vpow.pop %v2112
        %v2114 = vmul.f32 %v2104, 1.442695
        %v2115 = vpow.pop %v2114
        %v2116 = vmul.f32 %v2105, 1.442695
        %v2117 = vpow.pop %v2116
        %v2118 = vmul.f32 %v2106, 1.442695
        %v2119 = vpow.pop %v2118
        %v2120 = vmul.f32 %v2107, 1.442695
        %v2121 = vpow.pop %v2120
        %v2122 = vmul.f32 %v2108, 1.442695
        %v2123 = vpow.pop %v2122
        %v2124 = vmul.f32 %v2109, 1.442695
        %v2125 = vpow.pop %v2124
        %v2126 = vsel %vm1012, %v2111, 0.0
        %2127 = vadd.xlane.f32.xlu0 %v2126
        %v2128 = vpop.xlane.xlu0 %2127
        %v2129 = vsel %vm1012, %v2113, 0.0
        %2130 = vadd.xlane.f32.xlu0 %v2129
        %v2131 = vpop.xlane.xlu0 %2130
        %v2132 = vsel %vm1012, %v2115, 0.0
        %2133 = vadd.xlane.f32.xlu0 %v2132
        %v2134 = vpop.xlane.xlu0 %2133
        %v2135 = vsel %vm1012, %v2117, 0.0
        %2136 = vadd.xlane.f32.xlu0 %v2135
        %v2137 = vpop.xlane.xlu0 %2136
        %v2138 = vsel %vm1012, %v2119, 0.0
        %2139 = vadd.xlane.f32.xlu0 %v2138
        %v2140 = vpop.xlane.xlu0 %2139
        %v2141 = vsel %vm1012, %v2121, 0.0
        %2142 = vadd.xlane.f32.xlu0 %v2141
        %v2143 = vpop.xlane.xlu0 %2142
        %v2144 = vsel %vm1012, %v2123, 0.0
        %2145 = vadd.xlane.f32.xlu0 %v2144
        %v2146 = vpop.xlane.xlu0 %2145
        %v2147 = vsel %vm1012, %v2125, 0.0
        %2148 = vadd.xlane.f32.xlu0 %v2147
        %v2149 = vpop.xlane.xlu0 %2148
        %v2150 = vpack.c.bf16 %v2113, %v2111
        %v2151 = vpack.c.bf16 %v2117, %v2115
        %v2152 = vpack.c.bf16 %v2121, %v2119
        %v2153 = vpack.c.bf16 %v2125, %v2123
        %2154 = vrot.lane.b32.xlu0 %v976, 32
        %v2155 = vpop.permute.xlu0 %2154
        %2156 = vrot.lane.b32.xlu0 %v977, 32
        %v2157 = vpop.permute.xlu0 %2156
        %2158 = vrot.lane.b32.xlu0 %v978, 32
        %v2159 = vpop.permute.xlu0 %2158
        %2160 = vrot.lane.b32.xlu0 %v979, 32
        %v2161 = vpop.permute.xlu0 %2160
        %v2167 = vsel %vm1012, %v2150, 0
        %v2170 = vsel %vm1012, %v2151, 0
        %v2173 = vsel %vm1012, %v2152, 0
        %v2176 = vsel %vm1012, %v2153, 0
        %2178 = vmatprep.subr.bf16.mxu0 0
        %2179 = vmatpush1.bf16.msra.mxu0 0
        %2180 = vmatprep.subr.bf16.mxu0 0
        %2181 = vmatpush1.bf16.msra.mxu0 0
        %2182 = vmatprep.subr.bf16.mxu0 0
        %2183 = vmatpush1.bf16.msra.mxu0 0
        %2184 = vmatprep.subr.bf16.mxu0 0
        %2185 = vmatpush1.bf16.msra.mxu0 0
        %2186 = vmatprep.subr.bf16.mxu0 0
        %2187 = vmatpush1.bf16.msra.mxu0 %v2161
        %2188 = vmatprep.subr.bf16.mxu0 0
        %2189 = vmatpush1.bf16.msra.mxu0 %v2159
        %2190 = vmatprep.subr.bf16.mxu0 0
        %2191 = vmatpush1.bf16.msra.mxu0 %v2157
        %2192 = vmatprep.subr.bf16.mxu0 0
        %2193 = vmatpush1.bf16.msra.mxu0 %v2155
        %2194 = vmatprep.subr.bf16.mxu0 0
        %2195 = vmatpush2.bf16.msra.mxu0 0
        %2196 = vmatprep.subr.bf16.mxu0 0
        %2197 = vmatpush2.bf16.msra.mxu0 0
        %2198 = vmatprep.subr.bf16.mxu0 0
        %2199 = vmatpush2.bf16.msra.mxu0 0
        %2200 = vmatprep.subr.bf16.mxu0 0
        %2201 = vmatpush2.bf16.msra.mxu0 0
        %2202 = vmatprep.subr.bf16.mxu0 0
        %2203 = vmatpush2.bf16.msra.mxu0 0
        %2204 = vmatprep.subr.bf16.mxu0 0
        %2205 = vmatpush2.bf16.msra.mxu0 0
        %2206 = vmatprep.subr.bf16.mxu0 0
        %2207 = vmatpush2.bf16.msra.mxu0 0
        %2208 = vmatprep.subr.bf16.mxu0 0
        %2209 = vmatpush2.bf16.msra.mxu0 0
        %2210 = vmatprep.mubr.bf16.mxu0 0
        %2211 = vmatmul.mubr.bf16.gmra.mxu0 %v2167
        %v2212 = vpop.f32.mrf.mxu0
        %v2213 = vadd.f32 0.0, %v2212
        %v2214 = vpop.f32.mrf.mxu0
        %v2215 = vpop.f32.mrf.mxu0
        %v2216 = vadd.f32 0.0, %v2215
        %v2217 = vpop.f32.mrf.mxu0
        %2218 = vmatprep.mubr.bf16.mxu0 0
        %2219 = vmatmul.mubr.bf16.gmra.mxu0 %v2170
        %v2220 = vpop.f32.mrf.mxu0
        %v2221 = vadd.f32 0.0, %v2220
        %v2222 = vpop.f32.mrf.mxu0
        %v2223 = vpop.f32.mrf.mxu0
        %v2224 = vadd.f32 0.0, %v2223
        %v2225 = vpop.f32.mrf.mxu0
        %2226 = vmatprep.mubr.bf16.mxu0 0
        %2227 = vmatmul.mubr.bf16.gmra.mxu0 %v2173
        %v2228 = vpop.f32.mrf.mxu0
        %v2229 = vadd.f32 0.0, %v2228
        %v2230 = vpop.f32.mrf.mxu0
        %v2231 = vpop.f32.mrf.mxu0
        %v2232 = vadd.f32 0.0, %v2231
        %v2233 = vpop.f32.mrf.mxu0
        %2234 = vmatprep.mubr.bf16.mxu0 0
        %2235 = vmatmul.mubr.bf16.gmra.mxu0 %v2176
        %v2236 = vpop.f32.mrf.mxu0
        %v2237 = vadd.f32 0.0, %v2236
        %v2238 = vpop.f32.mrf.mxu0
        %v2239 = vpop.f32.mrf.mxu0
        %v2240 = vadd.f32 0.0, %v2239
        %v2241 = vpop.f32.mrf.mxu0
        %2242 = vdwg.mxu0
        %v2243 = vrcp.pop %v2128
        %v2244 = vrcp.pop %v2131
        %v2245 = vrcp.pop %v2134
        %v2246 = vrcp.pop %v2137
        %v2247 = vrcp.pop %v2140
        %v2248 = vrcp.pop %v2143
        %v2249 = vrcp.pop %v2146
        %v2250 = vrcp.pop %v2149
        %v2251 = vmul.f32 %v2213, %v2243
        %v2252 = vmul.f32 %v2216, %v2244
        %v2253 = vmul.f32 %v2221, %v2245
        %v2254 = vmul.f32 %v2224, %v2246
        %v2255 = vmul.f32 %v2229, %v2247
        %v2256 = vmul.f32 %v2232, %v2248
        %v2257 = vmul.f32 %v2237, %v2249
        %v2258 = vmul.f32 %v2240, %v2250
        %v2259 = vpack.c.bf16 %v2252, %v2251
        %v2260 = vpack.c.bf16 %v2254, %v2253
        %v2261 = vpack.c.bf16 %v2256, %v2255
        %v2262 = vpack.c.bf16 %v2258, %v2257
        %v2267 = vunpack.c.l.b16 %v1186
        %v2268 = vunpack.c.l.b16 %v1187
        %v2269 = vunpack.c.l.b16 %v1188
        %v2270 = vunpack.c.l.b16 %v1189
        %v2271 = vpack.c.b16 %v2268, %v2267
        %v2272 = vpack.c.b16 %v2270, %v2269
        %v2276 = vsel %vm1202, %v2259, 0
        %v2279 = vsel %vm1202, %v2260, 0
        %v2282 = vsel %vm1202, %v2261, 0
        %v2285 = vsel %vm1202, %v2262, 0
        %2287 = vmatprep.subr.bf16.mxu0 0
        %2288 = vmatpush1.bf16.msra.mxu0 0
        %2289 = vmatprep.subr.bf16.mxu0 0
        %2290 = vmatpush1.bf16.msra.mxu0 0
        %2291 = vmatprep.subr.bf16.mxu0 0
        %2292 = vmatpush1.bf16.msra.mxu0 0
        %2293 = vmatprep.subr.bf16.mxu0 0
        %2294 = vmatpush1.bf16.msra.mxu0 0
        %2295 = vmatprep.subr.bf16.mxu0 0
        %2296 = vmatpush1.bf16.msra.mxu0 0
        %2297 = vmatprep.subr.bf16.mxu0 0
        %2298 = vmatpush1.bf16.msra.mxu0 0
        %2299 = vmatprep.subr.bf16.mxu0 0
        %2300 = vmatpush1.bf16.msra.mxu0 %v2272
        %2301 = vmatprep.subr.bf16.mxu0 0
        %2302 = vmatpush1.bf16.msra.mxu0 %v2271
        %2303 = vmatprep.subr.bf16.mxu0 0
        %2304 = vmatpush2.bf16.msra.mxu0 0
        %2305 = vmatprep.subr.bf16.mxu0 0
        %2306 = vmatpush2.bf16.msra.mxu0 0
        %2307 = vmatprep.subr.bf16.mxu0 0
        %2308 = vmatpush2.bf16.msra.mxu0 0
        %2309 = vmatprep.subr.bf16.mxu0 0
        %2310 = vmatpush2.bf16.msra.mxu0 0
        %2311 = vmatprep.subr.bf16.mxu0 0
        %2312 = vmatpush2.bf16.msra.mxu0 0
        %2313 = vmatprep.subr.bf16.mxu0 0
        %2314 = vmatpush2.bf16.msra.mxu0 0
        %2315 = vmatprep.subr.bf16.mxu0 0
        %2316 = vmatpush2.bf16.msra.mxu0 0
        %2317 = vmatprep.subr.bf16.mxu0 0
        %2318 = vmatpush2.bf16.msra.mxu0 0
        %2319 = vmatprep.mubr.bf16.mxu0 0
        %2320 = vmatmul.mubr.bf16.gmra.mxu0 %v2276
        %v2321 = vpop.f32.mrf.mxu0
        %v2322 = vadd.f32 0.0, %v2321
        %v2323 = vpop.f32.mrf.mxu0
        %v2324 = vpop.f32.mrf.mxu0
        %v2325 = vadd.f32 0.0, %v2324
        %v2326 = vpop.f32.mrf.mxu0
        %2327 = vmatprep.mubr.bf16.mxu0 0
        %2328 = vmatmul.mubr.bf16.gmra.mxu0 %v2279
        %v2329 = vpop.f32.mrf.mxu0
        %v2330 = vadd.f32 0.0, %v2329
        %v2331 = vpop.f32.mrf.mxu0
        %v2332 = vpop.f32.mrf.mxu0
        %v2333 = vadd.f32 0.0, %v2332
        %v2334 = vpop.f32.mrf.mxu0
        %2335 = vmatprep.mubr.bf16.mxu0 0
        %2336 = vmatmul.mubr.bf16.gmra.mxu0 %v2282
        %v2337 = vpop.f32.mrf.mxu0
        %v2338 = vadd.f32 0.0, %v2337
        %v2339 = vpop.f32.mrf.mxu0
        %v2340 = vpop.f32.mrf.mxu0
        %v2341 = vadd.f32 0.0, %v2340
        %v2342 = vpop.f32.mrf.mxu0
        %2343 = vmatprep.mubr.bf16.mxu0 0
        %2344 = vmatmul.mubr.bf16.gmra.mxu0 %v2285
        %v2345 = vpop.f32.mrf.mxu0
        %v2346 = vadd.f32 0.0, %v2345
        %v2347 = vpop.f32.mrf.mxu0
        %v2348 = vpop.f32.mrf.mxu0
        %v2349 = vadd.f32 0.0, %v2348
        %v2350 = vpop.f32.mrf.mxu0
        %2351 = vdwg.mxu0
        %v2352 = vadd.f32 %v1923, %v2322
        %v2353 = vadd.f32 %v1926, %v2325
        %v2354 = vadd.f32 %v1931, %v2330
        %v2355 = vadd.f32 %v1934, %v2333
        %v2356 = vadd.f32 %v1939, %v2338
        %v2357 = vadd.f32 %v1942, %v2341
        %v2358 = vadd.f32 %v1947, %v2346
        %v2359 = vadd.f32 %v1950, %v2349
        %2360 = vrot.lane.b32.xlu0 %v1194, 32
        %v2361 = vpop.permute.xlu0 %2360
        %2362 = vrot.lane.b32.xlu0 %v1195, 32
        %v2363 = vpop.permute.xlu0 %2362
        %2364 = vrot.lane.b32.xlu0 %v1196, 32
        %v2365 = vpop.permute.xlu0 %2364
        %2366 = vrot.lane.b32.xlu0 %v1197, 32
        %v2367 = vpop.permute.xlu0 %2366
        %v2369 = vsel %vm1202, %v2361, 0
        %v2372 = vsel %vm1202, %v2363, 0
        %v2375 = vsel %vm1202, %v2365, 0
        %v2378 = vsel %vm1202, %v2367, 0
        %2380 = vmatprep.subr.bf16.mxu0 0
        %2381 = vmatpush1.bf16.xpose.msra.mxu0 0
        %2382 = vmatprep.subr.bf16.mxu0 0
        %2383 = vmatpush1.bf16.xpose.msra.mxu0 0
        %2384 = vmatprep.subr.bf16.mxu0 0
        %2385 = vmatpush1.bf16.xpose.msra.mxu0 0
        %2386 = vmatprep.subr.bf16.mxu0 0
        %2387 = vmatpush1.bf16.xpose.msra.mxu0 0
        %2388 = vmatprep.subr.bf16.mxu0 0
        %2389 = vmatpush1.bf16.xpose.msra.mxu0 %v1995
        %2390 = vmatprep.subr.bf16.mxu0 0
        %2391 = vmatpush1.bf16.xpose.msra.mxu0 %v1992
        %2392 = vmatprep.subr.bf16.mxu0 0
        %2393 = vmatpush1.bf16.xpose.msra.mxu0 %v1989
        %2394 = vmatprep.subr.bf16.mxu0 0
        %2395 = vmatpush1.bf16.xpose.msra.mxu0 %v1986
        %2396 = vmatprep.subr.bf16.mxu0 0
        %2397 = vmatpush2.bf16.xpose.msra.mxu0 0
        %2398 = vmatprep.subr.bf16.mxu0 0
        %2399 = vmatpush2.bf16.xpose.msra.mxu0 0
        %2400 = vmatprep.subr.bf16.mxu0 0
        %2401 = vmatpush2.bf16.xpose.msra.mxu0 0
        %2402 = vmatprep.subr.bf16.mxu0 0
        %2403 = vmatpush2.bf16.xpose.msra.mxu0 0
        %2404 = vmatprep.subr.bf16.mxu0 0
        %2405 = vmatpush2.bf16.xpose.msra.mxu0 0
        %2406 = vmatprep.subr.bf16.mxu0 0
        %2407 = vmatpush2.bf16.xpose.msra.mxu0 0
        %2408 = vmatprep.subr.bf16.mxu0 0
        %2409 = vmatpush2.bf16.xpose.msra.mxu0 0
        %2410 = vmatprep.subr.bf16.mxu0 0
        %2411 = vmatpush2.bf16.xpose.msra.mxu0 0
        %2412 = vmatprep.mubr.bf16.mxu0 0
        %2413 = vmatmul.mubr.bf16.gmra.mxu0 %v2369
        %v2414 = vpop.f32.mrf.mxu0
        %v2415 = vadd.f32 0.0, %v2414
        %v2416 = vpop.f32.mrf.mxu0
        %v2417 = vpop.f32.mrf.mxu0
        %v2418 = vadd.f32 0.0, %v2417
        %v2419 = vpop.f32.mrf.mxu0
        %2420 = vmatprep.mubr.bf16.mxu0 0
        %2421 = vmatmul.mubr.bf16.gmra.mxu0 %v2372
        %v2422 = vpop.f32.mrf.mxu0
        %v2423 = vadd.f32 0.0, %v2422
        %v2424 = vpop.f32.mrf.mxu0
        %v2425 = vpop.f32.mrf.mxu0
        %v2426 = vadd.f32 0.0, %v2425
        %v2427 = vpop.f32.mrf.mxu0
        %2428 = vmatprep.mubr.bf16.mxu0 0
        %2429 = vmatmul.mubr.bf16.gmra.mxu0 %v2375
        %v2430 = vpop.f32.mrf.mxu0
        %v2431 = vadd.f32 0.0, %v2430
        %v2432 = vpop.f32.mrf.mxu0
        %v2433 = vpop.f32.mrf.mxu0
        %v2434 = vadd.f32 0.0, %v2433
        %v2435 = vpop.f32.mrf.mxu0
        %2436 = vmatprep.mubr.bf16.mxu0 0
        %2437 = vmatmul.mubr.bf16.gmra.mxu0 %v2378
        %v2438 = vpop.f32.mrf.mxu0
        %v2439 = vadd.f32 0.0, %v2438
        %v2440 = vpop.f32.mrf.mxu0
        %v2441 = vpop.f32.mrf.mxu0
        %v2442 = vadd.f32 0.0, %v2441
        %v2443 = vpop.f32.mrf.mxu0
        %2444 = vdwg.mxu0
        %v2445 = vmul.f32 %v2415, 0.0625
        %v2446 = vmul.f32 %v2418, 0.0625
        %v2447 = vmul.f32 %v2423, 0.0625
        %v2448 = vmul.f32 %v2426, 0.0625
        %v2449 = vmul.f32 %v2431, 0.0625
        %v2450 = vmul.f32 %v2434, 0.0625
        %v2451 = vmul.f32 %v2439, 0.0625
        %v2452 = vmul.f32 %v2442, 0.0625
        %v2453 = vadd.f32 %v2445, %v1170
        %v2454 = vadd.f32 %v2446, %v1171
        %v2455 = vadd.f32 %v2447, %v1172
        %v2456 = vadd.f32 %v2448, %v1173
        %v2457 = vadd.f32 %v2449, %v1174
        %v2458 = vadd.f32 %v2450, %v1175
        %v2459 = vadd.f32 %v2451, %v1176
        %v2460 = vadd.f32 %v2452, %v1177
        %v2461 = vsel %vm1012, %v2453, -inf
        %2462 = vmax.xlane.f32.xlu0 %v2461
        %v2463 = vpop.xlane.xlu0 %2462
        %v2464 = vsel %vm1012, %v2454, -inf
        %2465 = vmax.xlane.f32.xlu0 %v2464
        %v2466 = vpop.xlane.xlu0 %2465
        %v2467 = vsel %vm1012, %v2455, -inf
        %2468 = vmax.xlane.f32.xlu0 %v2467
        %v2469 = vpop.xlane.xlu0 %2468
        %v2470 = vsel %vm1012, %v2456, -inf
        %2471 = vmax.xlane.f32.xlu0 %v2470
        %v2472 = vpop.xlane.xlu0 %2471
        %v2473 = vsel %vm1012, %v2457, -inf
        %2474 = vmax.xlane.f32.xlu0 %v2473
        %v2475 = vpop.xlane.xlu0 %2474
        %v2476 = vsel %vm1012, %v2458, -inf
        %2477 = vmax.xlane.f32.xlu0 %v2476
        %v2478 = vpop.xlane.xlu0 %2477
        %v2479 = vsel %vm1012, %v2459, -inf
        %2480 = vmax.xlane.f32.xlu0 %v2479
        %v2481 = vpop.xlane.xlu0 %2480
        %v2482 = vsel %vm1012, %v2460, -inf
        %2483 = vmax.xlane.f32.xlu0 %v2482
        %v2484 = vpop.xlane.xlu0 %2483
        %v2485 = vsub.f32 %v2453, %v2463
        %v2486 = vsub.f32 %v2454, %v2466
        %v2487 = vsub.f32 %v2455, %v2469
        %v2488 = vsub.f32 %v2456, %v2472
        %v2489 = vsub.f32 %v2457, %v2475
        %v2490 = vsub.f32 %v2458, %v2478
        %v2491 = vsub.f32 %v2459, %v2481
        %v2492 = vsub.f32 %v2460, %v2484
        %v2493 = vmul.f32 %v2485, 1.442695
        %v2494 = vpow.pop %v2493
        %v2495 = vmul.f32 %v2486, 1.442695
        %v2496 = vpow.pop %v2495
        %v2497 = vmul.f32 %v2487, 1.442695
        %v2498 = vpow.pop %v2497
        %v2499 = vmul.f32 %v2488, 1.442695
        %v2500 = vpow.pop %v2499
        %v2501 = vmul.f32 %v2489, 1.442695
        %v2502 = vpow.pop %v2501
        %v2503 = vmul.f32 %v2490, 1.442695
        %v2504 = vpow.pop %v2503
        %v2505 = vmul.f32 %v2491, 1.442695
        %v2506 = vpow.pop %v2505
        %v2507 = vmul.f32 %v2492, 1.442695
        %v2508 = vpow.pop %v2507
        %v2509 = vsel %vm1012, %v2494, 0.0
        %2510 = vadd.xlane.f32.xlu0 %v2509
        %v2511 = vpop.xlane.xlu0 %2510
        %v2512 = vsel %vm1012, %v2496, 0.0
        %2513 = vadd.xlane.f32.xlu0 %v2512
        %v2514 = vpop.xlane.xlu0 %2513
        %v2515 = vsel %vm1012, %v2498, 0.0
        %2516 = vadd.xlane.f32.xlu0 %v2515
        %v2517 = vpop.xlane.xlu0 %2516
        %v2518 = vsel %vm1012, %v2500, 0.0
        %2519 = vadd.xlane.f32.xlu0 %v2518
        %v2520 = vpop.xlane.xlu0 %2519
        %v2521 = vsel %vm1012, %v2502, 0.0
        %2522 = vadd.xlane.f32.xlu0 %v2521
        %v2523 = vpop.xlane.xlu0 %2522
        %v2524 = vsel %vm1012, %v2504, 0.0
        %2525 = vadd.xlane.f32.xlu0 %v2524
        %v2526 = vpop.xlane.xlu0 %2525
        %v2527 = vsel %vm1012, %v2506, 0.0
        %2528 = vadd.xlane.f32.xlu0 %v2527
        %v2529 = vpop.xlane.xlu0 %2528
        %v2530 = vsel %vm1012, %v2508, 0.0
        %2531 = vadd.xlane.f32.xlu0 %v2530
        %v2532 = vpop.xlane.xlu0 %2531
        %v2533 = vpack.c.bf16 %v2496, %v2494
        %v2534 = vpack.c.bf16 %v2500, %v2498
        %v2535 = vpack.c.bf16 %v2504, %v2502
        %v2536 = vpack.c.bf16 %v2508, %v2506
        %v2538 = vsel %vm1012, %v2533, 0
        %v2541 = vsel %vm1012, %v2534, 0
        %v2544 = vsel %vm1012, %v2535, 0
        %v2547 = vsel %vm1012, %v2536, 0
        %2549 = vmatprep.subr.bf16.mxu0 0
        %2550 = vmatpush1.bf16.msra.mxu0 0
        %2551 = vmatprep.subr.bf16.mxu0 0
        %2552 = vmatpush1.bf16.msra.mxu0 0
        %2553 = vmatprep.subr.bf16.mxu0 0
        %2554 = vmatpush1.bf16.msra.mxu0 0
        %2555 = vmatprep.subr.bf16.mxu0 0
        %2556 = vmatpush1.bf16.msra.mxu0 0
        %2557 = vmatprep.subr.bf16.mxu0 0
        %2558 = vmatpush1.bf16.msra.mxu0 %v2161
        %2559 = vmatprep.subr.bf16.mxu0 0
        %2560 = vmatpush1.bf16.msra.mxu0 %v2159
        %2561 = vmatprep.subr.bf16.mxu0 0
        %2562 = vmatpush1.bf16.msra.mxu0 %v2157
        %2563 = vmatprep.subr.bf16.mxu0 0
        %2564 = vmatpush1.bf16.msra.mxu0 %v2155
        %2565 = vmatprep.subr.bf16.mxu0 0
        %2566 = vmatpush2.bf16.msra.mxu0 0
        %2567 = vmatprep.subr.bf16.mxu0 0
        %2568 = vmatpush2.bf16.msra.mxu0 0
        %2569 = vmatprep.subr.bf16.mxu0 0
        %2570 = vmatpush2.bf16.msra.mxu0 0
        %2571 = vmatprep.subr.bf16.mxu0 0
        %2572 = vmatpush2.bf16.msra.mxu0 0
        %2573 = vmatprep.subr.bf16.mxu0 0
        %2574 = vmatpush2.bf16.msra.mxu0 0
        %2575 = vmatprep.subr.bf16.mxu0 0
        %2576 = vmatpush2.bf16.msra.mxu0 0
        %2577 = vmatprep.subr.bf16.mxu0 0
        %2578 = vmatpush2.bf16.msra.mxu0 0
        %2579 = vmatprep.subr.bf16.mxu0 0
        %2580 = vmatpush2.bf16.msra.mxu0 0
        %2581 = vmatprep.mubr.bf16.mxu0 0
        %2582 = vmatmul.mubr.bf16.gmra.mxu0 %v2538
        %v2583 = vpop.f32.mrf.mxu0
        %v2584 = vadd.f32 0.0, %v2583
        %v2585 = vpop.f32.mrf.mxu0
        %v2586 = vpop.f32.mrf.mxu0
        %v2587 = vadd.f32 0.0, %v2586
        %v2588 = vpop.f32.mrf.mxu0
        %2589 = vmatprep.mubr.bf16.mxu0 0
        %2590 = vmatmul.mubr.bf16.gmra.mxu0 %v2541
        %v2591 = vpop.f32.mrf.mxu0
        %v2592 = vadd.f32 0.0, %v2591
        %v2593 = vpop.f32.mrf.mxu0
        %v2594 = vpop.f32.mrf.mxu0
        %v2595 = vadd.f32 0.0, %v2594
        %v2596 = vpop.f32.mrf.mxu0
        %2597 = vmatprep.mubr.bf16.mxu0 0
        %2598 = vmatmul.mubr.bf16.gmra.mxu0 %v2544
        %v2599 = vpop.f32.mrf.mxu0
        %v2600 = vadd.f32 0.0, %v2599
        %v2601 = vpop.f32.mrf.mxu0
        %v2602 = vpop.f32.mrf.mxu0
        %v2603 = vadd.f32 0.0, %v2602
        %v2604 = vpop.f32.mrf.mxu0
        %2605 = vmatprep.mubr.bf16.mxu0 0
        %2606 = vmatmul.mubr.bf16.gmra.mxu0 %v2547
        %v2607 = vpop.f32.mrf.mxu0
        %v2608 = vadd.f32 0.0, %v2607
        %v2609 = vpop.f32.mrf.mxu0
        %v2610 = vpop.f32.mrf.mxu0
        %v2611 = vadd.f32 0.0, %v2610
        %v2612 = vpop.f32.mrf.mxu0
        %2613 = vdwg.mxu0
        %v2614 = vrcp.pop %v2511
        %v2615 = vrcp.pop %v2514
        %v2616 = vrcp.pop %v2517
        %v2617 = vrcp.pop %v2520
        %v2618 = vrcp.pop %v2523
        %v2619 = vrcp.pop %v2526
        %v2620 = vrcp.pop %v2529
        %v2621 = vrcp.pop %v2532
        %v2622 = vmul.f32 %v2584, %v2614
        %v2623 = vmul.f32 %v2587, %v2615
        %v2624 = vmul.f32 %v2592, %v2616
        %v2625 = vmul.f32 %v2595, %v2617
        %v2626 = vmul.f32 %v2600, %v2618
        %v2627 = vmul.f32 %v2603, %v2619
        %v2628 = vmul.f32 %v2608, %v2620
        %v2629 = vmul.f32 %v2611, %v2621
        %v2630 = vpack.c.bf16 %v2623, %v2622
        %v2631 = vpack.c.bf16 %v2625, %v2624
        %v2632 = vpack.c.bf16 %v2627, %v2626
        %v2633 = vpack.c.bf16 %v2629, %v2628
        %v2638 = vunpack.c.l.b16 %v1190
        %v2639 = vunpack.c.l.b16 %v1191
        %v2640 = vunpack.c.l.b16 %v1192
        %v2641 = vunpack.c.l.b16 %v1193
        %v2642 = vpack.c.b16 %v2639, %v2638
        %v2643 = vpack.c.b16 %v2641, %v2640
        %v2647 = vsel %vm1202, %v2630, 0
        %v2650 = vsel %vm1202, %v2631, 0
        %v2653 = vsel %vm1202, %v2632, 0
        %v2656 = vsel %vm1202, %v2633, 0
        %2658 = vmatprep.subr.bf16.mxu0 0
        %2659 = vmatpush1.bf16.msra.mxu0 0
        %2660 = vmatprep.subr.bf16.mxu0 0
        %2661 = vmatpush1.bf16.msra.mxu0 0
        %2662 = vmatprep.subr.bf16.mxu0 0
        %2663 = vmatpush1.bf16.msra.mxu0 0
        %2664 = vmatprep.subr.bf16.mxu0 0
        %2665 = vmatpush1.bf16.msra.mxu0 0
        %2666 = vmatprep.subr.bf16.mxu0 0
        %2667 = vmatpush1.bf16.msra.mxu0 0
        %2668 = vmatprep.subr.bf16.mxu0 0
        %2669 = vmatpush1.bf16.msra.mxu0 0
        %2670 = vmatprep.subr.bf16.mxu0 0
        %2671 = vmatpush1.bf16.msra.mxu0 %v2643
        %2672 = vmatprep.subr.bf16.mxu0 0
        %2673 = vmatpush1.bf16.msra.mxu0 %v2642
        %2674 = vmatprep.subr.bf16.mxu0 0
        %2675 = vmatpush2.bf16.msra.mxu0 0
        %2676 = vmatprep.subr.bf16.mxu0 0
        %2677 = vmatpush2.bf16.msra.mxu0 0
        %2678 = vmatprep.subr.bf16.mxu0 0
        %2679 = vmatpush2.bf16.msra.mxu0 0
        %2680 = vmatprep.subr.bf16.mxu0 0
        %2681 = vmatpush2.bf16.msra.mxu0 0
        %2682 = vmatprep.subr.bf16.mxu0 0
        %2683 = vmatpush2.bf16.msra.mxu0 0
        %2684 = vmatprep.subr.bf16.mxu0 0
        %2685 = vmatpush2.bf16.msra.mxu0 0
        %2686 = vmatprep.subr.bf16.mxu0 0
        %2687 = vmatpush2.bf16.msra.mxu0 0
        %2688 = vmatprep.subr.bf16.mxu0 0
        %2689 = vmatpush2.bf16.msra.mxu0 0
        %2690 = vmatprep.mubr.bf16.mxu0 0
        %2691 = vmatmul.mubr.bf16.gmra.mxu0 %v2647
        %v2692 = vpop.f32.mrf.mxu0
        %v2693 = vadd.f32 0.0, %v2692
        %v2694 = vpop.f32.mrf.mxu0
        %v2695 = vpop.f32.mrf.mxu0
        %v2696 = vadd.f32 0.0, %v2695
        %v2697 = vpop.f32.mrf.mxu0
        %2698 = vmatprep.mubr.bf16.mxu0 0
        %2699 = vmatmul.mubr.bf16.gmra.mxu0 %v2650
        %v2700 = vpop.f32.mrf.mxu0
        %v2701 = vadd.f32 0.0, %v2700
        %v2702 = vpop.f32.mrf.mxu0
        %v2703 = vpop.f32.mrf.mxu0
        %v2704 = vadd.f32 0.0, %v2703
        %v2705 = vpop.f32.mrf.mxu0
        %2706 = vmatprep.mubr.bf16.mxu0 0
        %2707 = vmatmul.mubr.bf16.gmra.mxu0 %v2653
        %v2708 = vpop.f32.mrf.mxu0
        %v2709 = vadd.f32 0.0, %v2708
        %v2710 = vpop.f32.mrf.mxu0
        %v2711 = vpop.f32.mrf.mxu0
        %v2712 = vadd.f32 0.0, %v2711
        %v2713 = vpop.f32.mrf.mxu0
        %2714 = vmatprep.mubr.bf16.mxu0 0
        %2715 = vmatmul.mubr.bf16.gmra.mxu0 %v2656
        %v2716 = vpop.f32.mrf.mxu0
        %v2717 = vadd.f32 0.0, %v2716
        %v2718 = vpop.f32.mrf.mxu0
        %v2719 = vpop.f32.mrf.mxu0
        %v2720 = vadd.f32 0.0, %v2719
        %v2721 = vpop.f32.mrf.mxu0
        %2722 = vdwg.mxu0
        %v2723 = vadd.f32 %v2352, %v2693
        %v2724 = vadd.f32 %v2353, %v2696
        %v2725 = vadd.f32 %v2354, %v2701
        %v2726 = vadd.f32 %v2355, %v2704
        %v2727 = vadd.f32 %v2356, %v2709
        %v2728 = vadd.f32 %v2357, %v2712
        %v2729 = vadd.f32 %v2358, %v2717
        %v2730 = vadd.f32 %v2359, %v2720
        %v2731 = vmul.f32 %v2723, 0.22
        %v2732 = vmul.f32 %v2724, 0.22
        %v2733 = vmul.f32 %v2725, 0.22
        %v2734 = vmul.f32 %v2726, 0.22
        %v2735 = vmul.f32 %v2727, 0.22
        %v2736 = vmul.f32 %v2728, 0.22
        %v2737 = vmul.f32 %v2729, 0.22
        %v2738 = vmul.f32 %v2730, 0.22
        %v2739 = vadd.f32 %v590, %v2731
        %v2740 = vadd.f32 %v591, %v2732
        %v2741 = vadd.f32 %v592, %v2733
        %v2742 = vadd.f32 %v593, %v2734
        %v2743 = vadd.f32 %v594, %v2735
        %v2744 = vadd.f32 %v595, %v2736
        %v2745 = vadd.f32 %v596, %v2737
        %v2746 = vadd.f32 %v597, %v2738
        %v2747 = vld [vmem:[%s558] sm:$0x1]
        %v2748 = vmul.f32 %v2739, %v2739
        %v2749 = vmul.f32 %v2740, %v2740
        %v2750 = vmul.f32 %v2741, %v2741
        %v2751 = vmul.f32 %v2742, %v2742
        %v2752 = vmul.f32 %v2743, %v2743
        %v2753 = vmul.f32 %v2744, %v2744
        %v2754 = vmul.f32 %v2745, %v2745
        %v2755 = vmul.f32 %v2746, %v2746
        %2756 = vadd.xlane.f32.xlu0 %v2748
        %v2757 = vpop.xlane.xlu0 %2756
        %2758 = vadd.xlane.f32.xlu0 %v2749
        %v2759 = vpop.xlane.xlu0 %2758
        %2760 = vadd.xlane.f32.xlu0 %v2750
        %v2761 = vpop.xlane.xlu0 %2760
        %2762 = vadd.xlane.f32.xlu0 %v2751
        %v2763 = vpop.xlane.xlu0 %2762
        %2764 = vadd.xlane.f32.xlu0 %v2752
        %v2765 = vpop.xlane.xlu0 %2764
        %2766 = vadd.xlane.f32.xlu0 %v2753
        %v2767 = vpop.xlane.xlu0 %2766
        %2768 = vadd.xlane.f32.xlu0 %v2754
        %v2769 = vpop.xlane.xlu0 %2768
        %2770 = vadd.xlane.f32.xlu0 %v2755
        %v2771 = vpop.xlane.xlu0 %2770
        %v2772 = vmul.f32 %v2757, %v623
        %v2773 = vmul.f32 %v2759, %v623
        %v2774 = vmul.f32 %v2761, %v623
        %v2775 = vmul.f32 %v2763, %v623
        %v2776 = vmul.f32 %v2765, %v623
        %v2777 = vmul.f32 %v2767, %v623
        %v2778 = vmul.f32 %v2769, %v623
        %v2779 = vmul.f32 %v2771, %v623
        %v2780 = vadd.f32 %v2772, 1e-06
        %v2781 = vadd.f32 %v2773, 1e-06
        %v2782 = vadd.f32 %v2774, 1e-06
        %v2783 = vadd.f32 %v2775, 1e-06
        %v2784 = vadd.f32 %v2776, 1e-06
        %v2785 = vadd.f32 %v2777, 1e-06
        %v2786 = vadd.f32 %v2778, 1e-06
        %v2787 = vadd.f32 %v2779, 1e-06
        %v2788 = vrsqrt.pop %v2780
        %v2789 = vrsqrt.pop %v2781
        %v2790 = vrsqrt.pop %v2782
        %v2791 = vrsqrt.pop %v2783
        %v2792 = vrsqrt.pop %v2784
        %v2793 = vrsqrt.pop %v2785
        %v2794 = vrsqrt.pop %v2786
        %v2795 = vrsqrt.pop %v2787
        %v2796 = vmul.f32 %v2739, %v2788
        %v2797 = vmul.f32 %v2740, %v2789
        %v2798 = vmul.f32 %v2741, %v2790
        %v2799 = vmul.f32 %v2742, %v2791
        %v2800 = vmul.f32 %v2743, %v2792
        %v2801 = vmul.f32 %v2744, %v2793
        %v2802 = vmul.f32 %v2745, %v2794
        %v2803 = vmul.f32 %v2746, %v2795
        %v2805 = vlaneseq
        %v2806 = vshrl.u32 %v2805, 7
        %v2807 = vsub.s32 0, %v2806
        %v2808 = vrot.slane %v2747, %v2807
        %v2810 = vmul.f32 %v2796, %v2808
        %v2811 = vmul.f32 %v2797, %v2808
        %v2812 = vmul.f32 %v2798, %v2808
        %v2813 = vmul.f32 %v2799, %v2808
        %v2814 = vmul.f32 %v2800, %v2808
        %v2815 = vmul.f32 %v2801, %v2808
        %v2816 = vmul.f32 %v2802, %v2808
        %v2817 = vmul.f32 %v2803, %v2808
        %v2818 = vpack.c.bf16 %v2811, %v2810
        %v2819 = vpack.c.bf16 %v2813, %v2812
        %v2820 = vpack.c.bf16 %v2815, %v2814
        %v2821 = vpack.c.bf16 %v2817, %v2816
        %v2822 = vld [vmem:[%s563] sm:$0xff]
        %v2823 = vld [vmem:[%s563 + $0x8] sm:$0xff]
        %v2824 = vld [vmem:[%s563 + $0x10] sm:$0xff]
        %v2825 = vld [vmem:[%s563 + $0x18] sm:$0xff]
        %v2826 = vld [vmem:[%s563 + $0x20] sm:$0xff]
        %v2827 = vld [vmem:[%s563 + $0x28] sm:$0xff]
        %v2828 = vld [vmem:[%s563 + $0x30] sm:$0xff]
        %v2829 = vld [vmem:[%s563 + $0x38] sm:$0xff]
        %v2830 = vld [vmem:[%s563 + $0x40] sm:$0xff]
        %v2831 = vld [vmem:[%s563 + $0x48] sm:$0xff]
        %v2832 = vld [vmem:[%s563 + $0x50] sm:$0xff]
        %v2833 = vld [vmem:[%s563 + $0x58] sm:$0xff]
        %v2834 = vld [vmem:[%s563 + $0x60] sm:$0xff]
        %v2835 = vld [vmem:[%s563 + $0x68] sm:$0xff]
        %v2836 = vld [vmem:[%s563 + $0x70] sm:$0xff]
        %v2837 = vld [vmem:[%s563 + $0x78] sm:$0xff]
        %v2838 = vld [vmem:[%s563 + $0x80] sm:$0xff]
        %v2839 = vld [vmem:[%s563 + $0x88] sm:$0xff]
        %v2840 = vld [vmem:[%s563 + $0x90] sm:$0xff]
        %v2841 = vld [vmem:[%s563 + $0x98] sm:$0xff]
        %v2842 = vld [vmem:[%s563 + $0xa0] sm:$0xff]
        %v2843 = vld [vmem:[%s563 + $0xa8] sm:$0xff]
        %v2844 = vld [vmem:[%s563 + $0xb0] sm:$0xff]
        %v2845 = vld [vmem:[%s563 + $0xb8] sm:$0xff]
        %v2846 = vld [vmem:[%s563 + $0xc0] sm:$0xff]
        %v2847 = vld [vmem:[%s563 + $0xc8] sm:$0xff]
        %v2848 = vld [vmem:[%s563 + $0xd0] sm:$0xff]
        %v2849 = vld [vmem:[%s563 + $0xd8] sm:$0xff]
        %v2850 = vld [vmem:[%s563 + $0xe0] sm:$0xff]
        %v2851 = vld [vmem:[%s563 + $0xe8] sm:$0xff]
        %v2852 = vld [vmem:[%s563 + $0xf0] sm:$0xff]
        %v2853 = vld [vmem:[%s563 + $0xf8] sm:$0xff]
        %v2886 = vunpack.c.l.b16 %v2822
        %v2887 = vunpack.c.h.b16 %v2822
        %v2888 = vunpack.c.l.b16 %v2823
        %v2889 = vunpack.c.h.b16 %v2823
        %v2890 = vunpack.c.l.b16 %v2824
        %v2891 = vunpack.c.h.b16 %v2824
        %v2892 = vunpack.c.l.b16 %v2825
        %v2893 = vunpack.c.h.b16 %v2825
        %v2894 = vunpack.c.l.b16 %v2826
        %v2895 = vunpack.c.h.b16 %v2826
        %v2896 = vunpack.c.l.b16 %v2827
        %v2897 = vunpack.c.h.b16 %v2827
        %v2898 = vunpack.c.l.b16 %v2828
        %v2899 = vunpack.c.h.b16 %v2828
        %v2900 = vunpack.c.l.b16 %v2829
        %v2901 = vunpack.c.h.b16 %v2829
        %v2902 = vunpack.c.l.b16 %v2830
        %v2903 = vunpack.c.h.b16 %v2830
        %v2904 = vunpack.c.l.b16 %v2831
        %v2905 = vunpack.c.h.b16 %v2831
        %v2906 = vunpack.c.l.b16 %v2832
        %v2907 = vunpack.c.h.b16 %v2832
        %v2908 = vunpack.c.l.b16 %v2833
        %v2909 = vunpack.c.h.b16 %v2833
        %v2910 = vunpack.c.l.b16 %v2834
        %v2911 = vunpack.c.h.b16 %v2834
        %v2912 = vunpack.c.l.b16 %v2835
        %v2913 = vunpack.c.h.b16 %v2835
        %v2914 = vunpack.c.l.b16 %v2836
        %v2915 = vunpack.c.h.b16 %v2836
        %v2916 = vunpack.c.l.b16 %v2837
        %v2917 = vunpack.c.h.b16 %v2837
        %v2918 = vunpack.c.l.b16 %v2838
        %v2919 = vunpack.c.h.b16 %v2838
        %v2920 = vunpack.c.l.b16 %v2839
        %v2921 = vunpack.c.h.b16 %v2839
        %v2922 = vunpack.c.l.b16 %v2840
        %v2923 = vunpack.c.h.b16 %v2840
        %v2924 = vunpack.c.l.b16 %v2841
        %v2925 = vunpack.c.h.b16 %v2841
        %v2926 = vunpack.c.l.b16 %v2842
        %v2927 = vunpack.c.h.b16 %v2842
        %v2928 = vunpack.c.l.b16 %v2843
        %v2929 = vunpack.c.h.b16 %v2843
        %v2930 = vunpack.c.l.b16 %v2844
        %v2931 = vunpack.c.h.b16 %v2844
        %v2932 = vunpack.c.l.b16 %v2845
        %v2933 = vunpack.c.h.b16 %v2845
        %v2934 = vunpack.c.l.b16 %v2846
        %v2935 = vunpack.c.h.b16 %v2846
        %v2936 = vunpack.c.l.b16 %v2847
        %v2937 = vunpack.c.h.b16 %v2847
        %v2938 = vunpack.c.l.b16 %v2848
        %v2939 = vunpack.c.h.b16 %v2848
        %v2940 = vunpack.c.l.b16 %v2849
        %v2941 = vunpack.c.h.b16 %v2849
        %v2942 = vunpack.c.l.b16 %v2850
        %v2943 = vunpack.c.h.b16 %v2850
        %v2944 = vunpack.c.l.b16 %v2851
        %v2945 = vunpack.c.h.b16 %v2851
        %v2946 = vunpack.c.l.b16 %v2852
        %v2947 = vunpack.c.h.b16 %v2852
        %v2948 = vunpack.c.l.b16 %v2853
        %v2949 = vunpack.c.h.b16 %v2853
        %v2950 = vpack.c.b16 %v2890, %v2886
        %v2951 = vpack.c.b16 %v2891, %v2887
        %v2952 = vpack.c.b16 %v2892, %v2888
        %v2953 = vpack.c.b16 %v2893, %v2889
        %v2954 = vpack.c.b16 %v2898, %v2894
        %v2955 = vpack.c.b16 %v2899, %v2895
        %v2956 = vpack.c.b16 %v2900, %v2896
        %v2957 = vpack.c.b16 %v2901, %v2897
        %v2958 = vpack.c.b16 %v2906, %v2902
        %v2959 = vpack.c.b16 %v2907, %v2903
        %v2960 = vpack.c.b16 %v2908, %v2904
        %v2961 = vpack.c.b16 %v2909, %v2905
        %v2962 = vpack.c.b16 %v2914, %v2910
        %v2963 = vpack.c.b16 %v2915, %v2911
        %v2964 = vpack.c.b16 %v2916, %v2912
        %v2965 = vpack.c.b16 %v2917, %v2913
        %v2966 = vpack.c.b16 %v2922, %v2918
        %v2967 = vpack.c.b16 %v2923, %v2919
        %v2968 = vpack.c.b16 %v2924, %v2920
        %v2969 = vpack.c.b16 %v2925, %v2921
        %v2970 = vpack.c.b16 %v2930, %v2926
        %v2971 = vpack.c.b16 %v2931, %v2927
        %v2972 = vpack.c.b16 %v2932, %v2928
        %v2973 = vpack.c.b16 %v2933, %v2929
        %v2974 = vpack.c.b16 %v2938, %v2934
        %v2975 = vpack.c.b16 %v2939, %v2935
        %v2976 = vpack.c.b16 %v2940, %v2936
        %v2977 = vpack.c.b16 %v2941, %v2937
        %v2978 = vpack.c.b16 %v2946, %v2942
        %v2979 = vpack.c.b16 %v2947, %v2943
        %v2980 = vpack.c.b16 %v2948, %v2944
        %v2981 = vpack.c.b16 %v2949, %v2945
        %3014 = vmatprep.subr.bf16.mxu0 %v2979
        %3015 = vmatpush1.bf16.msra.mxu0 %v2978
        %3016 = vmatprep.subr.bf16.mxu0 %v2975
        %3017 = vmatpush1.bf16.msra.mxu0 %v2974
        %3018 = vmatprep.subr.bf16.mxu0 %v2971
        %3019 = vmatpush1.bf16.msra.mxu0 %v2970
        %3020 = vmatprep.subr.bf16.mxu0 %v2967
        %3021 = vmatpush1.bf16.msra.mxu0 %v2966
        %3022 = vmatprep.subr.bf16.mxu0 %v2963
        %3023 = vmatpush1.bf16.msra.mxu0 %v2962
        %3024 = vmatprep.subr.bf16.mxu0 %v2959
        %3025 = vmatpush1.bf16.msra.mxu0 %v2958
        %3026 = vmatprep.subr.bf16.mxu0 %v2955
        %3027 = vmatpush1.bf16.msra.mxu0 %v2954
        %3028 = vmatprep.subr.bf16.mxu0 %v2951
        %3029 = vmatpush1.bf16.msra.mxu0 %v2950
        %3030 = vmatprep.subr.bf16.mxu0 0
        %3031 = vmatpush2.bf16.msra.mxu0 0
        %3032 = vmatprep.subr.bf16.mxu0 0
        %3033 = vmatpush2.bf16.msra.mxu0 0
        %3034 = vmatprep.subr.bf16.mxu0 0
        %3035 = vmatpush2.bf16.msra.mxu0 0
        %3036 = vmatprep.subr.bf16.mxu0 0
        %3037 = vmatpush2.bf16.msra.mxu0 0
        %3038 = vmatprep.subr.bf16.mxu0 0
        %3039 = vmatpush2.bf16.msra.mxu0 0
        %3040 = vmatprep.subr.bf16.mxu0 0
        %3041 = vmatpush2.bf16.msra.mxu0 0
        %3042 = vmatprep.subr.bf16.mxu0 0
        %3043 = vmatpush2.bf16.msra.mxu0 0
        %3044 = vmatprep.subr.bf16.mxu0 0
        %3045 = vmatpush2.bf16.msra.mxu0 0
        %3046 = vmatprep.mubr.bf16.mxu0 0
        %3047 = vmatmul.mubr.bf16.gmra.mxu0 %v2818
        %v3048 = vpop.f32.mrf.mxu0
        %v3049 = vadd.f32 0.0, %v3048
        %v3050 = vpop.f32.mrf.mxu0
        %v3051 = vadd.f32 0.0, %v3050
        %v3052 = vpop.f32.mrf.mxu0
        %v3053 = vadd.f32 0.0, %v3052
        %v3054 = vpop.f32.mrf.mxu0
        %v3055 = vadd.f32 0.0, %v3054
        %3056 = vmatprep.mubr.bf16.mxu0 0
        %3057 = vmatmul.mubr.bf16.gmra.mxu0 %v2819
        %v3058 = vpop.f32.mrf.mxu0
        %v3059 = vadd.f32 0.0, %v3058
        %v3060 = vpop.f32.mrf.mxu0
        %v3061 = vadd.f32 0.0, %v3060
        %v3062 = vpop.f32.mrf.mxu0
        %v3063 = vadd.f32 0.0, %v3062
        %v3064 = vpop.f32.mrf.mxu0
        %v3065 = vadd.f32 0.0, %v3064
        %3066 = vmatprep.mubr.bf16.mxu0 0
        %3067 = vmatmul.mubr.bf16.gmra.mxu0 %v2820
        %v3068 = vpop.f32.mrf.mxu0
        %v3069 = vadd.f32 0.0, %v3068
        %v3070 = vpop.f32.mrf.mxu0
        %v3071 = vadd.f32 0.0, %v3070
        %v3072 = vpop.f32.mrf.mxu0
        %v3073 = vadd.f32 0.0, %v3072
        %v3074 = vpop.f32.mrf.mxu0
        %v3075 = vadd.f32 0.0, %v3074
        %3076 = vmatprep.mubr.bf16.mxu0 0
        %3077 = vmatmul.mubr.bf16.gmra.mxu0 %v2821
        %v3078 = vpop.f32.mrf.mxu0
        %v3079 = vadd.f32 0.0, %v3078
        %v3080 = vpop.f32.mrf.mxu0
        %v3081 = vadd.f32 0.0, %v3080
        %v3082 = vpop.f32.mrf.mxu0
        %v3083 = vadd.f32 0.0, %v3082
        %v3084 = vpop.f32.mrf.mxu0
        %v3085 = vadd.f32 0.0, %v3084
        %3086 = vdwg.mxu0
        %3087 = vmatprep.subr.bf16.mxu0 %v2981
        %3088 = vmatpush1.bf16.msra.mxu0 %v2980
        %3089 = vmatprep.subr.bf16.mxu0 %v2977
        %3090 = vmatpush1.bf16.msra.mxu0 %v2976
        %3091 = vmatprep.subr.bf16.mxu0 %v2973
        %3092 = vmatpush1.bf16.msra.mxu0 %v2972
        %3093 = vmatprep.subr.bf16.mxu0 %v2969
        %3094 = vmatpush1.bf16.msra.mxu0 %v2968
        %3095 = vmatprep.subr.bf16.mxu0 %v2965
        %3096 = vmatpush1.bf16.msra.mxu0 %v2964
        %3097 = vmatprep.subr.bf16.mxu0 %v2961
        %3098 = vmatpush1.bf16.msra.mxu0 %v2960
        %3099 = vmatprep.subr.bf16.mxu0 %v2957
        %3100 = vmatpush1.bf16.msra.mxu0 %v2956
        %3101 = vmatprep.subr.bf16.mxu0 %v2953
        %3102 = vmatpush1.bf16.msra.mxu0 %v2952
        %3103 = vmatprep.subr.bf16.mxu0 0
        %3104 = vmatpush2.bf16.msra.mxu0 0
        %3105 = vmatprep.subr.bf16.mxu0 0
        %3106 = vmatpush2.bf16.msra.mxu0 0
        %3107 = vmatprep.subr.bf16.mxu0 0
        %3108 = vmatpush2.bf16.msra.mxu0 0
        %3109 = vmatprep.subr.bf16.mxu0 0
        %3110 = vmatpush2.bf16.msra.mxu0 0
        %3111 = vmatprep.subr.bf16.mxu0 0
        %3112 = vmatpush2.bf16.msra.mxu0 0
        %3113 = vmatprep.subr.bf16.mxu0 0
        %3114 = vmatpush2.bf16.msra.mxu0 0
        %3115 = vmatprep.subr.bf16.mxu0 0
        %3116 = vmatpush2.bf16.msra.mxu0 0
        %3117 = vmatprep.subr.bf16.mxu0 0
        %3118 = vmatpush2.bf16.msra.mxu0 0
        %3119 = vmatprep.mubr.bf16.mxu0 0
        %3120 = vmatmul.mubr.bf16.gmra.mxu0 %v2818
        %v3121 = vpop.f32.mrf.mxu0
        %v3122 = vadd.f32 0.0, %v3121
        %v3123 = vpop.f32.mrf.mxu0
        %v3124 = vadd.f32 0.0, %v3123
        %v3125 = vpop.f32.mrf.mxu0
        %v3126 = vadd.f32 0.0, %v3125
        %v3127 = vpop.f32.mrf.mxu0
        %v3128 = vadd.f32 0.0, %v3127
        %3129 = vmatprep.mubr.bf16.mxu0 0
        %3130 = vmatmul.mubr.bf16.gmra.mxu0 %v2819
        %v3131 = vpop.f32.mrf.mxu0
        %v3132 = vadd.f32 0.0, %v3131
        %v3133 = vpop.f32.mrf.mxu0
        %v3134 = vadd.f32 0.0, %v3133
        %v3135 = vpop.f32.mrf.mxu0
        %v3136 = vadd.f32 0.0, %v3135
        %v3137 = vpop.f32.mrf.mxu0
        %v3138 = vadd.f32 0.0, %v3137
        %3139 = vmatprep.mubr.bf16.mxu0 0
        %3140 = vmatmul.mubr.bf16.gmra.mxu0 %v2820
        %v3141 = vpop.f32.mrf.mxu0
        %v3142 = vadd.f32 0.0, %v3141
        %v3143 = vpop.f32.mrf.mxu0
        %v3144 = vadd.f32 0.0, %v3143
        %v3145 = vpop.f32.mrf.mxu0
        %v3146 = vadd.f32 0.0, %v3145
        %v3147 = vpop.f32.mrf.mxu0
        %v3148 = vadd.f32 0.0, %v3147
        %3149 = vmatprep.mubr.bf16.mxu0 0
        %3150 = vmatmul.mubr.bf16.gmra.mxu0 %v2821
        %v3151 = vpop.f32.mrf.mxu0
        %v3152 = vadd.f32 0.0, %v3151
        %v3153 = vpop.f32.mrf.mxu0
        %v3154 = vadd.f32 0.0, %v3153
        %v3155 = vpop.f32.mrf.mxu0
        %v3156 = vadd.f32 0.0, %v3155
        %v3157 = vpop.f32.mrf.mxu0
        %v3158 = vadd.f32 0.0, %v3157
        %3159 = vdwg.mxu0
        %v3160 = vsub.f32 0.0, %v3049
        %v3161 = vsub.f32 0.0, %v3051
        %v3162 = vsub.f32 0.0, %v3053
        %v3163 = vsub.f32 0.0, %v3055
        %v3164 = vsub.f32 0.0, %v3059
        %v3165 = vsub.f32 0.0, %v3061
        %v3166 = vsub.f32 0.0, %v3063
        %v3167 = vsub.f32 0.0, %v3065
        %v3168 = vsub.f32 0.0, %v3069
        %v3169 = vsub.f32 0.0, %v3071
        %v3170 = vsub.f32 0.0, %v3073
        %v3171 = vsub.f32 0.0, %v3075
        %v3172 = vsub.f32 0.0, %v3079
        %v3173 = vsub.f32 0.0, %v3081
        %v3174 = vsub.f32 0.0, %v3083
        %v3175 = vsub.f32 0.0, %v3085
        %v3176 = vmul.f32 %v3160, 1.442695
        %v3177 = vpow.pop %v3176
        %v3178 = vmul.f32 %v3161, 1.442695
        %v3179 = vpow.pop %v3178
        %v3180 = vmul.f32 %v3162, 1.442695
        %v3181 = vpow.pop %v3180
        %v3182 = vmul.f32 %v3163, 1.442695
        %v3183 = vpow.pop %v3182
        %v3184 = vmul.f32 %v3164, 1.442695
        %v3185 = vpow.pop %v3184
        %v3186 = vmul.f32 %v3165, 1.442695
        %v3187 = vpow.pop %v3186
        %v3188 = vmul.f32 %v3166, 1.442695
        %v3189 = vpow.pop %v3188
        %v3190 = vmul.f32 %v3167, 1.442695
        %v3191 = vpow.pop %v3190
        %v3192 = vmul.f32 %v3168, 1.442695
        %v3193 = vpow.pop %v3192
        %v3194 = vmul.f32 %v3169, 1.442695
        %v3195 = vpow.pop %v3194
        %v3196 = vmul.f32 %v3170, 1.442695
        %v3197 = vpow.pop %v3196
        %v3198 = vmul.f32 %v3171, 1.442695
        %v3199 = vpow.pop %v3198
        %v3200 = vmul.f32 %v3172, 1.442695
        %v3201 = vpow.pop %v3200
        %v3202 = vmul.f32 %v3173, 1.442695
        %v3203 = vpow.pop %v3202
        %v3204 = vmul.f32 %v3174, 1.442695
        %v3205 = vpow.pop %v3204
        %v3206 = vmul.f32 %v3175, 1.442695
        %v3207 = vpow.pop %v3206
        %v3208 = vadd.f32 %v3177, 1.0
        %v3209 = vadd.f32 %v3179, 1.0
        %v3210 = vadd.f32 %v3181, 1.0
        %v3211 = vadd.f32 %v3183, 1.0
        %v3212 = vadd.f32 %v3185, 1.0
        %v3213 = vadd.f32 %v3187, 1.0
        %v3214 = vadd.f32 %v3189, 1.0
        %v3215 = vadd.f32 %v3191, 1.0
        %v3216 = vadd.f32 %v3193, 1.0
        %v3217 = vadd.f32 %v3195, 1.0
        %v3218 = vadd.f32 %v3197, 1.0
        %v3219 = vadd.f32 %v3199, 1.0
        %v3220 = vadd.f32 %v3201, 1.0
        %v3221 = vadd.f32 %v3203, 1.0
        %v3222 = vadd.f32 %v3205, 1.0
        %v3223 = vadd.f32 %v3207, 1.0
        %v3224 = vrcp.pop %v3208
        %v3225 = vmul.f32 1.0, %v3224
        %v3226 = vrcp.pop %v3209
        %v3227 = vmul.f32 1.0, %v3226
        %v3228 = vrcp.pop %v3210
        %v3229 = vmul.f32 1.0, %v3228
        %v3230 = vrcp.pop %v3211
        %v3231 = vmul.f32 1.0, %v3230
        %v3232 = vrcp.pop %v3212
        %v3233 = vmul.f32 1.0, %v3232
        %v3234 = vrcp.pop %v3213
        %v3235 = vmul.f32 1.0, %v3234
        %v3236 = vrcp.pop %v3214
        %v3237 = vmul.f32 1.0, %v3236
        %v3238 = vrcp.pop %v3215
        %v3239 = vmul.f32 1.0, %v3238
        %v3240 = vrcp.pop %v3216
        %v3241 = vmul.f32 1.0, %v3240
        %v3242 = vrcp.pop %v3217
        %v3243 = vmul.f32 1.0, %v3242
        %v3244 = vrcp.pop %v3218
        %v3245 = vmul.f32 1.0, %v3244
        %v3246 = vrcp.pop %v3219
        %v3247 = vmul.f32 1.0, %v3246
        %v3248 = vrcp.pop %v3220
        %v3249 = vmul.f32 1.0, %v3248
        %v3250 = vrcp.pop %v3221
        %v3251 = vmul.f32 1.0, %v3250
        %v3252 = vrcp.pop %v3222
        %v3253 = vmul.f32 1.0, %v3252
        %v3254 = vrcp.pop %v3223
        %v3255 = vmul.f32 1.0, %v3254
        %v3256 = vmul.f32 %v3049, %v3225
        %v3257 = vmul.f32 %v3051, %v3227
        %v3258 = vmul.f32 %v3053, %v3229
        %v3259 = vmul.f32 %v3055, %v3231
        %v3260 = vmul.f32 %v3059, %v3233
        %v3261 = vmul.f32 %v3061, %v3235
        %v3262 = vmul.f32 %v3063, %v3237
        %v3263 = vmul.f32 %v3065, %v3239
        %v3264 = vmul.f32 %v3069, %v3241
        %v3265 = vmul.f32 %v3071, %v3243
        %v3266 = vmul.f32 %v3073, %v3245
        %v3267 = vmul.f32 %v3075, %v3247
        %v3268 = vmul.f32 %v3079, %v3249
        %v3269 = vmul.f32 %v3081, %v3251
        %v3270 = vmul.f32 %v3083, %v3253
        %v3271 = vmul.f32 %v3085, %v3255
        %v3272 = vmul.f32 %v3256, %v3122
        %v3273 = vmul.f32 %v3257, %v3124
        %v3274 = vmul.f32 %v3258, %v3126
        %v3275 = vmul.f32 %v3259, %v3128
        %v3276 = vmul.f32 %v3260, %v3132
        %v3277 = vmul.f32 %v3261, %v3134
        %v3278 = vmul.f32 %v3262, %v3136
        %v3279 = vmul.f32 %v3263, %v3138
        %v3280 = vmul.f32 %v3264, %v3142
        %v3281 = vmul.f32 %v3265, %v3144
        %v3282 = vmul.f32 %v3266, %v3146
        %v3283 = vmul.f32 %v3267, %v3148
        %v3284 = vmul.f32 %v3268, %v3152
        %v3285 = vmul.f32 %v3269, %v3154
        %v3286 = vmul.f32 %v3270, %v3156
        %v3287 = vmul.f32 %v3271, %v3158
        %v3288 = vpack.c.bf16 %v3274, %v3272
        %v3289 = vpack.c.bf16 %v3275, %v3273
        %v3290 = vpack.c.bf16 %v3278, %v3276
        %v3291 = vpack.c.bf16 %v3279, %v3277
        %v3292 = vpack.c.bf16 %v3282, %v3280
        %v3293 = vpack.c.bf16 %v3283, %v3281
        %v3294 = vpack.c.bf16 %v3286, %v3284
        %v3295 = vpack.c.bf16 %v3287, %v3285
        %v3296 = vld [vmem:[%s568] sm:$0xf]
        %v3297 = vld [vmem:[%s568 + $0x4] sm:$0xf]
        %v3298 = vld [vmem:[%s568 + $0x8] sm:$0xf]
        %v3299 = vld [vmem:[%s568 + $0xc] sm:$0xf]
        %v3300 = vld [vmem:[%s568 + $0x10] sm:$0xf]
        %v3301 = vld [vmem:[%s568 + $0x14] sm:$0xf]
        %v3302 = vld [vmem:[%s568 + $0x18] sm:$0xf]
        %v3303 = vld [vmem:[%s568 + $0x1c] sm:$0xf]
        %v3304 = vld [vmem:[%s568 + $0x20] sm:$0xf]
        %v3305 = vld [vmem:[%s568 + $0x24] sm:$0xf]
        %v3306 = vld [vmem:[%s568 + $0x28] sm:$0xf]
        %v3307 = vld [vmem:[%s568 + $0x2c] sm:$0xf]
        %v3308 = vld [vmem:[%s568 + $0x30] sm:$0xf]
        %v3309 = vld [vmem:[%s568 + $0x34] sm:$0xf]
        %v3310 = vld [vmem:[%s568 + $0x38] sm:$0xf]
        %v3311 = vld [vmem:[%s568 + $0x3c] sm:$0xf]
        %v3312 = vld [vmem:[%s568 + $0x40] sm:$0xf]
        %v3313 = vld [vmem:[%s568 + $0x44] sm:$0xf]
        %v3314 = vld [vmem:[%s568 + $0x48] sm:$0xf]
        %v3315 = vld [vmem:[%s568 + $0x4c] sm:$0xf]
        %v3316 = vld [vmem:[%s568 + $0x50] sm:$0xf]
        %v3317 = vld [vmem:[%s568 + $0x54] sm:$0xf]
        %v3318 = vld [vmem:[%s568 + $0x58] sm:$0xf]
        %v3319 = vld [vmem:[%s568 + $0x5c] sm:$0xf]
        %v3320 = vld [vmem:[%s568 + $0x60] sm:$0xf]
        %v3321 = vld [vmem:[%s568 + $0x64] sm:$0xf]
        %v3322 = vld [vmem:[%s568 + $0x68] sm:$0xf]
        %v3323 = vld [vmem:[%s568 + $0x6c] sm:$0xf]
        %v3324 = vld [vmem:[%s568 + $0x70] sm:$0xf]
        %v3325 = vld [vmem:[%s568 + $0x74] sm:$0xf]
        %v3326 = vld [vmem:[%s568 + $0x78] sm:$0xf]
        %v3327 = vld [vmem:[%s568 + $0x7c] sm:$0xf]
        %v3360 = vunpack.c.l.b16 %v3296
        %v3361 = vunpack.c.l.b16 %v3297
        %v3362 = vunpack.c.l.b16 %v3298
        %v3363 = vunpack.c.l.b16 %v3299
        %v3364 = vunpack.c.l.b16 %v3300
        %v3365 = vunpack.c.l.b16 %v3301
        %v3366 = vunpack.c.l.b16 %v3302
        %v3367 = vunpack.c.l.b16 %v3303
        %v3368 = vunpack.c.l.b16 %v3304
        %v3369 = vunpack.c.l.b16 %v3305
        %v3370 = vunpack.c.l.b16 %v3306
        %v3371 = vunpack.c.l.b16 %v3307
        %v3372 = vunpack.c.l.b16 %v3308
        %v3373 = vunpack.c.l.b16 %v3309
        %v3374 = vunpack.c.l.b16 %v3310
        %v3375 = vunpack.c.l.b16 %v3311
        %v3376 = vunpack.c.l.b16 %v3312
        %v3377 = vunpack.c.l.b16 %v3313
        %v3378 = vunpack.c.l.b16 %v3314
        %v3379 = vunpack.c.l.b16 %v3315
        %v3380 = vunpack.c.l.b16 %v3316
        %v3381 = vunpack.c.l.b16 %v3317
        %v3382 = vunpack.c.l.b16 %v3318
        %v3383 = vunpack.c.l.b16 %v3319
        %v3384 = vunpack.c.l.b16 %v3320
        %v3385 = vunpack.c.l.b16 %v3321
        %v3386 = vunpack.c.l.b16 %v3322
        %v3387 = vunpack.c.l.b16 %v3323
        %v3388 = vunpack.c.l.b16 %v3324
        %v3389 = vunpack.c.l.b16 %v3325
        %v3390 = vunpack.c.l.b16 %v3326
        %v3391 = vunpack.c.l.b16 %v3327
        %v3392 = vpack.c.b16 %v3361, %v3360
        %v3393 = vpack.c.b16 %v3363, %v3362
        %v3394 = vpack.c.b16 %v3365, %v3364
        %v3395 = vpack.c.b16 %v3367, %v3366
        %v3396 = vpack.c.b16 %v3369, %v3368
        %v3397 = vpack.c.b16 %v3371, %v3370
        %v3398 = vpack.c.b16 %v3373, %v3372
        %v3399 = vpack.c.b16 %v3375, %v3374
        %v3400 = vpack.c.b16 %v3377, %v3376
        %v3401 = vpack.c.b16 %v3379, %v3378
        %v3402 = vpack.c.b16 %v3381, %v3380
        %v3403 = vpack.c.b16 %v3383, %v3382
        %v3404 = vpack.c.b16 %v3385, %v3384
        %v3405 = vpack.c.b16 %v3387, %v3386
        %v3406 = vpack.c.b16 %v3389, %v3388
        %v3407 = vpack.c.b16 %v3391, %v3390
        %3424 = vmatprep.subr.bf16.mxu0 0
        %3425 = vmatpush1.bf16.msra.mxu0 %v3399
        %3426 = vmatprep.subr.bf16.mxu0 0
        %3427 = vmatpush1.bf16.msra.mxu0 %v3398
        %3428 = vmatprep.subr.bf16.mxu0 0
        %3429 = vmatpush1.bf16.msra.mxu0 %v3397
        %3430 = vmatprep.subr.bf16.mxu0 0
        %3431 = vmatpush1.bf16.msra.mxu0 %v3396
        %3432 = vmatprep.subr.bf16.mxu0 0
        %3433 = vmatpush1.bf16.msra.mxu0 %v3395
        %3434 = vmatprep.subr.bf16.mxu0 0
        %3435 = vmatpush1.bf16.msra.mxu0 %v3394
        %3436 = vmatprep.subr.bf16.mxu0 0
        %3437 = vmatpush1.bf16.msra.mxu0 %v3393
        %3438 = vmatprep.subr.bf16.mxu0 0
        %3439 = vmatpush1.bf16.msra.mxu0 %v3392
        %3440 = vmatprep.subr.bf16.mxu0 0
        %3441 = vmatpush2.bf16.msra.mxu0 %v3407
        %3442 = vmatprep.subr.bf16.mxu0 0
        %3443 = vmatpush2.bf16.msra.mxu0 %v3406
        %3444 = vmatprep.subr.bf16.mxu0 0
        %3445 = vmatpush2.bf16.msra.mxu0 %v3405
        %3446 = vmatprep.subr.bf16.mxu0 0
        %3447 = vmatpush2.bf16.msra.mxu0 %v3404
        %3448 = vmatprep.subr.bf16.mxu0 0
        %3449 = vmatpush2.bf16.msra.mxu0 %v3403
        %3450 = vmatprep.subr.bf16.mxu0 0
        %3451 = vmatpush2.bf16.msra.mxu0 %v3402
        %3452 = vmatprep.subr.bf16.mxu0 0
        %3453 = vmatpush2.bf16.msra.mxu0 %v3401
        %3454 = vmatprep.subr.bf16.mxu0 0
        %3455 = vmatpush2.bf16.msra.mxu0 %v3400
        %3456 = vmatprep.mubr.bf16.mxu0 %v3289
        %3457 = vmatmul.mubr.bf16.gmra.mxu0 %v3288
        %v3458 = vpop.f32.mrf.mxu0
        %v3459 = vadd.f32 0.0, %v3458
        %v3460 = vpop.f32.mrf.mxu0
        %v3461 = vpop.f32.mrf.mxu0
        %v3462 = vadd.f32 0.0, %v3461
        %v3463 = vpop.f32.mrf.mxu0
        %3464 = vmatprep.mubr.bf16.mxu0 %v3291
        %3465 = vmatmul.mubr.bf16.gmra.mxu0 %v3290
        %v3466 = vpop.f32.mrf.mxu0
        %v3467 = vadd.f32 0.0, %v3466
        %v3468 = vpop.f32.mrf.mxu0
        %v3469 = vpop.f32.mrf.mxu0
        %v3470 = vadd.f32 0.0, %v3469
        %v3471 = vpop.f32.mrf.mxu0
        %3472 = vmatprep.mubr.bf16.mxu0 %v3293
        %3473 = vmatmul.mubr.bf16.gmra.mxu0 %v3292
        %v3474 = vpop.f32.mrf.mxu0
        %v3475 = vadd.f32 0.0, %v3474
        %v3476 = vpop.f32.mrf.mxu0
        %v3477 = vpop.f32.mrf.mxu0
        %v3478 = vadd.f32 0.0, %v3477
        %v3479 = vpop.f32.mrf.mxu0
        %3480 = vmatprep.mubr.bf16.mxu0 %v3295
        %3481 = vmatmul.mubr.bf16.gmra.mxu0 %v3294
        %v3482 = vpop.f32.mrf.mxu0
        %v3483 = vadd.f32 0.0, %v3482
        %v3484 = vpop.f32.mrf.mxu0
        %v3485 = vpop.f32.mrf.mxu0
        %v3486 = vadd.f32 0.0, %v3485
        %v3487 = vpop.f32.mrf.mxu0
        %3488 = vdwg.mxu0
        %v3489 = vmul.f32 %v3459, 0.22
        %v3490 = vmul.f32 %v3462, 0.22
        %v3491 = vmul.f32 %v3467, 0.22
        %v3492 = vmul.f32 %v3470, 0.22
        %v3493 = vmul.f32 %v3475, 0.22
        %v3494 = vmul.f32 %v3478, 0.22
        %v3495 = vmul.f32 %v3483, 0.22
        %v3496 = vmul.f32 %v3486, 0.22
        %v3497 = vadd.f32 %v2739, %v3489
        %v3498 = vadd.f32 %v2740, %v3490
        %v3499 = vadd.f32 %v2741, %v3491
        %v3500 = vadd.f32 %v2742, %v3492
        %v3501 = vadd.f32 %v2743, %v3493
        %v3502 = vadd.f32 %v2744, %v3494
        %v3503 = vadd.f32 %v2745, %v3495
        %v3504 = vadd.f32 %v2746, %v3496
        %3505 = vst [vmem:[#allocation2] sm:$0xff] %v3497
        %3506 = vst [vmem:[#allocation2 + $0x8] sm:$0xff] %v3498
        %3507 = vst [vmem:[#allocation2 + $0x10] sm:$0xff] %v3499
        %3508 = vst [vmem:[#allocation2 + $0x18] sm:$0xff] %v3500
        %3509 = vst [vmem:[#allocation2 + $0x20] sm:$0xff] %v3501
        %3510 = vst [vmem:[#allocation2 + $0x28] sm:$0xff] %v3502
        %3511 = vst [vmem:[#allocation2 + $0x30] sm:$0xff] %v3503
        %3512 = vst [vmem:[#allocation2 + $0x38] sm:$0xff] %v3504
        %p3513 = scmp.eq.s32.totalorder %s27, 1
        // Predicated region
        $region85: #{granite_model_forward.1} parent=79 // pred_check
          %p3514 = pneg %p3513
        $region86: #{granite_model_forward.1} parent=79 // pred_check_branch
          %3516 = sbr.rel (%p3514) target = $region88
        $region87: #{granite_model_forward.1} parent=79 // pred_region
          %v3517 = vld [vmem:[%s14] sm:$0x1]
          %v3518 = vmul.f32 %v3497, %v3497
          %v3519 = vmul.f32 %v3498, %v3498
          %v3520 = vmul.f32 %v3499, %v3499
          %v3521 = vmul.f32 %v3500, %v3500
          %v3522 = vmul.f32 %v3501, %v3501
          %v3523 = vmul.f32 %v3502, %v3502
          %v3524 = vmul.f32 %v3503, %v3503
          %v3525 = vmul.f32 %v3504, %v3504
          %3526 = vadd.xlane.f32.xlu0 %v3518
          %v3527 = vpop.xlane.xlu0 %3526
          %3528 = vadd.xlane.f32.xlu0 %v3519
          %v3529 = vpop.xlane.xlu0 %3528
          %3530 = vadd.xlane.f32.xlu0 %v3520
          %v3531 = vpop.xlane.xlu0 %3530
          %3532 = vadd.xlane.f32.xlu0 %v3521
          %v3533 = vpop.xlane.xlu0 %3532
          %3534 = vadd.xlane.f32.xlu0 %v3522
          %v3535 = vpop.xlane.xlu0 %3534
          %3536 = vadd.xlane.f32.xlu0 %v3523
          %v3537 = vpop.xlane.xlu0 %3536
          %3538 = vadd.xlane.f32.xlu0 %v3524
          %v3539 = vpop.xlane.xlu0 %3538
          %3540 = vadd.xlane.f32.xlu0 %v3525
          %v3541 = vpop.xlane.xlu0 %3540
          %v3542 = vmul.f32 %v3527, %v623
          %v3543 = vmul.f32 %v3529, %v623
          %v3544 = vmul.f32 %v3531, %v623
          %v3545 = vmul.f32 %v3533, %v623
          %v3546 = vmul.f32 %v3535, %v623
          %v3547 = vmul.f32 %v3537, %v623
          %v3548 = vmul.f32 %v3539, %v623
          %v3549 = vmul.f32 %v3541, %v623
          %v3550 = vadd.f32 %v3542, 1e-06
          %v3551 = vadd.f32 %v3543, 1e-06
          %v3552 = vadd.f32 %v3544, 1e-06
          %v3553 = vadd.f32 %v3545, 1e-06
          %v3554 = vadd.f32 %v3546, 1e-06
          %v3555 = vadd.f32 %v3547, 1e-06
          %v3556 = vadd.f32 %v3548, 1e-06
          %v3557 = vadd.f32 %v3549, 1e-06
          %v3558 = vrsqrt.pop %v3550
          %v3559 = vrsqrt.pop %v3551
          %v3560 = vrsqrt.pop %v3552
          %v3561 = vrsqrt.pop %v3553
          %v3562 = vrsqrt.pop %v3554
          %v3563 = vrsqrt.pop %v3555
          %v3564 = vrsqrt.pop %v3556
          %v3565 = vrsqrt.pop %v3557
          %v3566 = vmul.f32 %v3497, %v3558
          %v3567 = vmul.f32 %v3498, %v3559
          %v3568 = vmul.f32 %v3499, %v3560
          %v3569 = vmul.f32 %v3500, %v3561
          %v3570 = vmul.f32 %v3501, %v3562
          %v3571 = vmul.f32 %v3502, %v3563
          %v3572 = vmul.f32 %v3503, %v3564
          %v3573 = vmul.f32 %v3504, %v3565
          %v3575 = vlaneseq
          %v3576 = vshrl.u32 %v3575, 7
          %v3577 = vsub.s32 0, %v3576
          %v3578 = vrot.slane %v3517, %v3577
          %v3580 = vmul.f32 %v3566, %v3578
          %v3581 = vmul.f32 %v3567, %v3578
          %v3582 = vmul.f32 %v3568, %v3578
          %v3583 = vmul.f32 %v3569, %v3578
          %v3584 = vmul.f32 %v3570, %v3578
          %v3585 = vmul.f32 %v3571, %v3578
          %v3586 = vmul.f32 %v3572, %v3578
          %v3587 = vmul.f32 %v3573, %v3578
          %3588 = vst [vmem:[#allocation3] sm:$0xff] %v3580
          %3589 = vst [vmem:[#allocation3 + $0x8] sm:$0xff] %v3581
          %3590 = vst [vmem:[#allocation3 + $0x10] sm:$0xff] %v3582
          %3591 = vst [vmem:[#allocation3 + $0x18] sm:$0xff] %v3583
          %3592 = vst [vmem:[#allocation3 + $0x20] sm:$0xff] %v3584
          %3593 = vst [vmem:[#allocation3 + $0x28] sm:$0xff] %v3585
          %3594 = vst [vmem:[#allocation3 + $0x30] sm:$0xff] %v3586
          %3595 = vst [vmem:[#allocation3 + $0x38] sm:$0xff] %v3587
        $region88: #{granite_model_forward.1} parent=79 // pred_fallthru
          _
        // Predicated region
        $region89: #{granite_model_forward.1} parent=79 // pred_check
          %p3596 = pneg %p385
        $region90: #{granite_model_forward.1} parent=79 // pred_check_branch
          %3598 = sbr.rel (%p3596) target = $region92
        $region91: #{granite_model_forward.1} parent=79 // pred_region
          %s3600 = ssub.s32 1024, 1024
          %3601 = vsyncadd [#allocation4], %s3600
          %s3602 = sshll.u32 [#allocation3], 4
          %s3603 = int_to_ptr.vmem [resolvable:$true] %s3602
          %3608 = dma.vmem_to_hbm [thread:$0]  %s3603, 1024, %s15, [#allocation4], 128, 128, 8
        $region92: #{granite_model_forward.1} parent=79 // pred_fallthru
          _
        // Predicated region
        $region93: #{granite_model_forward.1} parent=79 // pred_check
          %p3609 = pneg %p385
        $region94: #{granite_model_forward.1} parent=79 // pred_check_branch
          %3611 = sbr.rel (%p3609) target = $region96
        $region95: #{granite_model_forward.1} parent=79 // pred_region
          %3612 = dma.done [#allocation4], 1024
        $region96: #{granite_model_forward.1} parent=79 // pred_fallthru
          _
      $region80: #{granite_model_forward.1} parent=5 // pred_fallthru
        _
      %p3613 = scmp.le.s32.totalorder 2, %s22
      // Predicated region
      $region97: #{granite_model_forward.1} parent=5 // pred_check
        %p3614 = pneg %p3613
      $region98: #{granite_model_forward.1} parent=5 // pred_check_branch
        %3616 = sbr.rel (%p3614) target = $region100
      $region99: #{granite_model_forward.1} parent=5 // pred_region
        %s3617 = ssub.s32 %s22, 2
      $region100: #{granite_model_forward.1} parent=5 // pred_fallthru
        _
    $region6: #{granite_model_forward.1} parent=1 // loop_footer
      %s26 = sadd.s32 1, %s22
    $region7: #{granite_model_forward.1} parent=1 // loop_footer_branch
      %21 = sbr.rel target = $region3
    $region8: #{granite_model_forward.1} parent=1 // loop_exit
      _
    %3618 = vsyncpa [#allocation4], 1
    %s3619 = scalar_lea.sflag [#allocation4], 1
    %3620 = vsyncpa %s3619, 1

</llo_original>
